<compile_context>
chip_gen: v5e
topology: v5e:2x2
jax: 0.10.0
libtpu: 0.0.40
codegen_flags: <defaults>
</compile_context>

<pallas_src>
import jax
import jax.numpy as jnp
from jax.experimental import pallas as pl
from jax.experimental.pallas import tpu as pltpu

# --- model "globals" (the undefined module-level constants in the PyTorch code) ---
DIM = 32               # "dim"
LSTM_H = DIM // 2      # original hardcodes 512; keep 2*H == dim for shape consistency
LAYER_GNN = 3          # "layer_gnn"
LAYER_OUT = 2          # "layer_output"
N_FINGERPRINT = 64     # "n_fingerprint"
N_WORDS = 64           # synthetic protein 3-gram vocab (stand-in for ProtBERT)

N_ATOMS = 10           # true graph nodes per example
N_PROT = 12            # true protein words per example
N_ATOMS_PAD = 16       # padded to a sublane multiple
N_PROT_PAD = 16        # padded to a sublane multiple
OUT_PAD = 128          # lane-dense logits block (real logits in lanes 0:2)

PAIRS_PER_STEP = 8                      # pairs packed into one grid step (128 rows/step)
BATCH = 16                              # -> grid=(2,), both v7x TensorCores busy
A_ROWS = PAIRS_PER_STEP * N_ATOMS_PAD   # 128
W_ROWS = PAIRS_PER_STEP * N_PROT_PAD    # 128

# bias-slab row assignments (single lane-dense (8,128) bias input)
_ROW_GNN0 = 0                     # rows 0..LAYER_GNN-1 : GNN biases   (lanes 0:DIM)
_ROW_LSTM = LAYER_GNN             # row 3               : LSTM bias    (lanes 0:8H)
_ROW_ATT = LAYER_GNN + 1          # row 4               : W_att bias   (lanes 0:DIM)
_ROW_OUT0 = LAYER_GNN + 2         # rows 5..6           : W_out biases (lanes 0:2*DIM)
_ROW_INT = LAYER_GNN + 2 + LAYER_OUT  # row 7           : W_int bias   (lanes 0:2)


def cpi_kernel(fp_ids_ref, adj_ref, wid_ref,
               efp_ref, ewd_ref,
               wgnn_ref, wlstm_ref, watt_ref, wout_ref, wint_ref,
               bias_ref,
               out_ref):
    f32 = jnp.float32
    P = PAIRS_PER_STEP
    H = LSTM_H

    # -------- fingerprint embedding as one-hot matmul (padded ids = -1 -> zero rows) ----
    fp_ids = fp_ids_ref[0]                                           # (A_ROWS, 1) int32
    fp_oh = (fp_ids == jax.lax.broadcasted_iota(
        jnp.int32, (A_ROWS, N_FINGERPRINT), 1)).astype(f32)
    xs = jnp.dot(fp_oh, efp_ref[...], preferred_element_type=f32)    # (A_ROWS, DIM)

    atom_mask = (fp_ids >= 0).astype(f32)                            # (A_ROWS, 1)
    n_atoms = jnp.sum(atom_mask.reshape(P, N_ATOMS_PAD),
                      axis=1, keepdims=True)                         # (P, 1)
    inv_n_atoms = 1.0 / jnp.maximum(n_atoms, 1.0)

    # -------- GNN: linears on the stacked batch, aggregation via block-diagonal A --------
    A = adj_ref[0]                                                    # (A_ROWS, A_ROWS)
    for i in range(LAYER_GNN):
        hs = jnp.maximum(
            jnp.dot(xs, wgnn_ref[i], preferred_element_type=f32)
            + bias_ref[_ROW_GNN0 + i:_ROW_GNN0 + i + 1, 0:DIM], 0.0)
        xs = xs + jnp.dot(A, hs, preferred_element_type=f32)
    compound = jnp.sum(xs.reshape(P, N_ATOMS_PAD, DIM), axis=1) * inv_n_atoms  # (P, DIM)

    # -------- protein word embedding as one-hot matmul --------
    w_ids = wid_ref[0]                                                # (W_ROWS, 1) int32
    w_oh = (w_ids == jax.lax.broadcasted_iota(
        jnp.int32, (W_ROWS, N_WORDS), 1)).astype(f32)
    wv = jnp.dot(w_oh, ewd_ref[...], preferred_element_type=f32)      # (W_ROWS, DIM)
    prot_mask = (w_ids >= 0).astype(f32)                              # (W_ROWS, 1)
    n_prot = jnp.sum(prot_mask.reshape(P, N_PROT_PAD),
                     axis=1, keepdims=True)                           # (P, 1)
    inv_n_prot = 1.0 / jnp.maximum(n_prot, 1.0)

    # -------- fused bidirectional LSTM, seq len == 1, h0 = c0 = 0 --------
    # Gate columns pre-packed gate-major / direction-minor: [i_f i_b | f_f f_b | g_f g_b | o_f o_b].
    # f * c0 == 0 is dropped; bias = b_ih + b_hh (pre-summed).  With this packing,
    # h_cat = o * tanh(i * g) is already the [h_fwd | h_bwd] lane concat torch produces.
    b_lstm = bias_ref[_ROW_LSTM:_ROW_LSTM + 1, :]                     # (1, 8H)
    gates = jnp.dot(wv, wlstm_ref[...], preferred_element_type=f32) + b_lstm  # (W_ROWS, 8H)
    i_cat = jax.nn.sigmoid(gates[:, 0:2 * H])
    g_cat = jnp.tanh(gates[:, 4 * H:6 * H])
    o_cat = jax.nn.sigmoid(gates[:, 6 * H:8 * H])
    h_cat = o_cat * jnp.tanh(i_cat * g_cat)                           # (W_ROWS, DIM)

    # -------- attention --------
    b_att = bias_ref[_ROW_ATT:_ROW_ATT + 1, 0:DIM]                    # (1, DIM)
    hs_a = jnp.maximum(
        jnp.dot(h_cat, watt_ref[...], preferred_element_type=f32) + b_att, 0.0)     # (W_ROWS, DIM)
    h = jnp.maximum(
        jnp.dot(compound, watt_ref[...], preferred_element_type=f32) + b_att, 0.0)  # (P, DIM)

    # torch: weights = tanh(h @ hs.T); ys = weights.T * hs  — per-pair column form.
    hs3 = hs_a.reshape(P, N_PROT_PAD, DIM)
    mask3 = prot_mask.reshape(P, N_PROT_PAD, 1)
    w_col = jnp.tanh(jnp.sum(hs3 * h.reshape(P, 1, DIM), axis=2, keepdims=True))    # (P, 16, 1)
    ys = mask3 * w_col * hs3                                          # zero padded rows
    protein = jnp.sum(ys, axis=1) * inv_n_prot                        # (P, DIM)

    # -------- output MLP (single lane-concat, single (P,64)@(64,64) per layer) --------
    cat = jnp.concatenate([compound, protein], axis=1)                # (P, 2*DIM)
    for j in range(LAYER_OUT):
        cat = jnp.maximum(
            jnp.dot(cat, wout_ref[j], preferred_element_type=f32)
            + bias_ref[_ROW_OUT0 + j:_ROW_OUT0 + j + 1, 0:2 * DIM], 0.0)

    # -------- lane-dense (P, 128) logits block; real values in lanes 0:2 --------
    b_int = bias_ref[_ROW_INT:_ROW_INT + 1, :]                        # (1, 128)
    out_ref[...] = jnp.dot(cat, wint_ref[...], preferred_element_type=f32) + b_int


def _interleave_gates(wf, wb):
    """Re-pack torch gate order (i,f,g,o per direction) into gate-major/direction-minor."""
    parts = []
    for g in range(4):
        parts.append(wf[..., g * LSTM_H:(g + 1) * LSTM_H])
        parts.append(wb[..., g * LSTM_H:(g + 1) * LSTM_H])
    return jnp.concatenate(parts, axis=-1)


def cpi_forward(fp_ids, adjacency, word_ids, params):
    """fp_ids: (B, N_ATOMS_PAD) int32 (pad = -1); adjacency: (B, N_ATOMS_PAD, N_ATOMS_PAD) f32
    (padded rows/cols zero); word_ids: (B, N_PROT_PAD) int32 (pad = -1)."""
    B = fp_ids.shape[0]
    assert B % PAIRS_PER_STEP == 0, "batch must be a multiple of PAIRS_PER_STEP"
    num_steps = B // PAIRS_PER_STEP
    P = PAIRS_PER_STEP

    # ---- weight prep (host/XLA side, done once) ----
    # Fused + gate-interleaved BiLSTM weight: (DIM, 8H) = (32, 128), lane-dense.
    w_lstm_fb = _interleave_gates(params["w_ih_f"], params["w_ih_b"])
    b_lstm_fb = _interleave_gates(params["b_lstm_f"], params["b_lstm_b"])

    # Pad the 2-wide interaction head to a lane-dense 128-wide output.
    w_int_pad = jnp.zeros((2 * DIM, OUT_PAD), jnp.float32).at[:, :2].set(params["w_int"])

    # Single lane-dense bias slab (8, 128).
    bias_slab = jnp.zeros((8, OUT_PAD), jnp.float32)
    bias_slab = bias_slab.at[_ROW_GNN0:_ROW_GNN0 + LAYER_GNN, 0:DIM].set(params["b_gnn"][:, 0, :])
    bias_slab = bias_slab.at[_ROW_LSTM, 0:8 * LSTM_H].set(b_lstm_fb[0])
    bias_slab = bias_slab.at[_ROW_ATT, 0:DIM].set(params["b_att"][0])
    bias_slab = bias_slab.at[_ROW_OUT0:_ROW_OUT0 + LAYER_OUT, 0:2 * DIM].set(params["b_out"][:, 0, :])
    bias_slab = bias_slab.at[_ROW_INT, 0:2].set(params["b_int"][0])

    # ---- per-step inputs: stack PAIRS_PER_STEP pairs into 128-row slabs ----
    fp_steps = fp_ids.reshape(num_steps, A_ROWS, 1)
    wid_steps = word_ids.reshape(num_steps, W_ROWS, 1)

    # Block-diagonal adjacency per step: (num_steps, 128, 128).
    adj4 = adjacency.astype(jnp.float32).reshape(num_steps, P, N_ATOMS_PAD, N_ATOMS_PAD)
    eye_p = jnp.eye(P, dtype=jnp.float32)
    adj_bd = jnp.einsum('spij,pq->spiqj', adj4, eye_p).reshape(num_steps, A_ROWS, A_ROWS)

    per_step_args = [fp_steps, adj_bd, wid_steps]
    weight_args = [
        params["embed_fp"], params["embed_word"],
        params["w_gnn"], w_lstm_fb, params["w_att"], params["w_out"], w_int_pad,
        bias_slab,
    ]

    in_specs = [
        pl.BlockSpec((1, A_ROWS, 1), lambda s: (s, 0, 0)),            # fingerprint ids
        pl.BlockSpec((1, A_ROWS, A_ROWS), lambda s: (s, 0, 0)),       # block-diag adjacency
        pl.BlockSpec((1, W_ROWS, 1), lambda s: (s, 0, 0)),            # protein word ids
    ] + [
        # Constant index_map -> weights stay VMEM-resident across grid steps.
        pl.BlockSpec(w.shape, lambda s, n=w.ndim: (0,) * n) for w in weight_args
    ]

    out = pl.pallas_call(
        cpi_kernel,
        out_shape=jax.ShapeDtypeStruct((B, OUT_PAD), jnp.float32),
        grid=(num_steps,),
        in_specs=in_specs,
        out_specs=pl.BlockSpec((P, OUT_PAD), lambda s: (s, 0)),
        compiler_params=pltpu.CompilerParams(
            dimension_semantics=("parallel",)),   # engages both TCs on v7x
    )(*per_step_args, *weight_args)

    return out[:, :2]                                                  # (B, 2) logits


def init_params(key):
    ks = jax.random.split(key, 16)
    s = 0.1
    return {
        "embed_fp": s * jax.random.normal(ks[0], (N_FINGERPRINT, DIM), jnp.float32),
        # TODO(synk): ProtBERT tokenizer/model (generate_bert_embeddings) has no Pallas
        # equivalent; replaced by a deterministic synthetic word-embedding table.
        "embed_word": s * jax.random.normal(ks[1], (N_WORDS, DIM), jnp.float32),
        # GNN linears, stored as (in, out) so the kernel does x @ W
        "w_gnn": s * jax.random.normal(ks[2], (LAYER_GNN, DIM, DIM), jnp.float32),
        "b_gnn": s * jax.random.normal(ks[3], (LAYER_GNN, 1, DIM), jnp.float32),
        # BiLSTM (seq_len==1): only W_ih matters; bias = b_ih + b_hh (pre-summed)
        "w_ih_f": s * jax.random.normal(ks[4], (DIM, 4 * LSTM_H), jnp.float32),
        "b_lstm_f": s * jax.random.normal(ks[5], (1, 4 * LSTM_H), jnp.float32),
        "w_ih_b": s * jax.random.normal(ks[6], (DIM, 4 * LSTM_H), jnp.float32),
        "b_lstm_b": s * jax.random.normal(ks[7], (1, 4 * LSTM_H), jnp.float32),
        "w_att": s * jax.random.normal(ks[8], (DIM, DIM), jnp.float32),
        "b_att": s * jax.random.normal(ks[9], (1, DIM), jnp.float32),
        "w_out": s * jax.random.normal(ks[10], (LAYER_OUT, 2 * DIM, 2 * DIM), jnp.float32),
        "b_out": s * jax.random.normal(ks[11], (LAYER_OUT, 1, 2 * DIM), jnp.float32),
        "w_int": s * jax.random.normal(ks[12], (2 * DIM, 2), jnp.float32),
        "b_int": s * jax.random.normal(ks[13], (1, 2), jnp.float32),
    }


if __name__ == "__main__":
    key = jax.random.PRNGKey(0)
    k_p, k_fp, k_adj, k_seq = jax.random.split(key, 4)

    params = init_params(k_p)

    B = BATCH
    # Fingerprint ids, padded with sentinel -1 up to the sublane-multiple row count.
    fp_true = jax.random.randint(k_fp, (B, N_ATOMS), 0, N_FINGERPRINT, dtype=jnp.int32)
    fp_ids = jnp.full((B, N_ATOMS_PAD), -1, jnp.int32).at[:, :N_ATOMS].set(fp_true)

    # Symmetric 0/1 adjacency on the true atoms, zero-padded (pad rows & cols are 0).
    adj_raw = jax.random.uniform(k_adj, (B, N_ATOMS, N_ATOMS))
    adj_true = (adj_raw + jnp.swapaxes(adj_raw, 1, 2) > 1.0).astype(jnp.float32)
    adjacency = jnp.zeros((B, N_ATOMS_PAD, N_ATOMS_PAD), jnp.float32)
    adjacency = adjacency.at[:, :N_ATOMS, :N_ATOMS].set(adj_true)

    # Protein 3-gram word ids, padded with sentinel -1.
    prot_true = jax.random.randint(k_seq, (B, N_PROT), 0, N_WORDS, dtype=jnp.int32)
    word_ids = jnp.full((B, N_PROT_PAD), -1, jnp.int32).at[:, :N_PROT].set(prot_true)

    logits = cpi_forward(fp_ids, adjacency, word_ids, params)
    logits = jax.block_until_ready(logits)
    assert logits.shape == (B, 2) and logits.dtype == jnp.float32
    print("KERNEL_OK")
</pallas_src>

<mosaic_0001>
module attributes {stable_mosaic.version = 11 : i64} {
  func.func @cpi_kernel(%arg0: i32, %arg1: memref<1x128x1xi32, #tpu.memory_space<vmem>>, %arg2: memref<1x128x128xf32, #tpu.memory_space<vmem>>, %arg3: memref<1x128x1xi32, #tpu.memory_space<vmem>>, %arg4: memref<64x32xf32, #tpu.memory_space<vmem>>, %arg5: memref<64x32xf32, #tpu.memory_space<vmem>>, %arg6: memref<3x32x32xf32, #tpu.memory_space<vmem>>, %arg7: memref<32x128xf32, #tpu.memory_space<vmem>>, %arg8: memref<32x32xf32, #tpu.memory_space<vmem>>, %arg9: memref<2x64x64xf32, #tpu.memory_space<vmem>>, %arg10: memref<64x128xf32, #tpu.memory_space<vmem>>, %arg11: memref<8x128xf32, #tpu.memory_space<vmem>>, %arg12: memref<8x128xf32, #tpu.memory_space<vmem>>) attributes {dimension_semantics = [#tpu.dimension_semantics<parallel>], iteration_bounds = array<i64: 2>, scalar_prefetch = 0 : i64, scratch_operands = 0 : i64, tpu.core_type = #tpu.core_type<tc>, window_params = [{transform_indices = @transform_0, window_bounds = array<i64: 1, 128, 1>}, {transform_indices = @transform_1, window_bounds = array<i64: 1, 128, 128>}, {transform_indices = @transform_2, window_bounds = array<i64: 1, 128, 1>}, {pipeline_mode = #tpu.pipeline_mode<synchronous>, transform_indices = @transform_3, window_bounds = array<i64: 64, 32>}, {pipeline_mode = #tpu.pipeline_mode<synchronous>, transform_indices = @transform_4, window_bounds = array<i64: 64, 32>}, {pipeline_mode = #tpu.pipeline_mode<synchronous>, transform_indices = @transform_5, window_bounds = array<i64: 3, 32, 32>}, {pipeline_mode = #tpu.pipeline_mode<synchronous>, transform_indices = @transform_6, window_bounds = array<i64: 32, 128>}, {pipeline_mode = #tpu.pipeline_mode<synchronous>, transform_indices = @transform_7, window_bounds = array<i64: 32, 32>}, {pipeline_mode = #tpu.pipeline_mode<synchronous>, transform_indices = @transform_8, window_bounds = array<i64: 2, 64, 64>}, {pipeline_mode = #tpu.pipeline_mode<synchronous>, transform_indices = @transform_9, window_bounds = array<i64: 64, 128>}, {pipeline_mode = #tpu.pipeline_mode<synchronous>, transform_indices = @transform_10, window_bounds = array<i64: 8, 128>}, {transform_indices = @transform_11, window_bounds = array<i64: 8, 128>}]} {
    %c0 = arith.constant 0 : index
    %c0_0 = arith.constant 0 : index
    %c0_1 = arith.constant 0 : index
    %0 = vector.load %arg1[%c0, %c0_0, %c0_1] : memref<1x128x1xi32, #tpu.memory_space<vmem>>, vector<1x128x1xi32>
    %1 = vector.shape_cast %0 : vector<1x128x1xi32> to vector<128x1xi32>
    %2 = tpu.iota {dimensions = array<i32: 1>} : vector<128x64xi32>
    %3 = vector.broadcast %1 : vector<128x1xi32> to vector<128x64xi32>
    %4 = arith.cmpi eq, %3, %2 : vector<128x64xi32>
    %5 = arith.extui %4 : vector<128x64xi1> to vector<128x64xi32>
    %6 = arith.sitofp %5 : vector<128x64xi32> to vector<128x64xf32>
    %c0_2 = arith.constant 0 : index
    %c0_3 = arith.constant 0 : index
    %7 = vector.load %arg4[%c0_2, %c0_3] : memref<64x32xf32, #tpu.memory_space<vmem>>, vector<64x32xf32>
    %cst = arith.constant dense<0.000000e+00> : vector<128x32xf32>
    %8 = tpu.matmul %6, %7, %cst {dimension_numbers = #tpu.dot_dimension_numbers<[1], [0], [0], [1], [0, 0, 1, 1], [], []>} : vector<128x64xf32>, vector<64x32xf32>, vector<128x32xf32> -> vector<128x32xf32>
    %c0_i32 = arith.constant 0 : i32
    %9 = vector.broadcast %c0_i32 : i32 to vector<128x1xi32>
    %10 = arith.cmpi sge, %1, %9 : vector<128x1xi32>
    %11 = arith.extui %10 : vector<128x1xi1> to vector<128x1xi32>
    %12 = arith.sitofp %11 : vector<128x1xi32> to vector<128x1xf32>
    %13 = vector.shape_cast %12 : vector<128x1xf32> to vector<8x16xf32>
    %cst_4 = arith.constant dense<0.000000e+00> : vector<8xf32>
    %14 = vector.multi_reduction <add>, %13, %cst_4 [1] : vector<8x16xf32> to vector<8xf32>
    %15 = vector.shape_cast %14 : vector<8xf32> to vector<8x1xf32>
    %cst_5 = arith.constant 1.000000e+00 : f32
    %16 = vector.broadcast %cst_5 : f32 to vector<8x1xf32>
    %17 = arith.maximumf %15, %16 : vector<8x1xf32>
    %cst_6 = arith.constant 1.000000e+00 : f32
    %18 = vector.broadcast %cst_6 : f32 to vector<8x1xf32>
    %19 = arith.divf %18, %17 : vector<8x1xf32>
    %c0_7 = arith.constant 0 : index
    %c0_8 = arith.constant 0 : index
    %c0_9 = arith.constant 0 : index
    %20 = vector.load %arg2[%c0_7, %c0_8, %c0_9] : memref<1x128x128xf32, #tpu.memory_space<vmem>>, vector<1x128x128xf32>
    %21 = vector.shape_cast %20 : vector<1x128x128xf32> to vector<128x128xf32>
    %c0_10 = arith.constant 0 : index
    %c0_11 = arith.constant 0 : index
    %c0_12 = arith.constant 0 : index
    %22 = vector.load %arg6[%c0_10, %c0_11, %c0_12] : memref<3x32x32xf32, #tpu.memory_space<vmem>>, vector<1x32x32xf32>
    %23 = vector.shape_cast %22 : vector<1x32x32xf32> to vector<32x32xf32>
    %cst_13 = arith.constant dense<0.000000e+00> : vector<128x32xf32>
    %24 = tpu.matmul %8, %23, %cst_13 {dimension_numbers = #tpu.dot_dimension_numbers<[1], [0], [0], [1], [0, 0, 1, 1], [], []>} : vector<128x32xf32>, vector<32x32xf32>, vector<128x32xf32> -> vector<128x32xf32>
    %c0_14 = arith.constant 0 : index
    %c0_15 = arith.constant 0 : index
    %25 = vector.load %arg11[%c0_14, %c0_15] : memref<8x128xf32, #tpu.memory_space<vmem>>, vector<1x32xf32>
    %26 = vector.broadcast %25 : vector<1x32xf32> to vector<128x32xf32>
    %27 = arith.addf %24, %26 : vector<128x32xf32>
    %cst_16 = arith.constant 0.000000e+00 : f32
    %28 = vector.broadcast %cst_16 : f32 to vector<128x32xf32>
    %29 = arith.maximumf %27, %28 : vector<128x32xf32>
    %cst_17 = arith.constant dense<0.000000e+00> : vector<128x32xf32>
    %30 = tpu.matmul %21, %29, %cst_17 {dimension_numbers = #tpu.dot_dimension_numbers<[1], [0], [0], [1], [0, 0, 1, 1], [], []>} : vector<128x128xf32>, vector<128x32xf32>, vector<128x32xf32> -> vector<128x32xf32>
    %31 = arith.addf %8, %30 : vector<128x32xf32>
    %c1 = arith.constant 1 : index
    %c0_18 = arith.constant 0 : index
    %c0_19 = arith.constant 0 : index
    %32 = vector.load %arg6[%c1, %c0_18, %c0_19] : memref<3x32x32xf32, #tpu.memory_space<vmem>>, vector<1x32x32xf32>
    %33 = vector.shape_cast %32 : vector<1x32x32xf32> to vector<32x32xf32>
    %cst_20 = arith.constant dense<0.000000e+00> : vector<128x32xf32>
    %34 = tpu.matmul %31, %33, %cst_20 {dimension_numbers = #tpu.dot_dimension_numbers<[1], [0], [0], [1], [0, 0, 1, 1], [], []>} : vector<128x32xf32>, vector<32x32xf32>, vector<128x32xf32> -> vector<128x32xf32>
    %c1_21 = arith.constant 1 : index
    %c0_22 = arith.constant 0 : index
    %35 = vector.load %arg11[%c1_21, %c0_22] : memref<8x128xf32, #tpu.memory_space<vmem>>, vector<1x32xf32>
    %36 = vector.broadcast %35 : vector<1x32xf32> to vector<128x32xf32>
    %37 = arith.addf %34, %36 : vector<128x32xf32>
    %cst_23 = arith.constant 0.000000e+00 : f32
    %38 = vector.broadcast %cst_23 : f32 to vector<128x32xf32>
    %39 = arith.maximumf %37, %38 : vector<128x32xf32>
    %cst_24 = arith.constant dense<0.000000e+00> : vector<128x32xf32>
    %40 = tpu.matmul %21, %39, %cst_24 {dimension_numbers = #tpu.dot_dimension_numbers<[1], [0], [0], [1], [0, 0, 1, 1], [], []>} : vector<128x128xf32>, vector<128x32xf32>, vector<128x32xf32> -> vector<128x32xf32>
    %41 = arith.addf %31, %40 : vector<128x32xf32>
    %c2 = arith.constant 2 : index
    %c0_25 = arith.constant 0 : index
    %c0_26 = arith.constant 0 : index
    %42 = vector.load %arg6[%c2, %c0_25, %c0_26] : memref<3x32x32xf32, #tpu.memory_space<vmem>>, vector<1x32x32xf32>
    %43 = vector.shape_cast %42 : vector<1x32x32xf32> to vector<32x32xf32>
    %cst_27 = arith.constant dense<0.000000e+00> : vector<128x32xf32>
    %44 = tpu.matmul %41, %43, %cst_27 {dimension_numbers = #tpu.dot_dimension_numbers<[1], [0], [0], [1], [0, 0, 1, 1], [], []>} : vector<128x32xf32>, vector<32x32xf32>, vector<128x32xf32> -> vector<128x32xf32>
    %c2_28 = arith.constant 2 : index
    %c0_29 = arith.constant 0 : index
    %45 = vector.load %arg11[%c2_28, %c0_29] : memref<8x128xf32, #tpu.memory_space<vmem>>, vector<1x32xf32>
    %46 = vector.broadcast %45 : vector<1x32xf32> to vector<128x32xf32>
    %47 = arith.addf %44, %46 : vector<128x32xf32>
    %cst_30 = arith.constant 0.000000e+00 : f32
    %48 = vector.broadcast %cst_30 : f32 to vector<128x32xf32>
    %49 = arith.maximumf %47, %48 : vector<128x32xf32>
    %cst_31 = arith.constant dense<0.000000e+00> : vector<128x32xf32>
    %50 = tpu.matmul %21, %49, %cst_31 {dimension_numbers = #tpu.dot_dimension_numbers<[1], [0], [0], [1], [0, 0, 1, 1], [], []>} : vector<128x128xf32>, vector<128x32xf32>, vector<128x32xf32> -> vector<128x32xf32>
    %51 = arith.addf %41, %50 : vector<128x32xf32>
    %52 = vector.shape_cast %51 : vector<128x32xf32> to vector<8x16x32xf32>
    %cst_32 = arith.constant dense<0.000000e+00> : vector<8x32xf32>
    %53 = vector.multi_reduction <add>, %52, %cst_32 [1] : vector<8x16x32xf32> to vector<8x32xf32>
    %54 = vector.broadcast %19 : vector<8x1xf32> to vector<8x32xf32>
    %55 = arith.mulf %53, %54 : vector<8x32xf32>
    %c0_33 = arith.constant 0 : index
    %c0_34 = arith.constant 0 : index
    %c0_35 = arith.constant 0 : index
    %56 = vector.load %arg3[%c0_33, %c0_34, %c0_35] : memref<1x128x1xi32, #tpu.memory_space<vmem>>, vector<1x128x1xi32>
    %57 = vector.shape_cast %56 : vector<1x128x1xi32> to vector<128x1xi32>
    %58 = tpu.iota {dimensions = array<i32: 1>} : vector<128x64xi32>
    %59 = vector.broadcast %57 : vector<128x1xi32> to vector<128x64xi32>
    %60 = arith.cmpi eq, %59, %58 : vector<128x64xi32>
    %61 = arith.extui %60 : vector<128x64xi1> to vector<128x64xi32>
    %62 = arith.sitofp %61 : vector<128x64xi32> to vector<128x64xf32>
    %c0_36 = arith.constant 0 : index
    %c0_37 = arith.constant 0 : index
    %63 = vector.load %arg5[%c0_36, %c0_37] : memref<64x32xf32, #tpu.memory_space<vmem>>, vector<64x32xf32>
    %cst_38 = arith.constant dense<0.000000e+00> : vector<128x32xf32>
    %64 = tpu.matmul %62, %63, %cst_38 {dimension_numbers = #tpu.dot_dimension_numbers<[1], [0], [0], [1], [0, 0, 1, 1], [], []>} : vector<128x64xf32>, vector<64x32xf32>, vector<128x32xf32> -> vector<128x32xf32>
    %c0_i32_39 = arith.constant 0 : i32
    %65 = vector.broadcast %c0_i32_39 : i32 to vector<128x1xi32>
    %66 = arith.cmpi sge, %57, %65 : vector<128x1xi32>
    %67 = arith.extui %66 : vector<128x1xi1> to vector<128x1xi32>
    %68 = arith.sitofp %67 : vector<128x1xi32> to vector<128x1xf32>
    %69 = vector.shape_cast %68 : vector<128x1xf32> to vector<8x16xf32>
    %cst_40 = arith.constant dense<0.000000e+00> : vector<8xf32>
    %70 = vector.multi_reduction <add>, %69, %cst_40 [1] : vector<8x16xf32> to vector<8xf32>
    %71 = vector.shape_cast %70 : vector<8xf32> to vector<8x1xf32>
    %cst_41 = arith.constant 1.000000e+00 : f32
    %72 = vector.broadcast %cst_41 : f32 to vector<8x1xf32>
    %73 = arith.maximumf %71, %72 : vector<8x1xf32>
    %cst_42 = arith.constant 1.000000e+00 : f32
    %74 = vector.broadcast %cst_42 : f32 to vector<8x1xf32>
    %75 = arith.divf %74, %73 : vector<8x1xf32>
    %c3 = arith.constant 3 : index
    %c0_43 = arith.constant 0 : index
    %76 = vector.load %arg11[%c3, %c0_43] : memref<8x128xf32, #tpu.memory_space<vmem>>, vector<1x128xf32>
    %c0_44 = arith.constant 0 : index
    %c0_45 = arith.constant 0 : index
    %77 = vector.load %arg7[%c0_44, %c0_45] : memref<32x128xf32, #tpu.memory_space<vmem>>, vector<32x128xf32>
    %cst_46 = arith.constant dense<0.000000e+00> : vector<128x128xf32>
    %78 = tpu.matmul %64, %77, %cst_46 {dimension_numbers = #tpu.dot_dimension_numbers<[1], [0], [0], [1], [0, 0, 1, 1], [], []>} : vector<128x32xf32>, vector<32x128xf32>, vector<128x128xf32> -> vector<128x128xf32>
    %79 = vector.broadcast %76 : vector<1x128xf32> to vector<128x128xf32>
    %80 = arith.addf %78, %79 : vector<128x128xf32>
    %81 = vector.extract_strided_slice %80 {offsets = [0, 0], sizes = [128, 32], strides = [1, 1]} : vector<128x128xf32> to vector<128x32xf32>
    %82 = arith.negf %81 : vector<128x32xf32>
    %83 = math.exp %82 : vector<128x32xf32>
    %cst_47 = arith.constant 1.000000e+00 : f32
    %84 = vector.broadcast %cst_47 : f32 to vector<128x32xf32>
    %85 = arith.addf %84, %83 : vector<128x32xf32>
    %86 = arith.divf %84, %85 : vector<128x32xf32>
    %87 = vector.extract_strided_slice %80 {offsets = [0, 64], sizes = [128, 32], strides = [1, 1]} : vector<128x128xf32> to vector<128x32xf32>
    %88 = math.tanh %87 : vector<128x32xf32>
    %89 = vector.extract_strided_slice %80 {offsets = [0, 96], sizes = [128, 32], strides = [1, 1]} : vector<128x128xf32> to vector<128x32xf32>
    %90 = arith.negf %89 : vector<128x32xf32>
    %91 = math.exp %90 : vector<128x32xf32>
    %cst_48 = arith.constant 1.000000e+00 : f32
    %92 = vector.broadcast %cst_48 : f32 to vector<128x32xf32>
    %93 = arith.addf %92, %91 : vector<128x32xf32>
    %94 = arith.divf %92, %93 : vector<128x32xf32>
    %95 = arith.mulf %86, %88 : vector<128x32xf32>
    %96 = math.tanh %95 : vector<128x32xf32>
    %97 = arith.mulf %94, %96 : vector<128x32xf32>
    %c4 = arith.constant 4 : index
    %c0_49 = arith.constant 0 : index
    %98 = vector.load %arg11[%c4, %c0_49] : memref<8x128xf32, #tpu.memory_space<vmem>>, vector<1x32xf32>
    %c0_50 = arith.constant 0 : index
    %c0_51 = arith.constant 0 : index
    %99 = vector.load %arg8[%c0_50, %c0_51] : memref<32x32xf32, #tpu.memory_space<vmem>>, vector<32x32xf32>
    %cst_52 = arith.constant dense<0.000000e+00> : vector<128x32xf32>
    %100 = tpu.matmul %97, %99, %cst_52 {dimension_numbers = #tpu.dot_dimension_numbers<[1], [0], [0], [1], [0, 0, 1, 1], [], []>} : vector<128x32xf32>, vector<32x32xf32>, vector<128x32xf32> -> vector<128x32xf32>
    %101 = vector.broadcast %98 : vector<1x32xf32> to vector<128x32xf32>
    %102 = arith.addf %100, %101 : vector<128x32xf32>
    %cst_53 = arith.constant 0.000000e+00 : f32
    %103 = vector.broadcast %cst_53 : f32 to vector<128x32xf32>
    %104 = arith.maximumf %102, %103 : vector<128x32xf32>
    %c0_54 = arith.constant 0 : index
    %c0_55 = arith.constant 0 : index
    %105 = vector.load %arg8[%c0_54, %c0_55] : memref<32x32xf32, #tpu.memory_space<vmem>>, vector<32x32xf32>
    %cst_56 = arith.constant dense<0.000000e+00> : vector<8x32xf32>
    %106 = tpu.matmul %55, %105, %cst_56 {dimension_numbers = #tpu.dot_dimension_numbers<[1], [0], [0], [1], [0, 0, 1, 1], [], []>} : vector<8x32xf32>, vector<32x32xf32>, vector<8x32xf32> -> vector<8x32xf32>
    %107 = vector.broadcast %98 : vector<1x32xf32> to vector<8x32xf32>
    %108 = arith.addf %106, %107 : vector<8x32xf32>
    %cst_57 = arith.constant 0.000000e+00 : f32
    %109 = vector.broadcast %cst_57 : f32 to vector<8x32xf32>
    %110 = arith.maximumf %108, %109 : vector<8x32xf32>
    %111 = vector.shape_cast %104 : vector<128x32xf32> to vector<8x16x32xf32>
    %112 = vector.shape_cast %68 : vector<128x1xf32> to vector<8x16x1xf32>
    %113 = vector.shape_cast %110 : vector<8x32xf32> to vector<8x1x32xf32>
    %114 = vector.broadcast %113 : vector<8x1x32xf32> to vector<8x16x32xf32>
    %115 = arith.mulf %111, %114 : vector<8x16x32xf32>
    %cst_58 = arith.constant dense<0.000000e+00> : vector<8x16xf32>
    %116 = vector.multi_reduction <add>, %115, %cst_58 [2] : vector<8x16x32xf32> to vector<8x16xf32>
    %117 = vector.shape_cast %116 : vector<8x16xf32> to vector<8x16x1xf32>
    %118 = math.tanh %117 : vector<8x16x1xf32>
    %119 = arith.mulf %112, %118 : vector<8x16x1xf32>
    %120 = vector.broadcast %119 : vector<8x16x1xf32> to vector<8x16x32xf32>
    %121 = arith.mulf %120, %111 : vector<8x16x32xf32>
    %cst_59 = arith.constant dense<0.000000e+00> : vector<8x32xf32>
    %122 = vector.multi_reduction <add>, %121, %cst_59 [1] : vector<8x16x32xf32> to vector<8x32xf32>
    %123 = vector.broadcast %75 : vector<8x1xf32> to vector<8x32xf32>
    %124 = arith.mulf %122, %123 : vector<8x32xf32>
    %125 = tpu.concatenate %55, %124 in 1 : vector<8x32xf32>, vector<8x32xf32> -> vector<8x64xf32>
    %c0_60 = arith.constant 0 : index
    %c0_61 = arith.constant 0 : index
    %c0_62 = arith.constant 0 : index
    %126 = vector.load %arg9[%c0_60, %c0_61, %c0_62] : memref<2x64x64xf32, #tpu.memory_space<vmem>>, vector<1x64x64xf32>
    %127 = vector.shape_cast %126 : vector<1x64x64xf32> to vector<64x64xf32>
    %cst_63 = arith.constant dense<0.000000e+00> : vector<8x64xf32>
    %128 = tpu.matmul %125, %127, %cst_63 {dimension_numbers = #tpu.dot_dimension_numbers<[1], [0], [0], [1], [0, 0, 1, 1], [], []>} : vector<8x64xf32>, vector<64x64xf32>, vector<8x64xf32> -> vector<8x64xf32>
    %c5 = arith.constant 5 : index
    %c0_64 = arith.constant 0 : index
    %129 = vector.load %arg11[%c5, %c0_64] : memref<8x128xf32, #tpu.memory_space<vmem>>, vector<1x64xf32>
    %130 = vector.broadcast %129 : vector<1x64xf32> to vector<8x64xf32>
    %131 = arith.addf %128, %130 : vector<8x64xf32>
    %cst_65 = arith.constant 0.000000e+00 : f32
    %132 = vector.broadcast %cst_65 : f32 to vector<8x64xf32>
    %133 = arith.maximumf %131, %132 : vector<8x64xf32>
    %c1_66 = arith.constant 1 : index
    %c0_67 = arith.constant 0 : index
    %c0_68 = arith.constant 0 : index
    %134 = vector.load %arg9[%c1_66, %c0_67, %c0_68] : memref<2x64x64xf32, #tpu.memory_space<vmem>>, vector<1x64x64xf32>
    %135 = vector.shape_cast %134 : vector<1x64x64xf32> to vector<64x64xf32>
    %cst_69 = arith.constant dense<0.000000e+00> : vector<8x64xf32>
    %136 = tpu.matmul %133, %135, %cst_69 {dimension_numbers = #tpu.dot_dimension_numbers<[1], [0], [0], [1], [0, 0, 1, 1], [], []>} : vector<8x64xf32>, vector<64x64xf32>, vector<8x64xf32> -> vector<8x64xf32>
    %c6 = arith.constant 6 : index
    %c0_70 = arith.constant 0 : index
    %137 = vector.load %arg11[%c6, %c0_70] : memref<8x128xf32, #tpu.memory_space<vmem>>, vector<1x64xf32>
    %138 = vector.broadcast %137 : vector<1x64xf32> to vector<8x64xf32>
    %139 = arith.addf %136, %138 : vector<8x64xf32>
    %cst_71 = arith.constant 0.000000e+00 : f32
    %140 = vector.broadcast %cst_71 : f32 to vector<8x64xf32>
    %141 = arith.maximumf %139, %140 : vector<8x64xf32>
    %c7 = arith.constant 7 : index
    %c0_72 = arith.constant 0 : index
    %142 = vector.load %arg11[%c7, %c0_72] : memref<8x128xf32, #tpu.memory_space<vmem>>, vector<1x128xf32>
    %c0_73 = arith.constant 0 : index
    %c0_74 = arith.constant 0 : index
    %143 = vector.load %arg10[%c0_73, %c0_74] : memref<64x128xf32, #tpu.memory_space<vmem>>, vector<64x128xf32>
    %cst_75 = arith.constant dense<0.000000e+00> : vector<8x128xf32>
    %144 = tpu.matmul %141, %143, %cst_75 {dimension_numbers = #tpu.dot_dimension_numbers<[1], [0], [0], [1], [0, 0, 1, 1], [], []>} : vector<8x64xf32>, vector<64x128xf32>, vector<8x128xf32> -> vector<8x128xf32>
    %145 = vector.broadcast %142 : vector<1x128xf32> to vector<8x128xf32>
    %146 = arith.addf %144, %145 : vector<8x128xf32>
    %c0_76 = arith.constant 0 : index
    %c0_77 = arith.constant 0 : index
    %147 = vector.load %arg12[%c0_76, %c0_77] : memref<8x128xf32, #tpu.memory_space<vmem>>, vector<8x128xf32>
    tpu.vector_store %arg12[%c0_76, %c0_77], %146 {strides = array<i32>} : memref<8x128xf32, #tpu.memory_space<vmem>>, vector<8x128xf32>,
    return
  }
  func.func @transform_0(%arg0: i32) -> (i32, i32, i32) {
    %c0_i32 = arith.constant 0 : i32
    %c0_i32_0 = arith.constant 0 : i32
    %c0_i32_1 = arith.constant 0 : i32
    return %arg0, %c0_i32, %c0_i32_0 : i32, i32, i32
  }
  func.func @transform_1(%arg0: i32) -> (i32, i32, i32) {
    %c0_i32 = arith.constant 0 : i32
    %c0_i32_0 = arith.constant 0 : i32
    %c0_i32_1 = arith.constant 0 : i32
    return %arg0, %c0_i32, %c0_i32_0 : i32, i32, i32
  }
  func.func @transform_2(%arg0: i32) -> (i32, i32, i32) {
    %c0_i32 = arith.constant 0 : i32
    %c0_i32_0 = arith.constant 0 : i32
    %c0_i32_1 = arith.constant 0 : i32
    return %arg0, %c0_i32, %c0_i32_0 : i32, i32, i32
  }
  func.func @transform_3(%arg0: i32) -> (i32, i32) {
    %c0_i32 = arith.constant 0 : i32
    %c0_i32_0 = arith.constant 0 : i32
    %c0_i32_1 = arith.constant 0 : i32
    return %c0_i32, %c0_i32_0 : i32, i32
  }
  func.func @transform_4(%arg0: i32) -> (i32, i32) {
    %c0_i32 = arith.constant 0 : i32
    %c0_i32_0 = arith.constant 0 : i32
    %c0_i32_1 = arith.constant 0 : i32
    return %c0_i32, %c0_i32_0 : i32, i32
  }
  func.func @transform_5(%arg0: i32) -> (i32, i32, i32) {
    %c0_i32 = arith.constant 0 : i32
    %c0_i32_0 = arith.constant 0 : i32
    %c0_i32_1 = arith.constant 0 : i32
    %c0_i32_2 = arith.constant 0 : i32
    return %c0_i32, %c0_i32_0, %c0_i32_1 : i32, i32, i32
  }
  func.func @transform_6(%arg0: i32) -> (i32, i32) {
    %c0_i32 = arith.constant 0 : i32
    %c0_i32_0 = arith.constant 0 : i32
    %c0_i32_1 = arith.constant 0 : i32
    return %c0_i32, %c0_i32_0 : i32, i32
  }
  func.func @transform_7(%arg0: i32) -> (i32, i32) {
    %c0_i32 = arith.constant 0 : i32
    %c0_i32_0 = arith.constant 0 : i32
    %c0_i32_1 = arith.constant 0 : i32
    return %c0_i32, %c0_i32_0 : i32, i32
  }
  func.func @transform_8(%arg0: i32) -> (i32, i32, i32) {
    %c0_i32 = arith.constant 0 : i32
    %c0_i32_0 = arith.constant 0 : i32
    %c0_i32_1 = arith.constant 0 : i32
    %c0_i32_2 = arith.constant 0 : i32
    return %c0_i32, %c0_i32_0, %c0_i32_1 : i32, i32, i32
  }
  func.func @transform_9(%arg0: i32) -> (i32, i32) {
    %c0_i32 = arith.constant 0 : i32
    %c0_i32_0 = arith.constant 0 : i32
    %c0_i32_1 = arith.constant 0 : i32
    return %c0_i32, %c0_i32_0 : i32, i32
  }
  func.func @transform_10(%arg0: i32) -> (i32, i32) {
    %c0_i32 = arith.constant 0 : i32
    %c0_i32_0 = arith.constant 0 : i32
    %c0_i32_1 = arith.constant 0 : i32
    return %c0_i32, %c0_i32_0 : i32, i32
  }
  func.func @transform_11(%arg0: i32) -> (i32, i32) {
    %c0_i32 = arith.constant 0 : i32
    %c0_i32_0 = arith.constant 0 : i32
    return %arg0, %c0_i32 : i32, i32
  }
}

</mosaic_0001>

<llo_original>
// kernel: tpu_custom_call.1
$region0: #{tpu_custom_call.1}
  #allocation0 [shape = 'u32[]', space=smem, size = 0x4, offset = 0x4, fixed_abs, tag = 'smem constant byte address 0x4 - core index']
  #allocation1 [shape = 'u32[72,128]{1,0:T(1,128)}', space=vmem, size = 0x9000, scoped, tag = 'internal scratch']
  %s0 = inlined_call_operand.vmem [shape: s32[2,128,1], index: 0, kind: input, shape index: {}]
  %s1 = inlined_call_operand.vmem [shape: f32[2,128,128], index: 1, kind: input, shape index: {}]
  %s2 = inlined_call_operand.vmem [shape: s32[2,128,1], index: 2, kind: input, shape index: {}]
  %s3 = inlined_call_operand.vmem [shape: f32[64,32], index: 3, kind: input, shape index: {}]
  %s4 = inlined_call_operand.vmem [shape: f32[64,32], index: 4, kind: input, shape index: {}]
  %s5 = inlined_call_operand.vmem [shape: f32[3,32,32], index: 5, kind: input, shape index: {}]
  %s6 = inlined_call_operand.vmem [shape: f32[32,128], index: 6, kind: input, shape index: {}]
  %s7 = inlined_call_operand.vmem [shape: f32[32,32], index: 7, kind: input, shape index: {}]
  %s8 = inlined_call_operand.vmem [shape: f32[2,64,64], index: 8, kind: input, shape index: {}]
  %s9 = inlined_call_operand.vmem [shape: f32[64,128], index: 9, kind: input, shape index: {}]
  %s10 = inlined_call_operand.vmem [shape: f32[8,128], index: 10, kind: input, shape index: {}]
  %s11 = inlined_call_operand.hbm [shape: f32[16,128], index: 11, kind: output, shape index: {}]
  %s12 = sld [smem:[#allocation0]]
  $region77: #{tpu_custom_call.1} parent=0
    _
  %s14 = ssub.s32 1, %s12
  %s15 = scalar_select 0, %s14, %s12
  $region1: #{tpu_custom_call.1} parent=0
    #allocation2 [shape = 'u8[8192]{0}', space=vmem, size = 0x2000, scoped, tag = 'output window, operand 0']
    #allocation3 [shape = 's32[2]{0}', space=sflag, size = 0x8, scoped, tag = 'scoped memory for tpu_custom_call.1']
    %16 = vsyncpa [#allocation3], 0
    %s17 = scalar_lea.sflag [#allocation3], 1
    %18 = vsyncpa %s17, 0
    loop: start=0, step=1, limit=4
    $region2: #{tpu_custom_call.1} parent=1 // loop_pre_header
      _
    $region3: #{tpu_custom_call.1} parent=1 // loop_header
      %s20 = sphi 0, %s24
      %p21 = scmp.ge.s32.totalorder %s20, 4
      %s30 = sphi 0, %s32
      %s33 = sphi 0, %s30
      %s34 = sphi 0, %s33
      %s50 = sphi 0, %s34
      %s56 = sphi 0, %s58
      %s59 = sphi 0, %s56
      %s60 = sphi 0, %s59
      %s76 = sphi 0, %s60
      %s82 = sphi 0, %s84
      %s85 = sphi 0, %s82
      %s86 = sphi 0, %s85
      %s102 = sphi 0, %s86
      %s106 = sphi 0, %s106
      %s108 = sphi 0, %s106
      %s109 = sphi 0, %s108
      %s123 = sphi 0, %s109
      %s127 = sphi 0, %s127
      %s129 = sphi 0, %s127
      %s130 = sphi 0, %s129
      %s144 = sphi 0, %s130
      %s148 = sphi 0, %s148
      %s150 = sphi 0, %s148
      %s151 = sphi 0, %s150
      %s165 = sphi 0, %s151
      %s169 = sphi 0, %s169
      %s171 = sphi 0, %s169
      %s172 = sphi 0, %s171
      %s186 = sphi 0, %s172
      %s190 = sphi 0, %s190
      %s192 = sphi 0, %s190
      %s193 = sphi 0, %s192
      %s207 = sphi 0, %s193
      %s211 = sphi 0, %s211
      %s213 = sphi 0, %s211
      %s214 = sphi 0, %s213
      %s228 = sphi 0, %s214
      %s232 = sphi 0, %s232
      %s234 = sphi 0, %s232
      %s235 = sphi 0, %s234
      %s249 = sphi 0, %s235
      %s253 = sphi 0, %s253
      %s255 = sphi 0, %s253
      %s256 = sphi 0, %s255
      %s270 = sphi 0, %s256
      %s276 = sphi 0, %s278
      %s279 = sphi 0, %s276
      %s280 = sphi 0, %s279
      %s296 = sphi 0, %s280
    $region4: #{tpu_custom_call.1} parent=1 // loop_header_branch
      %23 = sbr.rel (%p21) target = $region8
    $region5: #{tpu_custom_call.1} parent=1 // loop_body
      %s25 = ssub.s32 %s20, 1
      %s26 = ssub.s32 %s20, 2
      %s27 = sadd.s32 %s20, 1
      %s28 = ssub.s32 %s20, %s27
      %p29 = scmp.eq.s32.totalorder %s28, 0
      %s31 = sadd.s32 %s30, 1
      %s32 = scalar_select %p29, %s30, %s31
      %p35 = pneg %p29
      %p36 = scmp.eq.s32.totalorder %s20, 1
      %p37 = por %p35, %p36
      %p38 = scmp.ne.s32.totalorder %s30, %s33
      %p39 = scmp.eq.s32.totalorder %s20, 0
      %p40 = por %p38, %p39
      %p41 = scmp.ne.s32.totalorder %s30, %s33
      %p42 = scmp.eq.s32.totalorder %s25, 1
      %p43 = por %p41, %p42
      %p44 = scmp.ne.s32.totalorder %s33, %s34
      %p45 = scmp.eq.s32.totalorder %s25, 0
      %p46 = por %p44, %p45
      %p47 = scmp.ne.s32.totalorder %s33, %s34
      %p48 = scmp.eq.s32.totalorder %s26, 1
      %p49 = por %p47, %p48
      %p51 = scmp.ne.s32.totalorder %s34, %s50
      %p52 = scmp.eq.s32.totalorder %s26, 0
      %p53 = por %p51, %p52
      %s54 = ssub.s32 %s20, %s27
      %p55 = scmp.eq.s32.totalorder %s54, 0
      %s57 = sadd.s32 %s56, 1
      %s58 = scalar_select %p55, %s56, %s57
      %p61 = pneg %p55
      %p62 = scmp.eq.s32.totalorder %s20, 1
      %p63 = por %p61, %p62
      %p64 = scmp.ne.s32.totalorder %s56, %s59
      %p65 = scmp.eq.s32.totalorder %s20, 0
      %p66 = por %p64, %p65
      %p67 = scmp.ne.s32.totalorder %s56, %s59
      %p68 = scmp.eq.s32.totalorder %s25, 1
      %p69 = por %p67, %p68
      %p70 = scmp.ne.s32.totalorder %s59, %s60
      %p71 = scmp.eq.s32.totalorder %s25, 0
      %p72 = por %p70, %p71
      %p73 = scmp.ne.s32.totalorder %s59, %s60
      %p74 = scmp.eq.s32.totalorder %s26, 1
      %p75 = por %p73, %p74
      %p77 = scmp.ne.s32.totalorder %s60, %s76
      %p78 = scmp.eq.s32.totalorder %s26, 0
      %p79 = por %p77, %p78
      %s80 = ssub.s32 %s20, %s27
      %p81 = scmp.eq.s32.totalorder %s80, 0
      %s83 = sadd.s32 %s82, 1
      %s84 = scalar_select %p81, %s82, %s83
      %p87 = pneg %p81
      %p88 = scmp.eq.s32.totalorder %s20, 1
      %p89 = por %p87, %p88
      %p90 = scmp.ne.s32.totalorder %s82, %s85
      %p91 = scmp.eq.s32.totalorder %s20, 0
      %p92 = por %p90, %p91
      %p93 = scmp.ne.s32.totalorder %s82, %s85
      %p94 = scmp.eq.s32.totalorder %s25, 1
      %p95 = por %p93, %p94
      %p96 = scmp.ne.s32.totalorder %s85, %s86
      %p97 = scmp.eq.s32.totalorder %s25, 0
      %p98 = por %p96, %p97
      %p99 = scmp.ne.s32.totalorder %s85, %s86
      %p100 = scmp.eq.s32.totalorder %s26, 1
      %p101 = por %p99, %p100
      %p103 = scmp.ne.s32.totalorder %s86, %s102
      %p104 = scmp.eq.s32.totalorder %s26, 0
      %p105 = por %p103, %p104
      %s107 = sadd.s32 %s106, 1
      %p110 = scmp.eq.s32.totalorder %s20, 1
      %p111 = scmp.ne.s32.totalorder %s106, %s108
      %p112 = scmp.eq.s32.totalorder %s20, 0
      %p113 = por %p111, %p112
      %p114 = scmp.ne.s32.totalorder %s106, %s108
      %p115 = scmp.eq.s32.totalorder %s25, 1
      %p116 = por %p114, %p115
      %p117 = scmp.ne.s32.totalorder %s108, %s109
      %p118 = scmp.eq.s32.totalorder %s25, 0
      %p119 = por %p117, %p118
      %p120 = scmp.ne.s32.totalorder %s108, %s109
      %p121 = scmp.eq.s32.totalorder %s26, 1
      %p122 = por %p120, %p121
      %p124 = scmp.ne.s32.totalorder %s109, %s123
      %p125 = scmp.eq.s32.totalorder %s26, 0
      %p126 = por %p124, %p125
      %s128 = sadd.s32 %s127, 1
      %p131 = scmp.eq.s32.totalorder %s20, 1
      %p132 = scmp.ne.s32.totalorder %s127, %s129
      %p133 = scmp.eq.s32.totalorder %s20, 0
      %p134 = por %p132, %p133
      %p135 = scmp.ne.s32.totalorder %s127, %s129
      %p136 = scmp.eq.s32.totalorder %s25, 1
      %p137 = por %p135, %p136
      %p138 = scmp.ne.s32.totalorder %s129, %s130
      %p139 = scmp.eq.s32.totalorder %s25, 0
      %p140 = por %p138, %p139
      %p141 = scmp.ne.s32.totalorder %s129, %s130
      %p142 = scmp.eq.s32.totalorder %s26, 1
      %p143 = por %p141, %p142
      %p145 = scmp.ne.s32.totalorder %s130, %s144
      %p146 = scmp.eq.s32.totalorder %s26, 0
      %p147 = por %p145, %p146
      %s149 = sadd.s32 %s148, 1
      %p152 = scmp.eq.s32.totalorder %s20, 1
      %p153 = scmp.ne.s32.totalorder %s148, %s150
      %p154 = scmp.eq.s32.totalorder %s20, 0
      %p155 = por %p153, %p154
      %p156 = scmp.ne.s32.totalorder %s148, %s150
      %p157 = scmp.eq.s32.totalorder %s25, 1
      %p158 = por %p156, %p157
      %p159 = scmp.ne.s32.totalorder %s150, %s151
      %p160 = scmp.eq.s32.totalorder %s25, 0
      %p161 = por %p159, %p160
      %p162 = scmp.ne.s32.totalorder %s150, %s151
      %p163 = scmp.eq.s32.totalorder %s26, 1
      %p164 = por %p162, %p163
      %p166 = scmp.ne.s32.totalorder %s151, %s165
      %p167 = scmp.eq.s32.totalorder %s26, 0
      %p168 = por %p166, %p167
      %s170 = sadd.s32 %s169, 1
      %p173 = scmp.eq.s32.totalorder %s20, 1
      %p174 = scmp.ne.s32.totalorder %s169, %s171
      %p175 = scmp.eq.s32.totalorder %s20, 0
      %p176 = por %p174, %p175
      %p177 = scmp.ne.s32.totalorder %s169, %s171
      %p178 = scmp.eq.s32.totalorder %s25, 1
      %p179 = por %p177, %p178
      %p180 = scmp.ne.s32.totalorder %s171, %s172
      %p181 = scmp.eq.s32.totalorder %s25, 0
      %p182 = por %p180, %p181
      %p183 = scmp.ne.s32.totalorder %s171, %s172
      %p184 = scmp.eq.s32.totalorder %s26, 1
      %p185 = por %p183, %p184
      %p187 = scmp.ne.s32.totalorder %s172, %s186
      %p188 = scmp.eq.s32.totalorder %s26, 0
      %p189 = por %p187, %p188
      %s191 = sadd.s32 %s190, 1
      %p194 = scmp.eq.s32.totalorder %s20, 1
      %p195 = scmp.ne.s32.totalorder %s190, %s192
      %p196 = scmp.eq.s32.totalorder %s20, 0
      %p197 = por %p195, %p196
      %p198 = scmp.ne.s32.totalorder %s190, %s192
      %p199 = scmp.eq.s32.totalorder %s25, 1
      %p200 = por %p198, %p199
      %p201 = scmp.ne.s32.totalorder %s192, %s193
      %p202 = scmp.eq.s32.totalorder %s25, 0
      %p203 = por %p201, %p202
      %p204 = scmp.ne.s32.totalorder %s192, %s193
      %p205 = scmp.eq.s32.totalorder %s26, 1
      %p206 = por %p204, %p205
      %p208 = scmp.ne.s32.totalorder %s193, %s207
      %p209 = scmp.eq.s32.totalorder %s26, 0
      %p210 = por %p208, %p209
      %s212 = sadd.s32 %s211, 1
      %p215 = scmp.eq.s32.totalorder %s20, 1
      %p216 = scmp.ne.s32.totalorder %s211, %s213
      %p217 = scmp.eq.s32.totalorder %s20, 0
      %p218 = por %p216, %p217
      %p219 = scmp.ne.s32.totalorder %s211, %s213
      %p220 = scmp.eq.s32.totalorder %s25, 1
      %p221 = por %p219, %p220
      %p222 = scmp.ne.s32.totalorder %s213, %s214
      %p223 = scmp.eq.s32.totalorder %s25, 0
      %p224 = por %p222, %p223
      %p225 = scmp.ne.s32.totalorder %s213, %s214
      %p226 = scmp.eq.s32.totalorder %s26, 1
      %p227 = por %p225, %p226
      %p229 = scmp.ne.s32.totalorder %s214, %s228
      %p230 = scmp.eq.s32.totalorder %s26, 0
      %p231 = por %p229, %p230
      %s233 = sadd.s32 %s232, 1
      %p236 = scmp.eq.s32.totalorder %s20, 1
      %p237 = scmp.ne.s32.totalorder %s232, %s234
      %p238 = scmp.eq.s32.totalorder %s20, 0
      %p239 = por %p237, %p238
      %p240 = scmp.ne.s32.totalorder %s232, %s234
      %p241 = scmp.eq.s32.totalorder %s25, 1
      %p242 = por %p240, %p241
      %p243 = scmp.ne.s32.totalorder %s234, %s235
      %p244 = scmp.eq.s32.totalorder %s25, 0
      %p245 = por %p243, %p244
      %p246 = scmp.ne.s32.totalorder %s234, %s235
      %p247 = scmp.eq.s32.totalorder %s26, 1
      %p248 = por %p246, %p247
      %p250 = scmp.ne.s32.totalorder %s235, %s249
      %p251 = scmp.eq.s32.totalorder %s26, 0
      %p252 = por %p250, %p251
      %s254 = sadd.s32 %s253, 1
      %p257 = scmp.eq.s32.totalorder %s20, 1
      %p258 = scmp.ne.s32.totalorder %s253, %s255
      %p259 = scmp.eq.s32.totalorder %s20, 0
      %p260 = por %p258, %p259
      %p261 = scmp.ne.s32.totalorder %s253, %s255
      %p262 = scmp.eq.s32.totalorder %s25, 1
      %p263 = por %p261, %p262
      %p264 = scmp.ne.s32.totalorder %s255, %s256
      %p265 = scmp.eq.s32.totalorder %s25, 0
      %p266 = por %p264, %p265
      %p267 = scmp.ne.s32.totalorder %s255, %s256
      %p268 = scmp.eq.s32.totalorder %s26, 1
      %p269 = por %p267, %p268
      %p271 = scmp.ne.s32.totalorder %s256, %s270
      %p272 = scmp.eq.s32.totalorder %s26, 0
      %p273 = por %p271, %p272
      %s274 = ssub.s32 %s20, %s27
      %p275 = scmp.eq.s32.totalorder %s274, 0
      %s277 = sadd.s32 %s276, 1
      %s278 = scalar_select %p275, %s276, %s277
      %p281 = pneg %p275
      %p282 = scmp.eq.s32.totalorder %s20, 1
      %p283 = por %p281, %p282
      %p284 = scmp.ne.s32.totalorder %s276, %s279
      %p285 = scmp.eq.s32.totalorder %s20, 0
      %p286 = por %p284, %p285
      %p287 = scmp.ne.s32.totalorder %s276, %s279
      %p288 = scmp.eq.s32.totalorder %s25, 1
      %p289 = por %p287, %p288
      %p290 = scmp.ne.s32.totalorder %s279, %s280
      %p291 = scmp.eq.s32.totalorder %s25, 0
      %p292 = por %p290, %p291
      %p293 = scmp.ne.s32.totalorder %s279, %s280
      %p294 = scmp.eq.s32.totalorder %s26, 1
      %p295 = por %p293, %p294
      %p297 = scmp.ne.s32.totalorder %s280, %s296
      %p298 = scmp.eq.s32.totalorder %s26, 0
      %p299 = por %p297, %p298
      %p300 = scmp.le.s32.totalorder 1, %s20
      %p301 = scmp.lt.s32.totalorder %s20, 3
      %p302 = pnand %p300, %p301
      %p303 = pneg %p302
      // Predicated region
      $region9: #{tpu_custom_call.1} parent=5 // pred_check
        _
      $region10: #{tpu_custom_call.1} parent=5 // pred_check_branch
        %305 = sbr.rel (%p302) target = $region12
      $region11: #{tpu_custom_call.1} parent=5 // pred_region
        %s306 = ssub.s32 %s20, 1
        // Predicated region
        $region13: #{tpu_custom_call.1} parent=11 // pred_check
          %p307 = pneg %p119
        $region14: #{tpu_custom_call.1} parent=11 // pred_check_branch
          %309 = sbr.rel (%p307) target = $region16
        $region15: #{tpu_custom_call.1} parent=11 // pred_region
          _
        $region16: #{tpu_custom_call.1} parent=11 // pred_fallthru
          _
        // Predicated region
        $region17: #{tpu_custom_call.1} parent=11 // pred_check
          %p310 = pneg %p140
        $region18: #{tpu_custom_call.1} parent=11 // pred_check_branch
          %312 = sbr.rel (%p310) target = $region20
        $region19: #{tpu_custom_call.1} parent=11 // pred_region
          _
        $region20: #{tpu_custom_call.1} parent=11 // pred_fallthru
          _
        // Predicated region
        $region21: #{tpu_custom_call.1} parent=11 // pred_check
          %p313 = pneg %p161
        $region22: #{tpu_custom_call.1} parent=11 // pred_check_branch
          %315 = sbr.rel (%p313) target = $region24
        $region23: #{tpu_custom_call.1} parent=11 // pred_region
          _
        $region24: #{tpu_custom_call.1} parent=11 // pred_fallthru
          _
        // Predicated region
        $region25: #{tpu_custom_call.1} parent=11 // pred_check
          %p316 = pneg %p182
        $region26: #{tpu_custom_call.1} parent=11 // pred_check_branch
          %318 = sbr.rel (%p316) target = $region28
        $region27: #{tpu_custom_call.1} parent=11 // pred_region
          _
        $region28: #{tpu_custom_call.1} parent=11 // pred_fallthru
          _
        // Predicated region
        $region29: #{tpu_custom_call.1} parent=11 // pred_check
          %p319 = pneg %p203
        $region30: #{tpu_custom_call.1} parent=11 // pred_check_branch
          %321 = sbr.rel (%p319) target = $region32
        $region31: #{tpu_custom_call.1} parent=11 // pred_region
          _
        $region32: #{tpu_custom_call.1} parent=11 // pred_fallthru
          _
        // Predicated region
        $region33: #{tpu_custom_call.1} parent=11 // pred_check
          %p322 = pneg %p224
        $region34: #{tpu_custom_call.1} parent=11 // pred_check_branch
          %324 = sbr.rel (%p322) target = $region36
        $region35: #{tpu_custom_call.1} parent=11 // pred_region
          _
        $region36: #{tpu_custom_call.1} parent=11 // pred_fallthru
          _
        // Predicated region
        $region37: #{tpu_custom_call.1} parent=11 // pred_check
          %p325 = pneg %p245
        $region38: #{tpu_custom_call.1} parent=11 // pred_check_branch
          %327 = sbr.rel (%p325) target = $region40
        $region39: #{tpu_custom_call.1} parent=11 // pred_region
          _
        $region40: #{tpu_custom_call.1} parent=11 // pred_fallthru
          _
        // Predicated region
        $region41: #{tpu_custom_call.1} parent=11 // pred_check
          %p328 = pneg %p266
        $region42: #{tpu_custom_call.1} parent=11 // pred_check_branch
          %330 = sbr.rel (%p328) target = $region44
        $region43: #{tpu_custom_call.1} parent=11 // pred_region
          _
        $region44: #{tpu_custom_call.1} parent=11 // pred_fallthru
          _
      $region12: #{tpu_custom_call.1} parent=5 // pred_fallthru
        _
      %p331 = scmp.lt.s32.totalorder %s20, 2
      // Predicated region
      $region45: #{tpu_custom_call.1} parent=5 // pred_check
        %p332 = pneg %p331
      $region46: #{tpu_custom_call.1} parent=5 // pred_check_branch
        %334 = sbr.rel (%p332) target = $region48
      $region47: #{tpu_custom_call.1} parent=5 // pred_region
        // Predicated region
        $region49: #{tpu_custom_call.1} parent=47 // pred_check
          %p335 = pneg %p40
        $region50: #{tpu_custom_call.1} parent=47 // pred_check_branch
          %337 = sbr.rel (%p335) target = $region52
        $region51: #{tpu_custom_call.1} parent=47 // pred_region
          %p338 = scmp.lt.s32.totalorder %s20, 1
          %s339 = scalar_select %p338, %s20, 1
          %s340 = smul.addr %s339, 16
          %s341 = smul.addr %s340, 8
          %s342 = scalar_lea.vmem %s0, %s341
        $region52: #{tpu_custom_call.1} parent=47 // pred_fallthru
          _
        // Predicated region
        $region53: #{tpu_custom_call.1} parent=47 // pred_check
          %p343 = pneg %p66
        $region54: #{tpu_custom_call.1} parent=47 // pred_check_branch
          %345 = sbr.rel (%p343) target = $region56
        $region55: #{tpu_custom_call.1} parent=47 // pred_region
          %p346 = scmp.lt.s32.totalorder %s20, 1
          %s347 = scalar_select %p346, %s20, 1
          %s348 = smul.addr %s347, 16
          %s349 = smul.addr %s348, 8
          %s350 = scalar_lea.vmem %s1, %s349
        $region56: #{tpu_custom_call.1} parent=47 // pred_fallthru
          _
        // Predicated region
        $region57: #{tpu_custom_call.1} parent=47 // pred_check
          %p351 = pneg %p92
        $region58: #{tpu_custom_call.1} parent=47 // pred_check_branch
          %353 = sbr.rel (%p351) target = $region60
        $region59: #{tpu_custom_call.1} parent=47 // pred_region
          %p354 = scmp.lt.s32.totalorder %s20, 1
          %s355 = scalar_select %p354, %s20, 1
          %s356 = smul.addr %s355, 16
          %s357 = smul.addr %s356, 8
          %s358 = scalar_lea.vmem %s2, %s357
        $region60: #{tpu_custom_call.1} parent=47 // pred_fallthru
          _
      $region48: #{tpu_custom_call.1} parent=5 // pred_fallthru
        _
      %p359 = scmp.le.s32.totalorder 1, %s20
      %p360 = scmp.lt.s32.totalorder %s20, 3
      %p361 = pnand %p359, %p360
      %p362 = pneg %p361
      // Predicated region
      $region61: #{tpu_custom_call.1} parent=5 // pred_check
        _
      $region62: #{tpu_custom_call.1} parent=5 // pred_check_branch
        %364 = sbr.rel (%p361) target = $region64
      $region63: #{tpu_custom_call.1} parent=5 // pred_region
        %s365 = ssub.s32 %s20, 1
        %p366 = scmp.lt.s32.totalorder %s25, 1
        %s367 = scalar_select %p366, %s25, 1
        %s368 = smul.addr %s367, 16
        %s369 = smul.addr %s368, 8
        %s370 = scalar_lea.vmem %s0, %s369
        %p371 = pneg %p46
        %p372 = pneg %p43
        %p373 = scmp.lt.s32.totalorder %s25, 1
        %s374 = scalar_select %p373, %s25, 1
        %s375 = smul.addr %s374, 16
        %s376 = smul.addr %s375, 8
        %s377 = scalar_lea.vmem %s1, %s376
        %p378 = pneg %p72
        %p379 = pneg %p69
        %p380 = scmp.lt.s32.totalorder %s25, 1
        %s381 = scalar_select %p380, %s25, 1
        %s382 = smul.addr %s381, 16
        %s383 = smul.addr %s382, 8
        %s384 = scalar_lea.vmem %s2, %s383
        %p385 = pneg %p98
        %p386 = pneg %p95
        %p387 = pneg %p119
        %p388 = pneg %p116
        %p389 = pneg %p140
        %p390 = pneg %p137
        %p391 = pneg %p161
        %p392 = pneg %p158
        %p393 = pneg %p182
        %p394 = pneg %p179
        %p395 = pneg %p203
        %p396 = pneg %p200
        %p397 = pneg %p224
        %p398 = pneg %p221
        %p399 = pneg %p245
        %p400 = pneg %p242
        %p401 = pneg %p266
        %p402 = pneg %p263
        %p403 = pneg %p292
        %p404 = pneg %p289
        %s405 = sand.u32 %s279, 1
        %s406 = scalar_lea.sflag [#allocation3], %s405
        %s407 = sand.u32 %s279, 1
        %s408 = smul.addr %s407, 8
        %s409 = scalar_lea.vmem [#allocation2], %s408
        %p410 = scmp.lt.s32.totalorder %s25, 1
        %s411 = scalar_select %p410, %s25, 1
        %s412 = smul.addr %s411, 16
        %s413 = smul.addr %s412, 8
        %s414 = scalar_lea.vmem %s0, %s413
        %p415 = scmp.lt.s32.totalorder %s25, 1
        %s416 = scalar_select %p415, %s25, 1
        %s417 = smul.addr %s416, 16
        %s418 = smul.addr %s417, 8
        %s419 = scalar_lea.vmem %s1, %s418
        %p420 = scmp.lt.s32.totalorder %s25, 1
        %s421 = scalar_select %p420, %s25, 1
        %s422 = smul.addr %s421, 16
        %s423 = smul.addr %s422, 8
        %s424 = scalar_lea.vmem %s2, %s423
        %v425 = vld [vmem:[%s414] sm:$0xff]
        %v426 = vld [vmem:[%s414 + $0x8] sm:$0xff]
        %v427 = vld [vmem:[%s414 + $0x10] sm:$0xff]
        %v428 = vld [vmem:[%s414 + $0x18] sm:$0xff]
        %v429 = vld [vmem:[%s414 + $0x20] sm:$0xff]
        %v430 = vld [vmem:[%s414 + $0x28] sm:$0xff]
        %v431 = vld [vmem:[%s414 + $0x30] sm:$0xff]
        %v432 = vld [vmem:[%s414 + $0x38] sm:$0xff]
        %v433 = vld [vmem:[%s414 + $0x40] sm:$0xff]
        %v434 = vld [vmem:[%s414 + $0x48] sm:$0xff]
        %v435 = vld [vmem:[%s414 + $0x50] sm:$0xff]
        %v436 = vld [vmem:[%s414 + $0x58] sm:$0xff]
        %v437 = vld [vmem:[%s414 + $0x60] sm:$0xff]
        %v438 = vld [vmem:[%s414 + $0x68] sm:$0xff]
        %v439 = vld [vmem:[%s414 + $0x70] sm:$0xff]
        %v440 = vld [vmem:[%s414 + $0x78] sm:$0xff]
        %v441 = vlaneseq
        %v442 = vand.u32 %v441, 127
        %443 = vset.pattern.permute.xlu0 0
        %444 = vperm.xlu0 %443, %v425
        %v445 = vpop.permute.xlu0 %444
        %446 = vset.pattern.permute.xlu0 0
        %447 = vperm.xlu0 %446, %v426
        %v448 = vpop.permute.xlu0 %447
        %449 = vset.pattern.permute.xlu0 0
        %450 = vperm.xlu0 %449, %v427
        %v451 = vpop.permute.xlu0 %450
        %452 = vset.pattern.permute.xlu0 0
        %453 = vperm.xlu0 %452, %v428
        %v454 = vpop.permute.xlu0 %453
        %455 = vset.pattern.permute.xlu0 0
        %456 = vperm.xlu0 %455, %v429
        %v457 = vpop.permute.xlu0 %456
        %458 = vset.pattern.permute.xlu0 0
        %459 = vperm.xlu0 %458, %v430
        %v460 = vpop.permute.xlu0 %459
        %461 = vset.pattern.permute.xlu0 0
        %462 = vperm.xlu0 %461, %v431
        %v463 = vpop.permute.xlu0 %462
        %464 = vset.pattern.permute.xlu0 0
        %465 = vperm.xlu0 %464, %v432
        %v466 = vpop.permute.xlu0 %465
        %467 = vset.pattern.permute.xlu0 0
        %468 = vperm.xlu0 %467, %v433
        %v469 = vpop.permute.xlu0 %468
        %470 = vset.pattern.permute.xlu0 0
        %471 = vperm.xlu0 %470, %v434
        %v472 = vpop.permute.xlu0 %471
        %473 = vset.pattern.permute.xlu0 0
        %474 = vperm.xlu0 %473, %v435
        %v475 = vpop.permute.xlu0 %474
        %476 = vset.pattern.permute.xlu0 0
        %477 = vperm.xlu0 %476, %v436
        %v478 = vpop.permute.xlu0 %477
        %479 = vset.pattern.permute.xlu0 0
        %480 = vperm.xlu0 %479, %v437
        %v481 = vpop.permute.xlu0 %480
        %482 = vset.pattern.permute.xlu0 0
        %483 = vperm.xlu0 %482, %v438
        %v484 = vpop.permute.xlu0 %483
        %485 = vset.pattern.permute.xlu0 0
        %486 = vperm.xlu0 %485, %v439
        %v487 = vpop.permute.xlu0 %486
        %488 = vset.pattern.permute.xlu0 0
        %489 = vperm.xlu0 %488, %v440
        %v490 = vpop.permute.xlu0 %489
        %vm491 = vcmp.eq.s32.totalorder %v445, %v442
        %vm492 = vcmp.eq.s32.totalorder %v448, %v442
        %vm493 = vcmp.eq.s32.totalorder %v451, %v442
        %vm494 = vcmp.eq.s32.totalorder %v454, %v442
        %vm495 = vcmp.eq.s32.totalorder %v457, %v442
        %vm496 = vcmp.eq.s32.totalorder %v460, %v442
        %vm497 = vcmp.eq.s32.totalorder %v463, %v442
        %vm498 = vcmp.eq.s32.totalorder %v466, %v442
        %vm499 = vcmp.eq.s32.totalorder %v469, %v442
        %vm500 = vcmp.eq.s32.totalorder %v472, %v442
        %vm501 = vcmp.eq.s32.totalorder %v475, %v442
        %vm502 = vcmp.eq.s32.totalorder %v478, %v442
        %vm503 = vcmp.eq.s32.totalorder %v481, %v442
        %vm504 = vcmp.eq.s32.totalorder %v484, %v442
        %vm505 = vcmp.eq.s32.totalorder %v487, %v442
        %vm506 = vcmp.eq.s32.totalorder %v490, %v442
        %v507 = vsel %vm491, 1, 0
        %v508 = vsel %vm492, 1, 0
        %v509 = vsel %vm493, 1, 0
        %v510 = vsel %vm494, 1, 0
        %v511 = vsel %vm495, 1, 0
        %v512 = vsel %vm496, 1, 0
        %v513 = vsel %vm497, 1, 0
        %v514 = vsel %vm498, 1, 0
        %v515 = vsel %vm499, 1, 0
        %v516 = vsel %vm500, 1, 0
        %v517 = vsel %vm501, 1, 0
        %v518 = vsel %vm502, 1, 0
        %v519 = vsel %vm503, 1, 0
        %v520 = vsel %vm504, 1, 0
        %v521 = vsel %vm505, 1, 0
        %v522 = vsel %vm506, 1, 0
        %v523 = vcvt.s32.f32 %v507
        %v524 = vcvt.s32.f32 %v508
        %v525 = vcvt.s32.f32 %v509
        %v526 = vcvt.s32.f32 %v510
        %v527 = vcvt.s32.f32 %v511
        %v528 = vcvt.s32.f32 %v512
        %v529 = vcvt.s32.f32 %v513
        %v530 = vcvt.s32.f32 %v514
        %v531 = vcvt.s32.f32 %v515
        %v532 = vcvt.s32.f32 %v516
        %v533 = vcvt.s32.f32 %v517
        %v534 = vcvt.s32.f32 %v518
        %v535 = vcvt.s32.f32 %v519
        %v536 = vcvt.s32.f32 %v520
        %v537 = vcvt.s32.f32 %v521
        %v538 = vcvt.s32.f32 %v522
        %v539 = vld [vmem:[%s3] sm:$0xff]
        %v540 = vld [vmem:[%s3 + $0x8] sm:$0xff]
        %v541 = vld [vmem:[%s3 + $0x10] sm:$0xff]
        %v542 = vld [vmem:[%s3 + $0x18] sm:$0xff]
        %v543 = vld [vmem:[%s3 + $0x20] sm:$0xff]
        %v544 = vld [vmem:[%s3 + $0x28] sm:$0xff]
        %v545 = vld [vmem:[%s3 + $0x30] sm:$0xff]
        %v546 = vld [vmem:[%s3 + $0x38] sm:$0xff]
        %vm547 = vcmask 523264
        %v549 = vsel %vm547, %v523, 0
        %v552 = vsel %vm547, %v524, 0
        %v555 = vsel %vm547, %v525, 0
        %v558 = vsel %vm547, %v526, 0
        %v561 = vsel %vm547, %v527, 0
        %v564 = vsel %vm547, %v528, 0
        %v567 = vsel %vm547, %v529, 0
        %v570 = vsel %vm547, %v530, 0
        %v573 = vsel %vm547, %v531, 0
        %v576 = vsel %vm547, %v532, 0
        %v579 = vsel %vm547, %v533, 0
        %v582 = vsel %vm547, %v534, 0
        %v585 = vsel %vm547, %v535, 0
        %v588 = vsel %vm547, %v536, 0
        %v591 = vsel %vm547, %v537, 0
        %v594 = vsel %vm547, %v538, 0
        %596 = vmatpush.msra.mxu0 0.0
        %597 = vmatpush.msra.mxu0 0.0
        %598 = vmatpush.msra.mxu0 0.0
        %599 = vmatpush.msra.mxu0 0.0
        %600 = vmatpush.msra.mxu0 0.0
        %601 = vmatpush.msra.mxu0 0.0
        %602 = vmatpush.msra.mxu0 0.0
        %603 = vmatpush.msra.mxu0 0.0
        %604 = vmatpush.msra.mxu0 %v546
        %605 = vmatpush.msra.mxu0 %v545
        %606 = vmatpush.msra.mxu0 %v544
        %607 = vmatpush.msra.mxu0 %v543
        %608 = vmatpush.msra.mxu0 %v542
        %609 = vmatpush.msra.mxu0 %v541
        %610 = vmatpush.msra.mxu0 %v540
        %611 = vmatpush.msra.mxu0 %v539
        %612 = vmatmul.f32.gmra.mxu0 %v549
        %v613 = vpop.f32.mrf.mxu0
        %v614 = vadd.f32 0.0, %v613
        %615 = vmatmul.f32.gmra.mxu0 %v552
        %v616 = vpop.f32.mrf.mxu0
        %v617 = vadd.f32 0.0, %v616
        %618 = vmatmul.f32.gmra.mxu0 %v555
        %v619 = vpop.f32.mrf.mxu0
        %v620 = vadd.f32 0.0, %v619
        %621 = vmatmul.f32.gmra.mxu0 %v558
        %v622 = vpop.f32.mrf.mxu0
        %v623 = vadd.f32 0.0, %v622
        %624 = vmatmul.f32.gmra.mxu0 %v561
        %v625 = vpop.f32.mrf.mxu0
        %v626 = vadd.f32 0.0, %v625
        %627 = vmatmul.f32.gmra.mxu0 %v564
        %v628 = vpop.f32.mrf.mxu0
        %v629 = vadd.f32 0.0, %v628
        %630 = vmatmul.f32.gmra.mxu0 %v567
        %v631 = vpop.f32.mrf.mxu0
        %v632 = vadd.f32 0.0, %v631
        %633 = vmatmul.f32.gmra.mxu0 %v570
        %v634 = vpop.f32.mrf.mxu0
        %v635 = vadd.f32 0.0, %v634
        %636 = vmatmul.f32.gmra.mxu0 %v573
        %v637 = vpop.f32.mrf.mxu0
        %v638 = vadd.f32 0.0, %v637
        %639 = vmatmul.f32.gmra.mxu0 %v576
        %v640 = vpop.f32.mrf.mxu0
        %v641 = vadd.f32 0.0, %v640
        %642 = vmatmul.f32.gmra.mxu0 %v579
        %v643 = vpop.f32.mrf.mxu0
        %v644 = vadd.f32 0.0, %v643
        %645 = vmatmul.f32.gmra.mxu0 %v582
        %v646 = vpop.f32.mrf.mxu0
        %v647 = vadd.f32 0.0, %v646
        %648 = vmatmul.f32.gmra.mxu0 %v585
        %v649 = vpop.f32.mrf.mxu0
        %v650 = vadd.f32 0.0, %v649
        %651 = vmatmul.f32.gmra.mxu0 %v588
        %v652 = vpop.f32.mrf.mxu0
        %v653 = vadd.f32 0.0, %v652
        %654 = vmatmul.f32.gmra.mxu0 %v591
        %v655 = vpop.f32.mrf.mxu0
        %v656 = vadd.f32 0.0, %v655
        %657 = vmatmul.f32.gmra.mxu0 %v594
        %v658 = vpop.f32.mrf.mxu0
        %v659 = vadd.f32 0.0, %v658
        %660 = vdwg.mxu0
        %vm661 = vcmp.ge.s32.totalorder %v425, 0
        %vm662 = vcmp.ge.s32.totalorder %v426, 0
        %vm663 = vcmp.ge.s32.totalorder %v427, 0
        %vm664 = vcmp.ge.s32.totalorder %v428, 0
        %vm665 = vcmp.ge.s32.totalorder %v429, 0
        %vm666 = vcmp.ge.s32.totalorder %v430, 0
        %vm667 = vcmp.ge.s32.totalorder %v431, 0
        %vm668 = vcmp.ge.s32.totalorder %v432, 0
        %vm669 = vcmp.ge.s32.totalorder %v433, 0
        %vm670 = vcmp.ge.s32.totalorder %v434, 0
        %vm671 = vcmp.ge.s32.totalorder %v435, 0
        %vm672 = vcmp.ge.s32.totalorder %v436, 0
        %vm673 = vcmp.ge.s32.totalorder %v437, 0
        %vm674 = vcmp.ge.s32.totalorder %v438, 0
        %vm675 = vcmp.ge.s32.totalorder %v439, 0
        %vm676 = vcmp.ge.s32.totalorder %v440, 0
        %v677 = vsel %vm661, 1, 0
        %v678 = vsel %vm662, 1, 0
        %v679 = vsel %vm663, 1, 0
        %v680 = vsel %vm664, 1, 0
        %v681 = vsel %vm665, 1, 0
        %v682 = vsel %vm666, 1, 0
        %v683 = vsel %vm667, 1, 0
        %v684 = vsel %vm668, 1, 0
        %v685 = vsel %vm669, 1, 0
        %v686 = vsel %vm670, 1, 0
        %v687 = vsel %vm671, 1, 0
        %v688 = vsel %vm672, 1, 0
        %v689 = vsel %vm673, 1, 0
        %v690 = vsel %vm674, 1, 0
        %v691 = vsel %vm675, 1, 0
        %v692 = vsel %vm676, 1, 0
        %v693 = vcvt.s32.f32 %v677
        %v694 = vcvt.s32.f32 %v678
        %v695 = vcvt.s32.f32 %v679
        %v696 = vcvt.s32.f32 %v680
        %v697 = vcvt.s32.f32 %v681
        %v698 = vcvt.s32.f32 %v682
        %v699 = vcvt.s32.f32 %v683
        %v700 = vcvt.s32.f32 %v684
        %v701 = vcvt.s32.f32 %v685
        %v702 = vcvt.s32.f32 %v686
        %v703 = vcvt.s32.f32 %v687
        %v704 = vcvt.s32.f32 %v688
        %v705 = vcvt.s32.f32 %v689
        %v706 = vcvt.s32.f32 %v690
        %v707 = vcvt.s32.f32 %v691
        %v708 = vcvt.s32.f32 %v692
        %725 = vset.pattern.permute.xlu0 0
        %726 = vperm.xlu0 %725, %v693
        %v727 = vpop.permute.xlu0 %726
        %728 = vset.pattern.permute.xlu0 0
        %729 = vperm.xlu0 %728, %v694
        %v730 = vpop.permute.xlu0 %729
        %731 = vset.pattern.permute.xlu0 0
        %732 = vperm.xlu0 %731, %v695
        %v733 = vpop.permute.xlu0 %732
        %734 = vset.pattern.permute.xlu0 0
        %735 = vperm.xlu0 %734, %v696
        %v736 = vpop.permute.xlu0 %735
        %737 = vset.pattern.permute.xlu0 0
        %738 = vperm.xlu0 %737, %v697
        %v739 = vpop.permute.xlu0 %738
        %740 = vset.pattern.permute.xlu0 0
        %741 = vperm.xlu0 %740, %v698
        %v742 = vpop.permute.xlu0 %741
        %743 = vset.pattern.permute.xlu0 0
        %744 = vperm.xlu0 %743, %v699
        %v745 = vpop.permute.xlu0 %744
        %746 = vset.pattern.permute.xlu0 0
        %747 = vperm.xlu0 %746, %v700
        %v748 = vpop.permute.xlu0 %747
        %749 = vset.pattern.permute.xlu0 0
        %750 = vperm.xlu0 %749, %v701
        %v751 = vpop.permute.xlu0 %750
        %752 = vset.pattern.permute.xlu0 0
        %753 = vperm.xlu0 %752, %v702
        %v754 = vpop.permute.xlu0 %753
        %755 = vset.pattern.permute.xlu0 0
        %756 = vperm.xlu0 %755, %v703
        %v757 = vpop.permute.xlu0 %756
        %758 = vset.pattern.permute.xlu0 0
        %759 = vperm.xlu0 %758, %v704
        %v760 = vpop.permute.xlu0 %759
        %761 = vset.pattern.permute.xlu0 0
        %762 = vperm.xlu0 %761, %v705
        %v763 = vpop.permute.xlu0 %762
        %764 = vset.pattern.permute.xlu0 0
        %765 = vperm.xlu0 %764, %v706
        %v766 = vpop.permute.xlu0 %765
        %767 = vset.pattern.permute.xlu0 0
        %768 = vperm.xlu0 %767, %v707
        %v769 = vpop.permute.xlu0 %768
        %770 = vset.pattern.permute.xlu0 0
        %771 = vperm.xlu0 %770, %v708
        %v772 = vpop.permute.xlu0 %771
        %v773 = vperm.slane %v727, %v442
        %v774 = vadd.s32 %v442, 4294967288
        %v775 = vperm.slane %v730, %v774
        %vm776 = vcmask 130112
        %v777 = vsel %vm776, %v775, %v773
        %v778 = vperm.slane %v733, %v442
        %v779 = vperm.slane %v736, %v774
        %v780 = vsel %vm776, %v779, %v778
        %v781 = vperm.slane %v739, %v442
        %v782 = vperm.slane %v742, %v774
        %v783 = vsel %vm776, %v782, %v781
        %v784 = vperm.slane %v745, %v442
        %v785 = vperm.slane %v748, %v774
        %v786 = vsel %vm776, %v785, %v784
        %v787 = vperm.slane %v751, %v442
        %v788 = vperm.slane %v754, %v774
        %v789 = vsel %vm776, %v788, %v787
        %v790 = vperm.slane %v757, %v442
        %v791 = vperm.slane %v760, %v774
        %v792 = vsel %vm776, %v791, %v790
        %v793 = vperm.slane %v763, %v442
        %v794 = vperm.slane %v766, %v774
        %v795 = vsel %vm776, %v794, %v793
        %v796 = vperm.slane %v769, %v442
        %v797 = vperm.slane %v772, %v774
        %v798 = vsel %vm776, %v797, %v796
        %vm799 = vcmask 1041409
        %v800 = vsel %vm799, %v780, %v777
        %vm801 = vcmask 1042434
        %v802 = vsel %vm801, %v783, %v800
        %vm803 = vcmask 1043459
        %v804 = vsel %vm803, %v786, %v802
        %vm805 = vcmask 1044484
        %v806 = vsel %vm805, %v789, %v804
        %vm807 = vcmask 1045509
        %v808 = vsel %vm807, %v792, %v806
        %vm809 = vcmask 1046534
        %v810 = vsel %vm809, %v795, %v808
        %vm811 = vcmask 1047559
        %v812 = vsel %vm811, %v798, %v810
        %vm814 = vcmask 130048
        %v815 = vsel %vm814, %v812, 0.0
        %816 = vadd.xlane.f32.xlu0 %v815
        %v817 = vpop.xlane.xlu0 %816
        %v818 = vmax.f32 %v817, 1.0
        %v819 = vrcp.pop %v818
        %v820 = vmul.f32 %v818, %v819
        %v821 = vsub.f32 1.0, %v820
        %v822 = vmul.f32 %v819, %v821
        %v823 = vadd.f32 %v819, %v822
        %vm824 = vweird.f32 %v818
        %vm825 = vweird.f32 %v819
        %vm826 = vmor %vm824, %vm825
        %v827 = vsel %vm826, %v819, %v823
        %v828 = vand.u32 2147483647, %v818
        %vm829 = vcmp.eq.f32.partialorder %v828, 8.507059e+37
        %v830 = vand.u32 %v818, 2147483648
        %v831 = vor.u32 1.1754944e-38, %v830
        %v832 = vsel %vm829, %v831, %v827
        %v833 = vmul.f32 1.0, %v832
        %v834 = vld [vmem:[%s419] sm:$0xff]
        %v835 = vld [vmem:[%s419 + $0x8] sm:$0xff]
        %v836 = vld [vmem:[%s419 + $0x10] sm:$0xff]
        %v837 = vld [vmem:[%s419 + $0x18] sm:$0xff]
        %v838 = vld [vmem:[%s419 + $0x20] sm:$0xff]
        %v839 = vld [vmem:[%s419 + $0x28] sm:$0xff]
        %v840 = vld [vmem:[%s419 + $0x30] sm:$0xff]
        %v841 = vld [vmem:[%s419 + $0x38] sm:$0xff]
        %v842 = vld [vmem:[%s419 + $0x40] sm:$0xff]
        %v843 = vld [vmem:[%s419 + $0x48] sm:$0xff]
        %v844 = vld [vmem:[%s419 + $0x50] sm:$0xff]
        %v845 = vld [vmem:[%s419 + $0x58] sm:$0xff]
        %v846 = vld [vmem:[%s419 + $0x60] sm:$0xff]
        %v847 = vld [vmem:[%s419 + $0x68] sm:$0xff]
        %v848 = vld [vmem:[%s419 + $0x70] sm:$0xff]
        %v849 = vld [vmem:[%s419 + $0x78] sm:$0xff]
        %v850 = vld [vmem:[%s5] sm:$0xff]
        %v851 = vld [vmem:[%s5 + $0x8] sm:$0xff]
        %v852 = vld [vmem:[%s5 + $0x10] sm:$0xff]
        %v853 = vld [vmem:[%s5 + $0x18] sm:$0xff]
        %v854 = vld [vmem:[%s10] sm:$0x1]
        %v855 = vperm.slane %v854, 0
        %vm856 = vcmask 261120
        %v858 = vsel %vm856, %v614, 0
        %v861 = vsel %vm856, %v617, 0
        %v864 = vsel %vm856, %v620, 0
        %v867 = vsel %vm856, %v623, 0
        %v870 = vsel %vm856, %v626, 0
        %v873 = vsel %vm856, %v629, 0
        %v876 = vsel %vm856, %v632, 0
        %v879 = vsel %vm856, %v635, 0
        %v882 = vsel %vm856, %v638, 0
        %v885 = vsel %vm856, %v641, 0
        %v888 = vsel %vm856, %v644, 0
        %v891 = vsel %vm856, %v647, 0
        %v894 = vsel %vm856, %v650, 0
        %v897 = vsel %vm856, %v653, 0
        %v900 = vsel %vm856, %v656, 0
        %v903 = vsel %vm856, %v659, 0
        %905 = vmatpush.msra.mxu0 0.0
        %906 = vmatpush.msra.mxu0 0.0
        %907 = vmatpush.msra.mxu0 0.0
        %908 = vmatpush.msra.mxu0 0.0
        %909 = vmatpush.msra.mxu0 0.0
        %910 = vmatpush.msra.mxu0 0.0
        %911 = vmatpush.msra.mxu0 0.0
        %912 = vmatpush.msra.mxu0 0.0
        %913 = vmatpush.msra.mxu0 0.0
        %914 = vmatpush.msra.mxu0 0.0
        %915 = vmatpush.msra.mxu0 0.0
        %916 = vmatpush.msra.mxu0 0.0
        %917 = vmatpush.msra.mxu0 %v853
        %918 = vmatpush.msra.mxu0 %v852
        %919 = vmatpush.msra.mxu0 %v851
        %920 = vmatpush.msra.mxu0 %v850
        %921 = vmatmul.f32.gmra.mxu0 %v858
        %v922 = vpop.f32.mrf.mxu0
        %v923 = vadd.f32 %v855, %v922
        %924 = vmatmul.f32.gmra.mxu0 %v861
        %v925 = vpop.f32.mrf.mxu0
        %v926 = vadd.f32 %v855, %v925
        %927 = vmatmul.f32.gmra.mxu0 %v864
        %v928 = vpop.f32.mrf.mxu0
        %v929 = vadd.f32 %v855, %v928
        %930 = vmatmul.f32.gmra.mxu0 %v867
        %v931 = vpop.f32.mrf.mxu0
        %v932 = vadd.f32 %v855, %v931
        %933 = vmatmul.f32.gmra.mxu0 %v870
        %v934 = vpop.f32.mrf.mxu0
        %v935 = vadd.f32 %v855, %v934
        %936 = vmatmul.f32.gmra.mxu0 %v873
        %v937 = vpop.f32.mrf.mxu0
        %v938 = vadd.f32 %v855, %v937
        %939 = vmatmul.f32.gmra.mxu0 %v876
        %v940 = vpop.f32.mrf.mxu0
        %v941 = vadd.f32 %v855, %v940
        %942 = vmatmul.f32.gmra.mxu0 %v879
        %v943 = vpop.f32.mrf.mxu0
        %v944 = vadd.f32 %v855, %v943
        %945 = vmatmul.f32.gmra.mxu0 %v882
        %v946 = vpop.f32.mrf.mxu0
        %v947 = vadd.f32 %v855, %v946
        %948 = vmatmul.f32.gmra.mxu0 %v885
        %v949 = vpop.f32.mrf.mxu0
        %v950 = vadd.f32 %v855, %v949
        %951 = vmatmul.f32.gmra.mxu0 %v888
        %v952 = vpop.f32.mrf.mxu0
        %v953 = vadd.f32 %v855, %v952
        %954 = vmatmul.f32.gmra.mxu0 %v891
        %v955 = vpop.f32.mrf.mxu0
        %v956 = vadd.f32 %v855, %v955
        %957 = vmatmul.f32.gmra.mxu0 %v894
        %v958 = vpop.f32.mrf.mxu0
        %v959 = vadd.f32 %v855, %v958
        %960 = vmatmul.f32.gmra.mxu0 %v897
        %v961 = vpop.f32.mrf.mxu0
        %v962 = vadd.f32 %v855, %v961
        %963 = vmatmul.f32.gmra.mxu0 %v900
        %v964 = vpop.f32.mrf.mxu0
        %v965 = vadd.f32 %v855, %v964
        %966 = vmatmul.f32.gmra.mxu0 %v903
        %v967 = vpop.f32.mrf.mxu0
        %v968 = vadd.f32 %v855, %v967
        %969 = vdwg.mxu0
        %v970 = vmax.f32 %v923, 0.0
        %v971 = vmax.f32 %v926, 0.0
        %v972 = vmax.f32 %v929, 0.0
        %v973 = vmax.f32 %v932, 0.0
        %v974 = vmax.f32 %v935, 0.0
        %v975 = vmax.f32 %v938, 0.0
        %v976 = vmax.f32 %v941, 0.0
        %v977 = vmax.f32 %v944, 0.0
        %v978 = vmax.f32 %v947, 0.0
        %v979 = vmax.f32 %v950, 0.0
        %v980 = vmax.f32 %v953, 0.0
        %v981 = vmax.f32 %v956, 0.0
        %v982 = vmax.f32 %v959, 0.0
        %v983 = vmax.f32 %v962, 0.0
        %v984 = vmax.f32 %v965, 0.0
        %v985 = vmax.f32 %v968, 0.0
        %986 = vmatpush.msra.mxu0 %v985
        %987 = vmatpush.msra.mxu0 %v984
        %988 = vmatpush.msra.mxu0 %v983
        %989 = vmatpush.msra.mxu0 %v982
        %990 = vmatpush.msra.mxu0 %v981
        %991 = vmatpush.msra.mxu0 %v980
        %992 = vmatpush.msra.mxu0 %v979
        %993 = vmatpush.msra.mxu0 %v978
        %994 = vmatpush.msra.mxu0 %v977
        %995 = vmatpush.msra.mxu0 %v976
        %996 = vmatpush.msra.mxu0 %v975
        %997 = vmatpush.msra.mxu0 %v974
        %998 = vmatpush.msra.mxu0 %v973
        %999 = vmatpush.msra.mxu0 %v972
        %1000 = vmatpush.msra.mxu0 %v971
        %1001 = vmatpush.msra.mxu0 %v970
        %1002 = vmatmul.f32.gmra.mxu0 %v834
        %v1003 = vpop.f32.mrf.mxu0
        %v1004 = vadd.f32 0.0, %v1003
        %1005 = vmatmul.f32.gmra.mxu0 %v835
        %v1006 = vpop.f32.mrf.mxu0
        %v1007 = vadd.f32 0.0, %v1006
        %1008 = vmatmul.f32.gmra.mxu0 %v836
        %v1009 = vpop.f32.mrf.mxu0
        %v1010 = vadd.f32 0.0, %v1009
        %1011 = vmatmul.f32.gmra.mxu0 %v837
        %v1012 = vpop.f32.mrf.mxu0
        %v1013 = vadd.f32 0.0, %v1012
        %1014 = vmatmul.f32.gmra.mxu0 %v838
        %v1015 = vpop.f32.mrf.mxu0
        %v1016 = vadd.f32 0.0, %v1015
        %1017 = vmatmul.f32.gmra.mxu0 %v839
        %v1018 = vpop.f32.mrf.mxu0
        %v1019 = vadd.f32 0.0, %v1018
        %1020 = vmatmul.f32.gmra.mxu0 %v840
        %v1021 = vpop.f32.mrf.mxu0
        %v1022 = vadd.f32 0.0, %v1021
        %1023 = vmatmul.f32.gmra.mxu0 %v841
        %v1024 = vpop.f32.mrf.mxu0
        %v1025 = vadd.f32 0.0, %v1024
        %1026 = vmatmul.f32.gmra.mxu0 %v842
        %v1027 = vpop.f32.mrf.mxu0
        %v1028 = vadd.f32 0.0, %v1027
        %1029 = vmatmul.f32.gmra.mxu0 %v843
        %v1030 = vpop.f32.mrf.mxu0
        %v1031 = vadd.f32 0.0, %v1030
        %1032 = vmatmul.f32.gmra.mxu0 %v844
        %v1033 = vpop.f32.mrf.mxu0
        %v1034 = vadd.f32 0.0, %v1033
        %1035 = vmatmul.f32.gmra.mxu0 %v845
        %v1036 = vpop.f32.mrf.mxu0
        %v1037 = vadd.f32 0.0, %v1036
        %1038 = vmatmul.f32.gmra.mxu0 %v846
        %v1039 = vpop.f32.mrf.mxu0
        %v1040 = vadd.f32 0.0, %v1039
        %1041 = vmatmul.f32.gmra.mxu0 %v847
        %v1042 = vpop.f32.mrf.mxu0
        %v1043 = vadd.f32 0.0, %v1042
        %1044 = vmatmul.f32.gmra.mxu0 %v848
        %v1045 = vpop.f32.mrf.mxu0
        %v1046 = vadd.f32 0.0, %v1045
        %1047 = vmatmul.f32.gmra.mxu0 %v849
        %v1048 = vpop.f32.mrf.mxu0
        %v1049 = vadd.f32 0.0, %v1048
        %1050 = vdwg.mxu0
        %v1051 = vadd.f32 %v614, %v1004
        %v1052 = vadd.f32 %v617, %v1007
        %v1053 = vadd.f32 %v620, %v1010
        %v1054 = vadd.f32 %v623, %v1013
        %v1055 = vadd.f32 %v626, %v1016
        %v1056 = vadd.f32 %v629, %v1019
        %v1057 = vadd.f32 %v632, %v1022
        %v1058 = vadd.f32 %v635, %v1025
        %v1059 = vadd.f32 %v638, %v1028
        %v1060 = vadd.f32 %v641, %v1031
        %v1061 = vadd.f32 %v644, %v1034
        %v1062 = vadd.f32 %v647, %v1037
        %v1063 = vadd.f32 %v650, %v1040
        %v1064 = vadd.f32 %v653, %v1043
        %v1065 = vadd.f32 %v656, %v1046
        %v1066 = vadd.f32 %v659, %v1049
        %s1067 = scalar_lea.vmem %s5, 32
        %v1068 = vld [vmem:[%s1067] sm:$0xff]
        %v1069 = vld [vmem:[%s1067 + $0x8] sm:$0xff]
        %v1070 = vld [vmem:[%s1067 + $0x10] sm:$0xff]
        %v1071 = vld [vmem:[%s1067 + $0x18] sm:$0xff]
        %v1072 = vld [vmem:[%s10 + $0x1] sm:$0x1]
        %v1073 = vperm.slane %v1072, 0
        %v1075 = vsel %vm856, %v1051, 0
        %v1078 = vsel %vm856, %v1052, 0
        %v1081 = vsel %vm856, %v1053, 0
        %v1084 = vsel %vm856, %v1054, 0
        %v1087 = vsel %vm856, %v1055, 0
        %v1090 = vsel %vm856, %v1056, 0
        %v1093 = vsel %vm856, %v1057, 0
        %v1096 = vsel %vm856, %v1058, 0
        %v1099 = vsel %vm856, %v1059, 0
        %v1102 = vsel %vm856, %v1060, 0
        %v1105 = vsel %vm856, %v1061, 0
        %v1108 = vsel %vm856, %v1062, 0
        %v1111 = vsel %vm856, %v1063, 0
        %v1114 = vsel %vm856, %v1064, 0
        %v1117 = vsel %vm856, %v1065, 0
        %v1120 = vsel %vm856, %v1066, 0
        %1122 = vmatpush.msra.mxu0 0.0
        %1123 = vmatpush.msra.mxu0 0.0
        %1124 = vmatpush.msra.mxu0 0.0
        %1125 = vmatpush.msra.mxu0 0.0
        %1126 = vmatpush.msra.mxu0 0.0
        %1127 = vmatpush.msra.mxu0 0.0
        %1128 = vmatpush.msra.mxu0 0.0
        %1129 = vmatpush.msra.mxu0 0.0
        %1130 = vmatpush.msra.mxu0 0.0
        %1131 = vmatpush.msra.mxu0 0.0
        %1132 = vmatpush.msra.mxu0 0.0
        %1133 = vmatpush.msra.mxu0 0.0
        %1134 = vmatpush.msra.mxu0 %v1071
        %1135 = vmatpush.msra.mxu0 %v1070
        %1136 = vmatpush.msra.mxu0 %v1069
        %1137 = vmatpush.msra.mxu0 %v1068
        %1138 = vmatmul.f32.gmra.mxu0 %v1075
        %v1139 = vpop.f32.mrf.mxu0
        %v1140 = vadd.f32 %v1073, %v1139
        %1141 = vmatmul.f32.gmra.mxu0 %v1078
        %v1142 = vpop.f32.mrf.mxu0
        %v1143 = vadd.f32 %v1073, %v1142
        %1144 = vmatmul.f32.gmra.mxu0 %v1081
        %v1145 = vpop.f32.mrf.mxu0
        %v1146 = vadd.f32 %v1073, %v1145
        %1147 = vmatmul.f32.gmra.mxu0 %v1084
        %v1148 = vpop.f32.mrf.mxu0
        %v1149 = vadd.f32 %v1073, %v1148
        %1150 = vmatmul.f32.gmra.mxu0 %v1087
        %v1151 = vpop.f32.mrf.mxu0
        %v1152 = vadd.f32 %v1073, %v1151
        %1153 = vmatmul.f32.gmra.mxu0 %v1090
        %v1154 = vpop.f32.mrf.mxu0
        %v1155 = vadd.f32 %v1073, %v1154
        %1156 = vmatmul.f32.gmra.mxu0 %v1093
        %v1157 = vpop.f32.mrf.mxu0
        %v1158 = vadd.f32 %v1073, %v1157
        %1159 = vmatmul.f32.gmra.mxu0 %v1096
        %v1160 = vpop.f32.mrf.mxu0
        %v1161 = vadd.f32 %v1073, %v1160
        %1162 = vmatmul.f32.gmra.mxu0 %v1099
        %v1163 = vpop.f32.mrf.mxu0
        %v1164 = vadd.f32 %v1073, %v1163
        %1165 = vmatmul.f32.gmra.mxu0 %v1102
        %v1166 = vpop.f32.mrf.mxu0
        %v1167 = vadd.f32 %v1073, %v1166
        %1168 = vmatmul.f32.gmra.mxu0 %v1105
        %v1169 = vpop.f32.mrf.mxu0
        %v1170 = vadd.f32 %v1073, %v1169
        %1171 = vmatmul.f32.gmra.mxu0 %v1108
        %v1172 = vpop.f32.mrf.mxu0
        %v1173 = vadd.f32 %v1073, %v1172
        %1174 = vmatmul.f32.gmra.mxu0 %v1111
        %v1175 = vpop.f32.mrf.mxu0
        %v1176 = vadd.f32 %v1073, %v1175
        %1177 = vmatmul.f32.gmra.mxu0 %v1114
        %v1178 = vpop.f32.mrf.mxu0
        %v1179 = vadd.f32 %v1073, %v1178
        %1180 = vmatmul.f32.gmra.mxu0 %v1117
        %v1181 = vpop.f32.mrf.mxu0
        %v1182 = vadd.f32 %v1073, %v1181
        %1183 = vmatmul.f32.gmra.mxu0 %v1120
        %v1184 = vpop.f32.mrf.mxu0
        %v1185 = vadd.f32 %v1073, %v1184
        %1186 = vdwg.mxu0
        %v1187 = vmax.f32 %v1140, 0.0
        %v1188 = vmax.f32 %v1143, 0.0
        %v1189 = vmax.f32 %v1146, 0.0
        %v1190 = vmax.f32 %v1149, 0.0
        %v1191 = vmax.f32 %v1152, 0.0
        %v1192 = vmax.f32 %v1155, 0.0
        %v1193 = vmax.f32 %v1158, 0.0
        %v1194 = vmax.f32 %v1161, 0.0
        %v1195 = vmax.f32 %v1164, 0.0
        %v1196 = vmax.f32 %v1167, 0.0
        %v1197 = vmax.f32 %v1170, 0.0
        %v1198 = vmax.f32 %v1173, 0.0
        %v1199 = vmax.f32 %v1176, 0.0
        %v1200 = vmax.f32 %v1179, 0.0
        %v1201 = vmax.f32 %v1182, 0.0
        %v1202 = vmax.f32 %v1185, 0.0
        %1203 = vmatpush.msra.mxu0 %v1202
        %1204 = vmatpush.msra.mxu0 %v1201
        %1205 = vmatpush.msra.mxu0 %v1200
        %1206 = vmatpush.msra.mxu0 %v1199
        %1207 = vmatpush.msra.mxu0 %v1198
        %1208 = vmatpush.msra.mxu0 %v1197
        %1209 = vmatpush.msra.mxu0 %v1196
        %1210 = vmatpush.msra.mxu0 %v1195
        %1211 = vmatpush.msra.mxu0 %v1194
        %1212 = vmatpush.msra.mxu0 %v1193
        %1213 = vmatpush.msra.mxu0 %v1192
        %1214 = vmatpush.msra.mxu0 %v1191
        %1215 = vmatpush.msra.mxu0 %v1190
        %1216 = vmatpush.msra.mxu0 %v1189
        %1217 = vmatpush.msra.mxu0 %v1188
        %1218 = vmatpush.msra.mxu0 %v1187
        %1219 = vmatmul.f32.gmra.mxu0 %v834
        %v1220 = vpop.f32.mrf.mxu0
        %v1221 = vadd.f32 0.0, %v1220
        %1222 = vmatmul.f32.gmra.mxu0 %v835
        %v1223 = vpop.f32.mrf.mxu0
        %v1224 = vadd.f32 0.0, %v1223
        %1225 = vmatmul.f32.gmra.mxu0 %v836
        %v1226 = vpop.f32.mrf.mxu0
        %v1227 = vadd.f32 0.0, %v1226
        %1228 = vmatmul.f32.gmra.mxu0 %v837
        %v1229 = vpop.f32.mrf.mxu0
        %v1230 = vadd.f32 0.0, %v1229
        %1231 = vmatmul.f32.gmra.mxu0 %v838
        %v1232 = vpop.f32.mrf.mxu0
        %v1233 = vadd.f32 0.0, %v1232
        %1234 = vmatmul.f32.gmra.mxu0 %v839
        %v1235 = vpop.f32.mrf.mxu0
        %v1236 = vadd.f32 0.0, %v1235
        %1237 = vmatmul.f32.gmra.mxu0 %v840
        %v1238 = vpop.f32.mrf.mxu0
        %v1239 = vadd.f32 0.0, %v1238
        %1240 = vmatmul.f32.gmra.mxu0 %v841
        %v1241 = vpop.f32.mrf.mxu0
        %v1242 = vadd.f32 0.0, %v1241
        %1243 = vmatmul.f32.gmra.mxu0 %v842
        %v1244 = vpop.f32.mrf.mxu0
        %v1245 = vadd.f32 0.0, %v1244
        %1246 = vmatmul.f32.gmra.mxu0 %v843
        %v1247 = vpop.f32.mrf.mxu0
        %v1248 = vadd.f32 0.0, %v1247
        %1249 = vmatmul.f32.gmra.mxu0 %v844
        %v1250 = vpop.f32.mrf.mxu0
        %v1251 = vadd.f32 0.0, %v1250
        %1252 = vmatmul.f32.gmra.mxu0 %v845
        %v1253 = vpop.f32.mrf.mxu0
        %v1254 = vadd.f32 0.0, %v1253
        %1255 = vmatmul.f32.gmra.mxu0 %v846
        %v1256 = vpop.f32.mrf.mxu0
        %v1257 = vadd.f32 0.0, %v1256
        %1258 = vmatmul.f32.gmra.mxu0 %v847
        %v1259 = vpop.f32.mrf.mxu0
        %v1260 = vadd.f32 0.0, %v1259
        %1261 = vmatmul.f32.gmra.mxu0 %v848
        %v1262 = vpop.f32.mrf.mxu0
        %v1263 = vadd.f32 0.0, %v1262
        %1264 = vmatmul.f32.gmra.mxu0 %v849
        %v1265 = vpop.f32.mrf.mxu0
        %v1266 = vadd.f32 0.0, %v1265
        %1267 = vdwg.mxu0
        %v1268 = vadd.f32 %v1051, %v1221
        %v1269 = vadd.f32 %v1052, %v1224
        %v1270 = vadd.f32 %v1053, %v1227
        %v1271 = vadd.f32 %v1054, %v1230
        %v1272 = vadd.f32 %v1055, %v1233
        %v1273 = vadd.f32 %v1056, %v1236
        %v1274 = vadd.f32 %v1057, %v1239
        %v1275 = vadd.f32 %v1058, %v1242
        %v1276 = vadd.f32 %v1059, %v1245
        %v1277 = vadd.f32 %v1060, %v1248
        %v1278 = vadd.f32 %v1061, %v1251
        %v1279 = vadd.f32 %v1062, %v1254
        %v1280 = vadd.f32 %v1063, %v1257
        %v1281 = vadd.f32 %v1064, %v1260
        %v1282 = vadd.f32 %v1065, %v1263
        %v1283 = vadd.f32 %v1066, %v1266
        %s1284 = scalar_lea.vmem %s5, 64
        %v1285 = vld [vmem:[%s1284] sm:$0xff]
        %v1286 = vld [vmem:[%s1284 + $0x8] sm:$0xff]
        %v1287 = vld [vmem:[%s1284 + $0x10] sm:$0xff]
        %v1288 = vld [vmem:[%s1284 + $0x18] sm:$0xff]
        %v1289 = vld [vmem:[%s10 + $0x2] sm:$0x1]
        %v1290 = vperm.slane %v1289, 0
        %v1292 = vsel %vm856, %v1268, 0
        %v1295 = vsel %vm856, %v1269, 0
        %v1298 = vsel %vm856, %v1270, 0
        %v1301 = vsel %vm856, %v1271, 0
        %v1304 = vsel %vm856, %v1272, 0
        %v1307 = vsel %vm856, %v1273, 0
        %v1310 = vsel %vm856, %v1274, 0
        %v1313 = vsel %vm856, %v1275, 0
        %v1316 = vsel %vm856, %v1276, 0
        %v1319 = vsel %vm856, %v1277, 0
        %v1322 = vsel %vm856, %v1278, 0
        %v1325 = vsel %vm856, %v1279, 0
        %v1328 = vsel %vm856, %v1280, 0
        %v1331 = vsel %vm856, %v1281, 0
        %v1334 = vsel %vm856, %v1282, 0
        %v1337 = vsel %vm856, %v1283, 0
        %1339 = vmatpush.msra.mxu0 0.0
        %1340 = vmatpush.msra.mxu0 0.0
        %1341 = vmatpush.msra.mxu0 0.0
        %1342 = vmatpush.msra.mxu0 0.0
        %1343 = vmatpush.msra.mxu0 0.0
        %1344 = vmatpush.msra.mxu0 0.0
        %1345 = vmatpush.msra.mxu0 0.0
        %1346 = vmatpush.msra.mxu0 0.0
        %1347 = vmatpush.msra.mxu0 0.0
        %1348 = vmatpush.msra.mxu0 0.0
        %1349 = vmatpush.msra.mxu0 0.0
        %1350 = vmatpush.msra.mxu0 0.0
        %1351 = vmatpush.msra.mxu0 %v1288
        %1352 = vmatpush.msra.mxu0 %v1287
        %1353 = vmatpush.msra.mxu0 %v1286
        %1354 = vmatpush.msra.mxu0 %v1285
        %1355 = vmatmul.f32.gmra.mxu0 %v1292
        %v1356 = vpop.f32.mrf.mxu0
        %v1357 = vadd.f32 %v1290, %v1356
        %1358 = vmatmul.f32.gmra.mxu0 %v1295
        %v1359 = vpop.f32.mrf.mxu0
        %v1360 = vadd.f32 %v1290, %v1359
        %1361 = vmatmul.f32.gmra.mxu0 %v1298
        %v1362 = vpop.f32.mrf.mxu0
        %v1363 = vadd.f32 %v1290, %v1362
        %1364 = vmatmul.f32.gmra.mxu0 %v1301
        %v1365 = vpop.f32.mrf.mxu0
        %v1366 = vadd.f32 %v1290, %v1365
        %1367 = vmatmul.f32.gmra.mxu0 %v1304
        %v1368 = vpop.f32.mrf.mxu0
        %v1369 = vadd.f32 %v1290, %v1368
        %1370 = vmatmul.f32.gmra.mxu0 %v1307
        %v1371 = vpop.f32.mrf.mxu0
        %v1372 = vadd.f32 %v1290, %v1371
        %1373 = vmatmul.f32.gmra.mxu0 %v1310
        %v1374 = vpop.f32.mrf.mxu0
        %v1375 = vadd.f32 %v1290, %v1374
        %1376 = vmatmul.f32.gmra.mxu0 %v1313
        %v1377 = vpop.f32.mrf.mxu0
        %v1378 = vadd.f32 %v1290, %v1377
        %1379 = vmatmul.f32.gmra.mxu0 %v1316
        %v1380 = vpop.f32.mrf.mxu0
        %v1381 = vadd.f32 %v1290, %v1380
        %1382 = vmatmul.f32.gmra.mxu0 %v1319
        %v1383 = vpop.f32.mrf.mxu0
        %v1384 = vadd.f32 %v1290, %v1383
        %1385 = vmatmul.f32.gmra.mxu0 %v1322
        %v1386 = vpop.f32.mrf.mxu0
        %v1387 = vadd.f32 %v1290, %v1386
        %1388 = vmatmul.f32.gmra.mxu0 %v1325
        %v1389 = vpop.f32.mrf.mxu0
        %v1390 = vadd.f32 %v1290, %v1389
        %1391 = vmatmul.f32.gmra.mxu0 %v1328
        %v1392 = vpop.f32.mrf.mxu0
        %v1393 = vadd.f32 %v1290, %v1392
        %1394 = vmatmul.f32.gmra.mxu0 %v1331
        %v1395 = vpop.f32.mrf.mxu0
        %v1396 = vadd.f32 %v1290, %v1395
        %1397 = vmatmul.f32.gmra.mxu0 %v1334
        %v1398 = vpop.f32.mrf.mxu0
        %v1399 = vadd.f32 %v1290, %v1398
        %1400 = vmatmul.f32.gmra.mxu0 %v1337
        %v1401 = vpop.f32.mrf.mxu0
        %v1402 = vadd.f32 %v1290, %v1401
        %1403 = vdwg.mxu0
        %v1404 = vmax.f32 %v1357, 0.0
        %v1405 = vmax.f32 %v1360, 0.0
        %v1406 = vmax.f32 %v1363, 0.0
        %v1407 = vmax.f32 %v1366, 0.0
        %v1408 = vmax.f32 %v1369, 0.0
        %v1409 = vmax.f32 %v1372, 0.0
        %v1410 = vmax.f32 %v1375, 0.0
        %v1411 = vmax.f32 %v1378, 0.0
        %v1412 = vmax.f32 %v1381, 0.0
        %v1413 = vmax.f32 %v1384, 0.0
        %v1414 = vmax.f32 %v1387, 0.0
        %v1415 = vmax.f32 %v1390, 0.0
        %v1416 = vmax.f32 %v1393, 0.0
        %v1417 = vmax.f32 %v1396, 0.0
        %v1418 = vmax.f32 %v1399, 0.0
        %v1419 = vmax.f32 %v1402, 0.0
        %1420 = vmatpush.msra.mxu0 %v1419
        %1421 = vmatpush.msra.mxu0 %v1418
        %1422 = vmatpush.msra.mxu0 %v1417
        %1423 = vmatpush.msra.mxu0 %v1416
        %1424 = vmatpush.msra.mxu0 %v1415
        %1425 = vmatpush.msra.mxu0 %v1414
        %1426 = vmatpush.msra.mxu0 %v1413
        %1427 = vmatpush.msra.mxu0 %v1412
        %1428 = vmatpush.msra.mxu0 %v1411
        %1429 = vmatpush.msra.mxu0 %v1410
        %1430 = vmatpush.msra.mxu0 %v1409
        %1431 = vmatpush.msra.mxu0 %v1408
        %1432 = vmatpush.msra.mxu0 %v1407
        %1433 = vmatpush.msra.mxu0 %v1406
        %1434 = vmatpush.msra.mxu0 %v1405
        %1435 = vmatpush.msra.mxu0 %v1404
        %1436 = vmatmul.f32.gmra.mxu0 %v834
        %v1437 = vpop.f32.mrf.mxu0
        %v1438 = vadd.f32 0.0, %v1437
        %1439 = vmatmul.f32.gmra.mxu0 %v835
        %v1440 = vpop.f32.mrf.mxu0
        %v1441 = vadd.f32 0.0, %v1440
        %1442 = vmatmul.f32.gmra.mxu0 %v836
        %v1443 = vpop.f32.mrf.mxu0
        %v1444 = vadd.f32 0.0, %v1443
        %1445 = vmatmul.f32.gmra.mxu0 %v837
        %v1446 = vpop.f32.mrf.mxu0
        %v1447 = vadd.f32 0.0, %v1446
        %1448 = vmatmul.f32.gmra.mxu0 %v838
        %v1449 = vpop.f32.mrf.mxu0
        %v1450 = vadd.f32 0.0, %v1449
        %1451 = vmatmul.f32.gmra.mxu0 %v839
        %v1452 = vpop.f32.mrf.mxu0
        %v1453 = vadd.f32 0.0, %v1452
        %1454 = vmatmul.f32.gmra.mxu0 %v840
        %v1455 = vpop.f32.mrf.mxu0
        %v1456 = vadd.f32 0.0, %v1455
        %1457 = vmatmul.f32.gmra.mxu0 %v841
        %v1458 = vpop.f32.mrf.mxu0
        %v1459 = vadd.f32 0.0, %v1458
        %1460 = vmatmul.f32.gmra.mxu0 %v842
        %v1461 = vpop.f32.mrf.mxu0
        %v1462 = vadd.f32 0.0, %v1461
        %1463 = vmatmul.f32.gmra.mxu0 %v843
        %v1464 = vpop.f32.mrf.mxu0
        %v1465 = vadd.f32 0.0, %v1464
        %1466 = vmatmul.f32.gmra.mxu0 %v844
        %v1467 = vpop.f32.mrf.mxu0
        %v1468 = vadd.f32 0.0, %v1467
        %1469 = vmatmul.f32.gmra.mxu0 %v845
        %v1470 = vpop.f32.mrf.mxu0
        %v1471 = vadd.f32 0.0, %v1470
        %1472 = vmatmul.f32.gmra.mxu0 %v846
        %v1473 = vpop.f32.mrf.mxu0
        %v1474 = vadd.f32 0.0, %v1473
        %1475 = vmatmul.f32.gmra.mxu0 %v847
        %v1476 = vpop.f32.mrf.mxu0
        %v1477 = vadd.f32 0.0, %v1476
        %1478 = vmatmul.f32.gmra.mxu0 %v848
        %v1479 = vpop.f32.mrf.mxu0
        %v1480 = vadd.f32 0.0, %v1479
        %1481 = vmatmul.f32.gmra.mxu0 %v849
        %v1482 = vpop.f32.mrf.mxu0
        %v1483 = vadd.f32 0.0, %v1482
        %1484 = vdwg.mxu0
        %v1485 = vadd.f32 %v1268, %v1438
        %v1486 = vadd.f32 %v1269, %v1441
        %v1487 = vadd.f32 %v1270, %v1444
        %v1488 = vadd.f32 %v1271, %v1447
        %v1489 = vadd.f32 %v1272, %v1450
        %v1490 = vadd.f32 %v1273, %v1453
        %v1491 = vadd.f32 %v1274, %v1456
        %v1492 = vadd.f32 %v1275, %v1459
        %v1493 = vadd.f32 %v1276, %v1462
        %v1494 = vadd.f32 %v1277, %v1465
        %v1495 = vadd.f32 %v1278, %v1468
        %v1496 = vadd.f32 %v1279, %v1471
        %v1497 = vadd.f32 %v1280, %v1474
        %v1498 = vadd.f32 %v1281, %v1477
        %v1499 = vadd.f32 %v1282, %v1480
        %v1500 = vadd.f32 %v1283, %v1483
        %v1501 = vsel %vm856, %v1485, 0.0
        %v1502 = vsel %vm856, %v1486, 0.0
        %v1503 = vadd.f32 %v1501, %v1502
        %v1504 = vrot.slane %v1503, 4
        %v1505 = vadd.f32 %v1503, %v1504
        %v1506 = vrot.slane %v1505, 2
        %v1507 = vadd.f32 %v1505, %v1506
        %v1508 = vrot.slane %v1507, 1
        %v1509 = vadd.f32 %v1507, %v1508
        %v1510 = vsel %vm856, %v1487, 0.0
        %v1511 = vsel %vm856, %v1488, 0.0
        %v1512 = vadd.f32 %v1510, %v1511
        %v1513 = vrot.slane %v1512, 4
        %v1514 = vadd.f32 %v1512, %v1513
        %v1515 = vrot.slane %v1514, 2
        %v1516 = vadd.f32 %v1514, %v1515
        %v1517 = vrot.slane %v1516, 1
        %v1518 = vadd.f32 %v1516, %v1517
        %v1519 = vsel %vm856, %v1489, 0.0
        %v1520 = vsel %vm856, %v1490, 0.0
        %v1521 = vadd.f32 %v1519, %v1520
        %v1522 = vrot.slane %v1521, 4
        %v1523 = vadd.f32 %v1521, %v1522
        %v1524 = vrot.slane %v1523, 2
        %v1525 = vadd.f32 %v1523, %v1524
        %v1526 = vrot.slane %v1525, 1
        %v1527 = vadd.f32 %v1525, %v1526
        %v1528 = vsel %vm856, %v1491, 0.0
        %v1529 = vsel %vm856, %v1492, 0.0
        %v1530 = vadd.f32 %v1528, %v1529
        %v1531 = vrot.slane %v1530, 4
        %v1532 = vadd.f32 %v1530, %v1531
        %v1533 = vrot.slane %v1532, 2
        %v1534 = vadd.f32 %v1532, %v1533
        %v1535 = vrot.slane %v1534, 1
        %v1536 = vadd.f32 %v1534, %v1535
        %v1537 = vsel %vm856, %v1493, 0.0
        %v1538 = vsel %vm856, %v1494, 0.0
        %v1539 = vadd.f32 %v1537, %v1538
        %v1540 = vrot.slane %v1539, 4
        %v1541 = vadd.f32 %v1539, %v1540
        %v1542 = vrot.slane %v1541, 2
        %v1543 = vadd.f32 %v1541, %v1542
        %v1544 = vrot.slane %v1543, 1
        %v1545 = vadd.f32 %v1543, %v1544
        %v1546 = vsel %vm856, %v1495, 0.0
        %v1547 = vsel %vm856, %v1496, 0.0
        %v1548 = vadd.f32 %v1546, %v1547
        %v1549 = vrot.slane %v1548, 4
        %v1550 = vadd.f32 %v1548, %v1549
        %v1551 = vrot.slane %v1550, 2
        %v1552 = vadd.f32 %v1550, %v1551
        %v1553 = vrot.slane %v1552, 1
        %v1554 = vadd.f32 %v1552, %v1553
        %v1555 = vsel %vm856, %v1497, 0.0
        %v1556 = vsel %vm856, %v1498, 0.0
        %v1557 = vadd.f32 %v1555, %v1556
        %v1558 = vrot.slane %v1557, 4
        %v1559 = vadd.f32 %v1557, %v1558
        %v1560 = vrot.slane %v1559, 2
        %v1561 = vadd.f32 %v1559, %v1560
        %v1562 = vrot.slane %v1561, 1
        %v1563 = vadd.f32 %v1561, %v1562
        %v1564 = vsel %vm856, %v1499, 0.0
        %v1565 = vsel %vm856, %v1500, 0.0
        %v1566 = vadd.f32 %v1564, %v1565
        %v1567 = vrot.slane %v1566, 4
        %v1568 = vadd.f32 %v1566, %v1567
        %v1569 = vrot.slane %v1568, 2
        %v1570 = vadd.f32 %v1568, %v1569
        %v1571 = vrot.slane %v1570, 1
        %v1572 = vadd.f32 %v1570, %v1571
        %v1574 = vrot.slane %v833, 1
        %v1575 = vrot.slane %v833, 2
        %v1576 = vrot.slane %v833, 3
        %v1577 = vrot.slane %v833, 4
        %v1578 = vrot.slane %v833, 5
        %v1579 = vrot.slane %v833, 6
        %v1580 = vrot.slane %v833, 7
        %v1589 = vmul.f32 %v1509, %v833
        %v1590 = vmul.f32 %v1518, %v1574
        %v1591 = vmul.f32 %v1527, %v1575
        %v1592 = vmul.f32 %v1536, %v1576
        %v1593 = vmul.f32 %v1545, %v1577
        %v1594 = vmul.f32 %v1554, %v1578
        %v1595 = vmul.f32 %v1563, %v1579
        %v1596 = vmul.f32 %v1572, %v1580
        %v1597 = vld [vmem:[%s424] sm:$0xff]
        %v1598 = vld [vmem:[%s424 + $0x8] sm:$0xff]
        %v1599 = vld [vmem:[%s424 + $0x10] sm:$0xff]
        %v1600 = vld [vmem:[%s424 + $0x18] sm:$0xff]
        %v1601 = vld [vmem:[%s424 + $0x20] sm:$0xff]
        %v1602 = vld [vmem:[%s424 + $0x28] sm:$0xff]
        %v1603 = vld [vmem:[%s424 + $0x30] sm:$0xff]
        %v1604 = vld [vmem:[%s424 + $0x38] sm:$0xff]
        %v1605 = vld [vmem:[%s424 + $0x40] sm:$0xff]
        %v1606 = vld [vmem:[%s424 + $0x48] sm:$0xff]
        %v1607 = vld [vmem:[%s424 + $0x50] sm:$0xff]
        %v1608 = vld [vmem:[%s424 + $0x58] sm:$0xff]
        %v1609 = vld [vmem:[%s424 + $0x60] sm:$0xff]
        %v1610 = vld [vmem:[%s424 + $0x68] sm:$0xff]
        %v1611 = vld [vmem:[%s424 + $0x70] sm:$0xff]
        %v1612 = vld [vmem:[%s424 + $0x78] sm:$0xff]
        %1613 = vset.pattern.permute.xlu0 0
        %1614 = vperm.xlu0 %1613, %v1597
        %v1615 = vpop.permute.xlu0 %1614
        %1616 = vset.pattern.permute.xlu0 0
        %1617 = vperm.xlu0 %1616, %v1598
        %v1618 = vpop.permute.xlu0 %1617
        %1619 = vset.pattern.permute.xlu0 0
        %1620 = vperm.xlu0 %1619, %v1599
        %v1621 = vpop.permute.xlu0 %1620
        %1622 = vset.pattern.permute.xlu0 0
        %1623 = vperm.xlu0 %1622, %v1600
        %v1624 = vpop.permute.xlu0 %1623
        %1625 = vset.pattern.permute.xlu0 0
        %1626 = vperm.xlu0 %1625, %v1601
        %v1627 = vpop.permute.xlu0 %1626
        %1628 = vset.pattern.permute.xlu0 0
        %1629 = vperm.xlu0 %1628, %v1602
        %v1630 = vpop.permute.xlu0 %1629
        %1631 = vset.pattern.permute.xlu0 0
        %1632 = vperm.xlu0 %1631, %v1603
        %v1633 = vpop.permute.xlu0 %1632
        %1634 = vset.pattern.permute.xlu0 0
        %1635 = vperm.xlu0 %1634, %v1604
        %v1636 = vpop.permute.xlu0 %1635
        %1637 = vset.pattern.permute.xlu0 0
        %1638 = vperm.xlu0 %1637, %v1605
        %v1639 = vpop.permute.xlu0 %1638
        %1640 = vset.pattern.permute.xlu0 0
        %1641 = vperm.xlu0 %1640, %v1606
        %v1642 = vpop.permute.xlu0 %1641
        %1643 = vset.pattern.permute.xlu0 0
        %1644 = vperm.xlu0 %1643, %v1607
        %v1645 = vpop.permute.xlu0 %1644
        %1646 = vset.pattern.permute.xlu0 0
        %1647 = vperm.xlu0 %1646, %v1608
        %v1648 = vpop.permute.xlu0 %1647
        %1649 = vset.pattern.permute.xlu0 0
        %1650 = vperm.xlu0 %1649, %v1609
        %v1651 = vpop.permute.xlu0 %1650
        %1652 = vset.pattern.permute.xlu0 0
        %1653 = vperm.xlu0 %1652, %v1610
        %v1654 = vpop.permute.xlu0 %1653
        %1655 = vset.pattern.permute.xlu0 0
        %1656 = vperm.xlu0 %1655, %v1611
        %v1657 = vpop.permute.xlu0 %1656
        %1658 = vset.pattern.permute.xlu0 0
        %1659 = vperm.xlu0 %1658, %v1612
        %v1660 = vpop.permute.xlu0 %1659
        %vm1661 = vcmp.eq.s32.totalorder %v1615, %v442
        %vm1662 = vcmp.eq.s32.totalorder %v1618, %v442
        %vm1663 = vcmp.eq.s32.totalorder %v1621, %v442
        %vm1664 = vcmp.eq.s32.totalorder %v1624, %v442
        %vm1665 = vcmp.eq.s32.totalorder %v1627, %v442
        %vm1666 = vcmp.eq.s32.totalorder %v1630, %v442
        %vm1667 = vcmp.eq.s32.totalorder %v1633, %v442
        %vm1668 = vcmp.eq.s32.totalorder %v1636, %v442
        %vm1669 = vcmp.eq.s32.totalorder %v1639, %v442
        %vm1670 = vcmp.eq.s32.totalorder %v1642, %v442
        %vm1671 = vcmp.eq.s32.totalorder %v1645, %v442
        %vm1672 = vcmp.eq.s32.totalorder %v1648, %v442
        %vm1673 = vcmp.eq.s32.totalorder %v1651, %v442
        %vm1674 = vcmp.eq.s32.totalorder %v1654, %v442
        %vm1675 = vcmp.eq.s32.totalorder %v1657, %v442
        %vm1676 = vcmp.eq.s32.totalorder %v1660, %v442
        %v1677 = vsel %vm1661, 1, 0
        %v1678 = vsel %vm1662, 1, 0
        %v1679 = vsel %vm1663, 1, 0
        %v1680 = vsel %vm1664, 1, 0
        %v1681 = vsel %vm1665, 1, 0
        %v1682 = vsel %vm1666, 1, 0
        %v1683 = vsel %vm1667, 1, 0
        %v1684 = vsel %vm1668, 1, 0
        %v1685 = vsel %vm1669, 1, 0
        %v1686 = vsel %vm1670, 1, 0
        %v1687 = vsel %vm1671, 1, 0
        %v1688 = vsel %vm1672, 1, 0
        %v1689 = vsel %vm1673, 1, 0
        %v1690 = vsel %vm1674, 1, 0
        %v1691 = vsel %vm1675, 1, 0
        %v1692 = vsel %vm1676, 1, 0
        %v1693 = vcvt.s32.f32 %v1677
        %v1694 = vcvt.s32.f32 %v1678
        %v1695 = vcvt.s32.f32 %v1679
        %v1696 = vcvt.s32.f32 %v1680
        %v1697 = vcvt.s32.f32 %v1681
        %v1698 = vcvt.s32.f32 %v1682
        %v1699 = vcvt.s32.f32 %v1683
        %v1700 = vcvt.s32.f32 %v1684
        %v1701 = vcvt.s32.f32 %v1685
        %v1702 = vcvt.s32.f32 %v1686
        %v1703 = vcvt.s32.f32 %v1687
        %v1704 = vcvt.s32.f32 %v1688
        %v1705 = vcvt.s32.f32 %v1689
        %v1706 = vcvt.s32.f32 %v1690
        %v1707 = vcvt.s32.f32 %v1691
        %v1708 = vcvt.s32.f32 %v1692
        %v1709 = vld [vmem:[%s4] sm:$0xff]
        %v1710 = vld [vmem:[%s4 + $0x8] sm:$0xff]
        %v1711 = vld [vmem:[%s4 + $0x10] sm:$0xff]
        %v1712 = vld [vmem:[%s4 + $0x18] sm:$0xff]
        %v1713 = vld [vmem:[%s4 + $0x20] sm:$0xff]
        %v1714 = vld [vmem:[%s4 + $0x28] sm:$0xff]
        %v1715 = vld [vmem:[%s4 + $0x30] sm:$0xff]
        %v1716 = vld [vmem:[%s4 + $0x38] sm:$0xff]
        %v1718 = vsel %vm547, %v1693, 0
        %v1721 = vsel %vm547, %v1694, 0
        %v1724 = vsel %vm547, %v1695, 0
        %v1727 = vsel %vm547, %v1696, 0
        %v1730 = vsel %vm547, %v1697, 0
        %v1733 = vsel %vm547, %v1698, 0
        %v1736 = vsel %vm547, %v1699, 0
        %v1739 = vsel %vm547, %v1700, 0
        %v1742 = vsel %vm547, %v1701, 0
        %v1745 = vsel %vm547, %v1702, 0
        %v1748 = vsel %vm547, %v1703, 0
        %v1751 = vsel %vm547, %v1704, 0
        %v1754 = vsel %vm547, %v1705, 0
        %v1757 = vsel %vm547, %v1706, 0
        %v1760 = vsel %vm547, %v1707, 0
        %v1763 = vsel %vm547, %v1708, 0
        %1765 = vmatpush.msra.mxu0 0.0
        %1766 = vmatpush.msra.mxu0 0.0
        %1767 = vmatpush.msra.mxu0 0.0
        %1768 = vmatpush.msra.mxu0 0.0
        %1769 = vmatpush.msra.mxu0 0.0
        %1770 = vmatpush.msra.mxu0 0.0
        %1771 = vmatpush.msra.mxu0 0.0
        %1772 = vmatpush.msra.mxu0 0.0
        %1773 = vmatpush.msra.mxu0 %v1716
        %1774 = vmatpush.msra.mxu0 %v1715
        %1775 = vmatpush.msra.mxu0 %v1714
        %1776 = vmatpush.msra.mxu0 %v1713
        %1777 = vmatpush.msra.mxu0 %v1712
        %1778 = vmatpush.msra.mxu0 %v1711
        %1779 = vmatpush.msra.mxu0 %v1710
        %1780 = vmatpush.msra.mxu0 %v1709
        %1781 = vmatmul.f32.gmra.mxu0 %v1718
        %v1782 = vpop.f32.mrf.mxu0
        %v1783 = vadd.f32 0.0, %v1782
        %1784 = vmatmul.f32.gmra.mxu0 %v1721
        %v1785 = vpop.f32.mrf.mxu0
        %v1786 = vadd.f32 0.0, %v1785
        %1787 = vmatmul.f32.gmra.mxu0 %v1724
        %v1788 = vpop.f32.mrf.mxu0
        %v1789 = vadd.f32 0.0, %v1788
        %1790 = vmatmul.f32.gmra.mxu0 %v1727
        %v1791 = vpop.f32.mrf.mxu0
        %v1792 = vadd.f32 0.0, %v1791
        %1793 = vmatmul.f32.gmra.mxu0 %v1730
        %v1794 = vpop.f32.mrf.mxu0
        %v1795 = vadd.f32 0.0, %v1794
        %1796 = vmatmul.f32.gmra.mxu0 %v1733
        %v1797 = vpop.f32.mrf.mxu0
        %v1798 = vadd.f32 0.0, %v1797
        %1799 = vmatmul.f32.gmra.mxu0 %v1736
        %v1800 = vpop.f32.mrf.mxu0
        %v1801 = vadd.f32 0.0, %v1800
        %1802 = vmatmul.f32.gmra.mxu0 %v1739
        %v1803 = vpop.f32.mrf.mxu0
        %v1804 = vadd.f32 0.0, %v1803
        %1805 = vmatmul.f32.gmra.mxu0 %v1742
        %v1806 = vpop.f32.mrf.mxu0
        %v1807 = vadd.f32 0.0, %v1806
        %1808 = vmatmul.f32.gmra.mxu0 %v1745
        %v1809 = vpop.f32.mrf.mxu0
        %v1810 = vadd.f32 0.0, %v1809
        %1811 = vmatmul.f32.gmra.mxu0 %v1748
        %v1812 = vpop.f32.mrf.mxu0
        %v1813 = vadd.f32 0.0, %v1812
        %1814 = vmatmul.f32.gmra.mxu0 %v1751
        %v1815 = vpop.f32.mrf.mxu0
        %v1816 = vadd.f32 0.0, %v1815
        %1817 = vmatmul.f32.gmra.mxu0 %v1754
        %v1818 = vpop.f32.mrf.mxu0
        %v1819 = vadd.f32 0.0, %v1818
        %1820 = vmatmul.f32.gmra.mxu0 %v1757
        %v1821 = vpop.f32.mrf.mxu0
        %v1822 = vadd.f32 0.0, %v1821
        %1823 = vmatmul.f32.gmra.mxu0 %v1760
        %v1824 = vpop.f32.mrf.mxu0
        %v1825 = vadd.f32 0.0, %v1824
        %1826 = vmatmul.f32.gmra.mxu0 %v1763
        %v1827 = vpop.f32.mrf.mxu0
        %v1828 = vadd.f32 0.0, %v1827
        %1829 = vdwg.mxu0
        %vm1830 = vcmp.ge.s32.totalorder %v1597, 0
        %vm1831 = vcmp.ge.s32.totalorder %v1598, 0
        %vm1832 = vcmp.ge.s32.totalorder %v1599, 0
        %vm1833 = vcmp.ge.s32.totalorder %v1600, 0
        %vm1834 = vcmp.ge.s32.totalorder %v1601, 0
        %vm1835 = vcmp.ge.s32.totalorder %v1602, 0
        %vm1836 = vcmp.ge.s32.totalorder %v1603, 0
        %vm1837 = vcmp.ge.s32.totalorder %v1604, 0
        %vm1838 = vcmp.ge.s32.totalorder %v1605, 0
        %vm1839 = vcmp.ge.s32.totalorder %v1606, 0
        %vm1840 = vcmp.ge.s32.totalorder %v1607, 0
        %vm1841 = vcmp.ge.s32.totalorder %v1608, 0
        %vm1842 = vcmp.ge.s32.totalorder %v1609, 0
        %vm1843 = vcmp.ge.s32.totalorder %v1610, 0
        %vm1844 = vcmp.ge.s32.totalorder %v1611, 0
        %vm1845 = vcmp.ge.s32.totalorder %v1612, 0
        %v1846 = vsel %vm1830, 1, 0
        %v1847 = vsel %vm1831, 1, 0
        %v1848 = vsel %vm1832, 1, 0
        %v1849 = vsel %vm1833, 1, 0
        %v1850 = vsel %vm1834, 1, 0
        %v1851 = vsel %vm1835, 1, 0
        %v1852 = vsel %vm1836, 1, 0
        %v1853 = vsel %vm1837, 1, 0
        %v1854 = vsel %vm1838, 1, 0
        %v1855 = vsel %vm1839, 1, 0
        %v1856 = vsel %vm1840, 1, 0
        %v1857 = vsel %vm1841, 1, 0
        %v1858 = vsel %vm1842, 1, 0
        %v1859 = vsel %vm1843, 1, 0
        %v1860 = vsel %vm1844, 1, 0
        %v1861 = vsel %vm1845, 1, 0
        %v1862 = vcvt.s32.f32 %v1846
        %v1863 = vcvt.s32.f32 %v1847
        %v1864 = vcvt.s32.f32 %v1848
        %v1865 = vcvt.s32.f32 %v1849
        %v1866 = vcvt.s32.f32 %v1850
        %v1867 = vcvt.s32.f32 %v1851
        %v1868 = vcvt.s32.f32 %v1852
        %v1869 = vcvt.s32.f32 %v1853
        %v1870 = vcvt.s32.f32 %v1854
        %v1871 = vcvt.s32.f32 %v1855
        %v1872 = vcvt.s32.f32 %v1856
        %v1873 = vcvt.s32.f32 %v1857
        %v1874 = vcvt.s32.f32 %v1858
        %v1875 = vcvt.s32.f32 %v1859
        %v1876 = vcvt.s32.f32 %v1860
        %v1877 = vcvt.s32.f32 %v1861
        %1894 = vset.pattern.permute.xlu0 0
        %1895 = vperm.xlu0 %1894, %v1862
        %v1896 = vpop.permute.xlu0 %1895
        %1897 = vset.pattern.permute.xlu0 0
        %1898 = vperm.xlu0 %1897, %v1863
        %v1899 = vpop.permute.xlu0 %1898
        %1900 = vset.pattern.permute.xlu0 0
        %1901 = vperm.xlu0 %1900, %v1864
        %v1902 = vpop.permute.xlu0 %1901
        %1903 = vset.pattern.permute.xlu0 0
        %1904 = vperm.xlu0 %1903, %v1865
        %v1905 = vpop.permute.xlu0 %1904
        %1906 = vset.pattern.permute.xlu0 0
        %1907 = vperm.xlu0 %1906, %v1866
        %v1908 = vpop.permute.xlu0 %1907
        %1909 = vset.pattern.permute.xlu0 0
        %1910 = vperm.xlu0 %1909, %v1867
        %v1911 = vpop.permute.xlu0 %1910
        %1912 = vset.pattern.permute.xlu0 0
        %1913 = vperm.xlu0 %1912, %v1868
        %v1914 = vpop.permute.xlu0 %1913
        %1915 = vset.pattern.permute.xlu0 0
        %1916 = vperm.xlu0 %1915, %v1869
        %v1917 = vpop.permute.xlu0 %1916
        %1918 = vset.pattern.permute.xlu0 0
        %1919 = vperm.xlu0 %1918, %v1870
        %v1920 = vpop.permute.xlu0 %1919
        %1921 = vset.pattern.permute.xlu0 0
        %1922 = vperm.xlu0 %1921, %v1871
        %v1923 = vpop.permute.xlu0 %1922
        %1924 = vset.pattern.permute.xlu0 0
        %1925 = vperm.xlu0 %1924, %v1872
        %v1926 = vpop.permute.xlu0 %1925
        %1927 = vset.pattern.permute.xlu0 0
        %1928 = vperm.xlu0 %1927, %v1873
        %v1929 = vpop.permute.xlu0 %1928
        %1930 = vset.pattern.permute.xlu0 0
        %1931 = vperm.xlu0 %1930, %v1874
        %v1932 = vpop.permute.xlu0 %1931
        %1933 = vset.pattern.permute.xlu0 0
        %1934 = vperm.xlu0 %1933, %v1875
        %v1935 = vpop.permute.xlu0 %1934
        %1936 = vset.pattern.permute.xlu0 0
        %1937 = vperm.xlu0 %1936, %v1876
        %v1938 = vpop.permute.xlu0 %1937
        %1939 = vset.pattern.permute.xlu0 0
        %1940 = vperm.xlu0 %1939, %v1877
        %v1941 = vpop.permute.xlu0 %1940
        %v1942 = vperm.slane %v1896, %v442
        %v1943 = vperm.slane %v1899, %v774
        %v1944 = vsel %vm776, %v1943, %v1942
        %v1945 = vperm.slane %v1902, %v442
        %v1946 = vperm.slane %v1905, %v774
        %v1947 = vsel %vm776, %v1946, %v1945
        %v1948 = vperm.slane %v1908, %v442
        %v1949 = vperm.slane %v1911, %v774
        %v1950 = vsel %vm776, %v1949, %v1948
        %v1951 = vperm.slane %v1914, %v442
        %v1952 = vperm.slane %v1917, %v774
        %v1953 = vsel %vm776, %v1952, %v1951
        %v1954 = vperm.slane %v1920, %v442
        %v1955 = vperm.slane %v1923, %v774
        %v1956 = vsel %vm776, %v1955, %v1954
        %v1957 = vperm.slane %v1926, %v442
        %v1958 = vperm.slane %v1929, %v774
        %v1959 = vsel %vm776, %v1958, %v1957
        %v1960 = vperm.slane %v1932, %v442
        %v1961 = vperm.slane %v1935, %v774
        %v1962 = vsel %vm776, %v1961, %v1960
        %v1963 = vperm.slane %v1938, %v442
        %v1964 = vperm.slane %v1941, %v774
        %v1965 = vsel %vm776, %v1964, %v1963
        %v1966 = vsel %vm799, %v1947, %v1944
        %v1967 = vsel %vm801, %v1950, %v1966
        %v1968 = vsel %vm803, %v1953, %v1967
        %v1969 = vsel %vm805, %v1956, %v1968
        %v1970 = vsel %vm807, %v1959, %v1969
        %v1971 = vsel %vm809, %v1962, %v1970
        %v1972 = vsel %vm811, %v1965, %v1971
        %v1974 = vsel %vm814, %v1972, 0.0
        %1975 = vadd.xlane.f32.xlu0 %v1974
        %v1976 = vpop.xlane.xlu0 %1975
        %v1977 = vmax.f32 %v1976, 1.0
        %v1978 = vrcp.pop %v1977
        %v1979 = vmul.f32 %v1977, %v1978
        %v1980 = vsub.f32 1.0, %v1979
        %v1981 = vmul.f32 %v1978, %v1980
        %v1982 = vadd.f32 %v1978, %v1981
        %vm1983 = vweird.f32 %v1977
        %vm1984 = vweird.f32 %v1978
        %vm1985 = vmor %vm1983, %vm1984
        %v1986 = vsel %vm1985, %v1978, %v1982
        %v1987 = vand.u32 2147483647, %v1977
        %vm1988 = vcmp.eq.f32.partialorder %v1987, 8.507059e+37
        %v1989 = vand.u32 %v1977, 2147483648
        %v1990 = vor.u32 1.1754944e-38, %v1989
        %v1991 = vsel %vm1988, %v1990, %v1986
        %v1992 = vmul.f32 1.0, %v1991
        %v1993 = vld [vmem:[%s10 + $0x3] sm:$0x1]
        %v1994 = vld [vmem:[%s6] sm:$0xff]
        %v1995 = vld [vmem:[%s6 + $0x8] sm:$0xff]
        %v1996 = vld [vmem:[%s6 + $0x10] sm:$0xff]
        %v1997 = vld [vmem:[%s6 + $0x18] sm:$0xff]
        %v1998 = vperm.slane %v1993, 0
        %v2000 = vsel %vm856, %v1783, 0
        %v2003 = vsel %vm856, %v1786, 0
        %v2006 = vsel %vm856, %v1789, 0
        %v2009 = vsel %vm856, %v1792, 0
        %v2012 = vsel %vm856, %v1795, 0
        %v2015 = vsel %vm856, %v1798, 0
        %v2018 = vsel %vm856, %v1801, 0
        %v2021 = vsel %vm856, %v1804, 0
        %v2024 = vsel %vm856, %v1807, 0
        %v2027 = vsel %vm856, %v1810, 0
        %v2030 = vsel %vm856, %v1813, 0
        %v2033 = vsel %vm856, %v1816, 0
        %v2036 = vsel %vm856, %v1819, 0
        %v2039 = vsel %vm856, %v1822, 0
        %v2042 = vsel %vm856, %v1825, 0
        %v2045 = vsel %vm856, %v1828, 0
        %2047 = vmatpush.msra.mxu0 0.0
        %2048 = vmatpush.msra.mxu0 0.0
        %2049 = vmatpush.msra.mxu0 0.0
        %2050 = vmatpush.msra.mxu0 0.0
        %2051 = vmatpush.msra.mxu0 0.0
        %2052 = vmatpush.msra.mxu0 0.0
        %2053 = vmatpush.msra.mxu0 0.0
        %2054 = vmatpush.msra.mxu0 0.0
        %2055 = vmatpush.msra.mxu0 0.0
        %2056 = vmatpush.msra.mxu0 0.0
        %2057 = vmatpush.msra.mxu0 0.0
        %2058 = vmatpush.msra.mxu0 0.0
        %2059 = vmatpush.msra.mxu0 %v1997
        %2060 = vmatpush.msra.mxu0 %v1996
        %2061 = vmatpush.msra.mxu0 %v1995
        %2062 = vmatpush.msra.mxu0 %v1994
        %2063 = vmatmul.f32.gmra.mxu0 %v2000
        %v2064 = vpop.f32.mrf.mxu0
        %v2065 = vadd.f32 %v1998, %v2064
        %2066 = vmatmul.f32.gmra.mxu0 %v2003
        %v2067 = vpop.f32.mrf.mxu0
        %v2068 = vadd.f32 %v1998, %v2067
        %2069 = vmatmul.f32.gmra.mxu0 %v2006
        %v2070 = vpop.f32.mrf.mxu0
        %v2071 = vadd.f32 %v1998, %v2070
        %2072 = vmatmul.f32.gmra.mxu0 %v2009
        %v2073 = vpop.f32.mrf.mxu0
        %v2074 = vadd.f32 %v1998, %v2073
        %2075 = vmatmul.f32.gmra.mxu0 %v2012
        %v2076 = vpop.f32.mrf.mxu0
        %v2077 = vadd.f32 %v1998, %v2076
        %2078 = vmatmul.f32.gmra.mxu0 %v2015
        %v2079 = vpop.f32.mrf.mxu0
        %v2080 = vadd.f32 %v1998, %v2079
        %2081 = vmatmul.f32.gmra.mxu0 %v2018
        %v2082 = vpop.f32.mrf.mxu0
        %v2083 = vadd.f32 %v1998, %v2082
        %2084 = vmatmul.f32.gmra.mxu0 %v2021
        %v2085 = vpop.f32.mrf.mxu0
        %v2086 = vadd.f32 %v1998, %v2085
        %2087 = vmatmul.f32.gmra.mxu0 %v2024
        %v2088 = vpop.f32.mrf.mxu0
        %v2089 = vadd.f32 %v1998, %v2088
        %2090 = vmatmul.f32.gmra.mxu0 %v2027
        %v2091 = vpop.f32.mrf.mxu0
        %v2092 = vadd.f32 %v1998, %v2091
        %2093 = vmatmul.f32.gmra.mxu0 %v2030
        %v2094 = vpop.f32.mrf.mxu0
        %v2095 = vadd.f32 %v1998, %v2094
        %2096 = vmatmul.f32.gmra.mxu0 %v2033
        %v2097 = vpop.f32.mrf.mxu0
        %v2098 = vadd.f32 %v1998, %v2097
        %2099 = vmatmul.f32.gmra.mxu0 %v2036
        %v2100 = vpop.f32.mrf.mxu0
        %v2101 = vadd.f32 %v1998, %v2100
        %2102 = vmatmul.f32.gmra.mxu0 %v2039
        %v2103 = vpop.f32.mrf.mxu0
        %v2104 = vadd.f32 %v1998, %v2103
        %2105 = vmatmul.f32.gmra.mxu0 %v2042
        %v2106 = vpop.f32.mrf.mxu0
        %v2107 = vadd.f32 %v1998, %v2106
        %2108 = vmatmul.f32.gmra.mxu0 %v2045
        %v2109 = vpop.f32.mrf.mxu0
        %v2110 = vadd.f32 %v1998, %v2109
        %2111 = vdwg.mxu0
        %v2112 = vxor.u32 %v2065, 2147483648
        %v2113 = vxor.u32 %v2068, 2147483648
        %v2114 = vxor.u32 %v2071, 2147483648
        %v2115 = vxor.u32 %v2074, 2147483648
        %v2116 = vxor.u32 %v2077, 2147483648
        %v2117 = vxor.u32 %v2080, 2147483648
        %v2118 = vxor.u32 %v2083, 2147483648
        %v2119 = vxor.u32 %v2086, 2147483648
        %v2120 = vxor.u32 %v2089, 2147483648
        %v2121 = vxor.u32 %v2092, 2147483648
        %v2122 = vxor.u32 %v2095, 2147483648
        %v2123 = vxor.u32 %v2098, 2147483648
        %v2124 = vxor.u32 %v2101, 2147483648
        %v2125 = vxor.u32 %v2104, 2147483648
        %v2126 = vxor.u32 %v2107, 2147483648
        %v2127 = vxor.u32 %v2110, 2147483648
        %v2128 = vmul.f32 %v2112, 1.442695
        %v2129 = vpow.pop %v2128
        %v2130 = vmul.f32 %v2113, 1.442695
        %v2131 = vpow.pop %v2130
        %v2132 = vmul.f32 %v2114, 1.442695
        %v2133 = vpow.pop %v2132
        %v2134 = vmul.f32 %v2115, 1.442695
        %v2135 = vpow.pop %v2134
        %v2136 = vmul.f32 %v2116, 1.442695
        %v2137 = vpow.pop %v2136
        %v2138 = vmul.f32 %v2117, 1.442695
        %v2139 = vpow.pop %v2138
        %v2140 = vmul.f32 %v2118, 1.442695
        %v2141 = vpow.pop %v2140
        %v2142 = vmul.f32 %v2119, 1.442695
        %v2143 = vpow.pop %v2142
        %v2144 = vmul.f32 %v2120, 1.442695
        %v2145 = vpow.pop %v2144
        %v2146 = vmul.f32 %v2121, 1.442695
        %v2147 = vpow.pop %v2146
        %v2148 = vmul.f32 %v2122, 1.442695
        %v2149 = vpow.pop %v2148
        %v2150 = vmul.f32 %v2123, 1.442695
        %v2151 = vpow.pop %v2150
        %v2152 = vmul.f32 %v2124, 1.442695
        %v2153 = vpow.pop %v2152
        %v2154 = vmul.f32 %v2125, 1.442695
        %v2155 = vpow.pop %v2154
        %v2156 = vmul.f32 %v2126, 1.442695
        %v2157 = vpow.pop %v2156
        %v2158 = vmul.f32 %v2127, 1.442695
        %v2159 = vpow.pop %v2158
        %v2160 = vadd.f32 %v2129, 1.0
        %v2161 = vadd.f32 %v2131, 1.0
        %v2162 = vadd.f32 %v2133, 1.0
        %v2163 = vadd.f32 %v2135, 1.0
        %v2164 = vadd.f32 %v2137, 1.0
        %v2165 = vadd.f32 %v2139, 1.0
        %v2166 = vadd.f32 %v2141, 1.0
        %v2167 = vadd.f32 %v2143, 1.0
        %v2168 = vadd.f32 %v2145, 1.0
        %v2169 = vadd.f32 %v2147, 1.0
        %v2170 = vadd.f32 %v2149, 1.0
        %v2171 = vadd.f32 %v2151, 1.0
        %v2172 = vadd.f32 %v2153, 1.0
        %v2173 = vadd.f32 %v2155, 1.0
        %v2174 = vadd.f32 %v2157, 1.0
        %v2175 = vadd.f32 %v2159, 1.0
        %v2176 = vrcp.pop %v2160
        %v2177 = vmul.f32 %v2160, %v2176
        %v2178 = vsub.f32 1.0, %v2177
        %v2179 = vmul.f32 %v2176, %v2178
        %v2180 = vadd.f32 %v2176, %v2179
        %vm2181 = vweird.f32 %v2160
        %vm2182 = vweird.f32 %v2176
        %vm2183 = vmor %vm2181, %vm2182
        %v2184 = vsel %vm2183, %v2176, %v2180
        %v2185 = vand.u32 2147483647, %v2160
        %vm2186 = vcmp.eq.f32.partialorder %v2185, 8.507059e+37
        %v2187 = vand.u32 %v2160, 2147483648
        %v2188 = vor.u32 1.1754944e-38, %v2187
        %v2189 = vsel %vm2186, %v2188, %v2184
        %v2190 = vmul.f32 1.0, %v2189
        %v2191 = vrcp.pop %v2161
        %v2192 = vmul.f32 %v2161, %v2191
        %v2193 = vsub.f32 1.0, %v2192
        %v2194 = vmul.f32 %v2191, %v2193
        %v2195 = vadd.f32 %v2191, %v2194
        %vm2196 = vweird.f32 %v2161
        %vm2197 = vweird.f32 %v2191
        %vm2198 = vmor %vm2196, %vm2197
        %v2199 = vsel %vm2198, %v2191, %v2195
        %v2200 = vand.u32 2147483647, %v2161
        %vm2201 = vcmp.eq.f32.partialorder %v2200, 8.507059e+37
        %v2202 = vand.u32 %v2161, 2147483648
        %v2203 = vor.u32 1.1754944e-38, %v2202
        %v2204 = vsel %vm2201, %v2203, %v2199
        %v2205 = vmul.f32 1.0, %v2204
        %v2206 = vrcp.pop %v2162
        %v2207 = vmul.f32 %v2162, %v2206
        %v2208 = vsub.f32 1.0, %v2207
        %v2209 = vmul.f32 %v2206, %v2208
        %v2210 = vadd.f32 %v2206, %v2209
        %vm2211 = vweird.f32 %v2162
        %vm2212 = vweird.f32 %v2206
        %vm2213 = vmor %vm2211, %vm2212
        %v2214 = vsel %vm2213, %v2206, %v2210
        %v2215 = vand.u32 2147483647, %v2162
        %vm2216 = vcmp.eq.f32.partialorder %v2215, 8.507059e+37
        %v2217 = vand.u32 %v2162, 2147483648
        %v2218 = vor.u32 1.1754944e-38, %v2217
        %v2219 = vsel %vm2216, %v2218, %v2214
        %v2220 = vmul.f32 1.0, %v2219
        %v2221 = vrcp.pop %v2163
        %v2222 = vmul.f32 %v2163, %v2221
        %v2223 = vsub.f32 1.0, %v2222
        %v2224 = vmul.f32 %v2221, %v2223
        %v2225 = vadd.f32 %v2221, %v2224
        %vm2226 = vweird.f32 %v2163
        %vm2227 = vweird.f32 %v2221
        %vm2228 = vmor %vm2226, %vm2227
        %v2229 = vsel %vm2228, %v2221, %v2225
        %v2230 = vand.u32 2147483647, %v2163
        %vm2231 = vcmp.eq.f32.partialorder %v2230, 8.507059e+37
        %v2232 = vand.u32 %v2163, 2147483648
        %v2233 = vor.u32 1.1754944e-38, %v2232
        %v2234 = vsel %vm2231, %v2233, %v2229
        %v2235 = vmul.f32 1.0, %v2234
        %v2236 = vrcp.pop %v2164
        %v2237 = vmul.f32 %v2164, %v2236
        %v2238 = vsub.f32 1.0, %v2237
        %v2239 = vmul.f32 %v2236, %v2238
        %v2240 = vadd.f32 %v2236, %v2239
        %vm2241 = vweird.f32 %v2164
        %vm2242 = vweird.f32 %v2236
        %vm2243 = vmor %vm2241, %vm2242
        %v2244 = vsel %vm2243, %v2236, %v2240
        %v2245 = vand.u32 2147483647, %v2164
        %vm2246 = vcmp.eq.f32.partialorder %v2245, 8.507059e+37
        %v2247 = vand.u32 %v2164, 2147483648
        %v2248 = vor.u32 1.1754944e-38, %v2247
        %v2249 = vsel %vm2246, %v2248, %v2244
        %v2250 = vmul.f32 1.0, %v2249
        %v2251 = vrcp.pop %v2165
        %v2252 = vmul.f32 %v2165, %v2251
        %v2253 = vsub.f32 1.0, %v2252
        %v2254 = vmul.f32 %v2251, %v2253
        %v2255 = vadd.f32 %v2251, %v2254
        %vm2256 = vweird.f32 %v2165
        %vm2257 = vweird.f32 %v2251
        %vm2258 = vmor %vm2256, %vm2257
        %v2259 = vsel %vm2258, %v2251, %v2255
        %v2260 = vand.u32 2147483647, %v2165
        %vm2261 = vcmp.eq.f32.partialorder %v2260, 8.507059e+37
        %v2262 = vand.u32 %v2165, 2147483648
        %v2263 = vor.u32 1.1754944e-38, %v2262
        %v2264 = vsel %vm2261, %v2263, %v2259
        %v2265 = vmul.f32 1.0, %v2264
        %v2266 = vrcp.pop %v2166
        %v2267 = vmul.f32 %v2166, %v2266
        %v2268 = vsub.f32 1.0, %v2267
        %v2269 = vmul.f32 %v2266, %v2268
        %v2270 = vadd.f32 %v2266, %v2269
        %vm2271 = vweird.f32 %v2166
        %vm2272 = vweird.f32 %v2266
        %vm2273 = vmor %vm2271, %vm2272
        %v2274 = vsel %vm2273, %v2266, %v2270
        %v2275 = vand.u32 2147483647, %v2166
        %vm2276 = vcmp.eq.f32.partialorder %v2275, 8.507059e+37
        %v2277 = vand.u32 %v2166, 2147483648
        %v2278 = vor.u32 1.1754944e-38, %v2277
        %v2279 = vsel %vm2276, %v2278, %v2274
        %v2280 = vmul.f32 1.0, %v2279
        %v2281 = vrcp.pop %v2167
        %v2282 = vmul.f32 %v2167, %v2281
        %v2283 = vsub.f32 1.0, %v2282
        %v2284 = vmul.f32 %v2281, %v2283
        %v2285 = vadd.f32 %v2281, %v2284
        %vm2286 = vweird.f32 %v2167
        %vm2287 = vweird.f32 %v2281
        %vm2288 = vmor %vm2286, %vm2287
        %v2289 = vsel %vm2288, %v2281, %v2285
        %v2290 = vand.u32 2147483647, %v2167
        %vm2291 = vcmp.eq.f32.partialorder %v2290, 8.507059e+37
        %v2292 = vand.u32 %v2167, 2147483648
        %v2293 = vor.u32 1.1754944e-38, %v2292
        %v2294 = vsel %vm2291, %v2293, %v2289
        %v2295 = vmul.f32 1.0, %v2294
        %v2296 = vrcp.pop %v2168
        %v2297 = vmul.f32 %v2168, %v2296
        %v2298 = vsub.f32 1.0, %v2297
        %v2299 = vmul.f32 %v2296, %v2298
        %v2300 = vadd.f32 %v2296, %v2299
        %vm2301 = vweird.f32 %v2168
        %vm2302 = vweird.f32 %v2296
        %vm2303 = vmor %vm2301, %vm2302
        %v2304 = vsel %vm2303, %v2296, %v2300
        %v2305 = vand.u32 2147483647, %v2168
        %vm2306 = vcmp.eq.f32.partialorder %v2305, 8.507059e+37
        %v2307 = vand.u32 %v2168, 2147483648
        %v2308 = vor.u32 1.1754944e-38, %v2307
        %v2309 = vsel %vm2306, %v2308, %v2304
        %v2310 = vmul.f32 1.0, %v2309
        %v2311 = vrcp.pop %v2169
        %v2312 = vmul.f32 %v2169, %v2311
        %v2313 = vsub.f32 1.0, %v2312
        %v2314 = vmul.f32 %v2311, %v2313
        %v2315 = vadd.f32 %v2311, %v2314
        %vm2316 = vweird.f32 %v2169
        %vm2317 = vweird.f32 %v2311
        %vm2318 = vmor %vm2316, %vm2317
        %v2319 = vsel %vm2318, %v2311, %v2315
        %v2320 = vand.u32 2147483647, %v2169
        %vm2321 = vcmp.eq.f32.partialorder %v2320, 8.507059e+37
        %v2322 = vand.u32 %v2169, 2147483648
        %v2323 = vor.u32 1.1754944e-38, %v2322
        %v2324 = vsel %vm2321, %v2323, %v2319
        %v2325 = vmul.f32 1.0, %v2324
        %v2326 = vrcp.pop %v2170
        %v2327 = vmul.f32 %v2170, %v2326
        %v2328 = vsub.f32 1.0, %v2327
        %v2329 = vmul.f32 %v2326, %v2328
        %v2330 = vadd.f32 %v2326, %v2329
        %vm2331 = vweird.f32 %v2170
        %vm2332 = vweird.f32 %v2326
        %vm2333 = vmor %vm2331, %vm2332
        %v2334 = vsel %vm2333, %v2326, %v2330
        %v2335 = vand.u32 2147483647, %v2170
        %vm2336 = vcmp.eq.f32.partialorder %v2335, 8.507059e+37
        %v2337 = vand.u32 %v2170, 2147483648
        %v2338 = vor.u32 1.1754944e-38, %v2337
        %v2339 = vsel %vm2336, %v2338, %v2334
        %v2340 = vmul.f32 1.0, %v2339
        %v2341 = vrcp.pop %v2171
        %v2342 = vmul.f32 %v2171, %v2341
        %v2343 = vsub.f32 1.0, %v2342
        %v2344 = vmul.f32 %v2341, %v2343
        %v2345 = vadd.f32 %v2341, %v2344
        %vm2346 = vweird.f32 %v2171
        %vm2347 = vweird.f32 %v2341
        %vm2348 = vmor %vm2346, %vm2347
        %v2349 = vsel %vm2348, %v2341, %v2345
        %v2350 = vand.u32 2147483647, %v2171
        %vm2351 = vcmp.eq.f32.partialorder %v2350, 8.507059e+37
        %v2352 = vand.u32 %v2171, 2147483648
        %v2353 = vor.u32 1.1754944e-38, %v2352
        %v2354 = vsel %vm2351, %v2353, %v2349
        %v2355 = vmul.f32 1.0, %v2354
        %v2356 = vrcp.pop %v2172
        %v2357 = vmul.f32 %v2172, %v2356
        %v2358 = vsub.f32 1.0, %v2357
        %v2359 = vmul.f32 %v2356, %v2358
        %v2360 = vadd.f32 %v2356, %v2359
        %vm2361 = vweird.f32 %v2172
        %vm2362 = vweird.f32 %v2356
        %vm2363 = vmor %vm2361, %vm2362
        %v2364 = vsel %vm2363, %v2356, %v2360
        %v2365 = vand.u32 2147483647, %v2172
        %vm2366 = vcmp.eq.f32.partialorder %v2365, 8.507059e+37
        %v2367 = vand.u32 %v2172, 2147483648
        %v2368 = vor.u32 1.1754944e-38, %v2367
        %v2369 = vsel %vm2366, %v2368, %v2364
        %v2370 = vmul.f32 1.0, %v2369
        %v2371 = vrcp.pop %v2173
        %v2372 = vmul.f32 %v2173, %v2371
        %v2373 = vsub.f32 1.0, %v2372
        %v2374 = vmul.f32 %v2371, %v2373
        %v2375 = vadd.f32 %v2371, %v2374
        %vm2376 = vweird.f32 %v2173
        %vm2377 = vweird.f32 %v2371
        %vm2378 = vmor %vm2376, %vm2377
        %v2379 = vsel %vm2378, %v2371, %v2375
        %v2380 = vand.u32 2147483647, %v2173
        %vm2381 = vcmp.eq.f32.partialorder %v2380, 8.507059e+37
        %v2382 = vand.u32 %v2173, 2147483648
        %v2383 = vor.u32 1.1754944e-38, %v2382
        %v2384 = vsel %vm2381, %v2383, %v2379
        %v2385 = vmul.f32 1.0, %v2384
        %v2386 = vrcp.pop %v2174
        %v2387 = vmul.f32 %v2174, %v2386
        %v2388 = vsub.f32 1.0, %v2387
        %v2389 = vmul.f32 %v2386, %v2388
        %v2390 = vadd.f32 %v2386, %v2389
        %vm2391 = vweird.f32 %v2174
        %vm2392 = vweird.f32 %v2386
        %vm2393 = vmor %vm2391, %vm2392
        %v2394 = vsel %vm2393, %v2386, %v2390
        %v2395 = vand.u32 2147483647, %v2174
        %vm2396 = vcmp.eq.f32.partialorder %v2395, 8.507059e+37
        %v2397 = vand.u32 %v2174, 2147483648
        %v2398 = vor.u32 1.1754944e-38, %v2397
        %v2399 = vsel %vm2396, %v2398, %v2394
        %v2400 = vmul.f32 1.0, %v2399
        %v2401 = vrcp.pop %v2175
        %v2402 = vmul.f32 %v2175, %v2401
        %v2403 = vsub.f32 1.0, %v2402
        %v2404 = vmul.f32 %v2401, %v2403
        %v2405 = vadd.f32 %v2401, %v2404
        %vm2406 = vweird.f32 %v2175
        %vm2407 = vweird.f32 %v2401
        %vm2408 = vmor %vm2406, %vm2407
        %v2409 = vsel %vm2408, %v2401, %v2405
        %v2410 = vand.u32 2147483647, %v2175
        %vm2411 = vcmp.eq.f32.partialorder %v2410, 8.507059e+37
        %v2412 = vand.u32 %v2175, 2147483648
        %v2413 = vor.u32 1.1754944e-38, %v2412
        %v2414 = vsel %vm2411, %v2413, %v2409
        %v2415 = vmul.f32 1.0, %v2414
        %v2416 = vtanh.pop %v2065
        %v2417 = vtanh.pop %v2068
        %v2418 = vtanh.pop %v2071
        %v2419 = vtanh.pop %v2074
        %v2420 = vtanh.pop %v2077
        %v2421 = vtanh.pop %v2080
        %v2422 = vtanh.pop %v2083
        %v2423 = vtanh.pop %v2086
        %v2424 = vtanh.pop %v2089
        %v2425 = vtanh.pop %v2092
        %v2426 = vtanh.pop %v2095
        %v2427 = vtanh.pop %v2098
        %v2428 = vtanh.pop %v2101
        %v2429 = vtanh.pop %v2104
        %v2430 = vtanh.pop %v2107
        %v2431 = vtanh.pop %v2110
        %2448 = vrot.lane.b32.xlu0 %v2416, 64
        %v2449 = vpop.permute.xlu0 %2448
        %2450 = vrot.lane.b32.xlu0 %v2417, 64
        %v2451 = vpop.permute.xlu0 %2450
        %2452 = vrot.lane.b32.xlu0 %v2418, 64
        %v2453 = vpop.permute.xlu0 %2452
        %2454 = vrot.lane.b32.xlu0 %v2419, 64
        %v2455 = vpop.permute.xlu0 %2454
        %2456 = vrot.lane.b32.xlu0 %v2420, 64
        %v2457 = vpop.permute.xlu0 %2456
        %2458 = vrot.lane.b32.xlu0 %v2421, 64
        %v2459 = vpop.permute.xlu0 %2458
        %2460 = vrot.lane.b32.xlu0 %v2422, 64
        %v2461 = vpop.permute.xlu0 %2460
        %2462 = vrot.lane.b32.xlu0 %v2423, 64
        %v2463 = vpop.permute.xlu0 %2462
        %2464 = vrot.lane.b32.xlu0 %v2424, 64
        %v2465 = vpop.permute.xlu0 %2464
        %2466 = vrot.lane.b32.xlu0 %v2425, 64
        %v2467 = vpop.permute.xlu0 %2466
        %2468 = vrot.lane.b32.xlu0 %v2426, 64
        %v2469 = vpop.permute.xlu0 %2468
        %2470 = vrot.lane.b32.xlu0 %v2427, 64
        %v2471 = vpop.permute.xlu0 %2470
        %2472 = vrot.lane.b32.xlu0 %v2428, 64
        %v2473 = vpop.permute.xlu0 %2472
        %2474 = vrot.lane.b32.xlu0 %v2429, 64
        %v2475 = vpop.permute.xlu0 %2474
        %2476 = vrot.lane.b32.xlu0 %v2430, 64
        %v2477 = vpop.permute.xlu0 %2476
        %2478 = vrot.lane.b32.xlu0 %v2431, 64
        %v2479 = vpop.permute.xlu0 %2478
        %v2496 = vmul.f32 %v2190, %v2449
        %v2497 = vmul.f32 %v2205, %v2451
        %v2498 = vmul.f32 %v2220, %v2453
        %v2499 = vmul.f32 %v2235, %v2455
        %v2500 = vmul.f32 %v2250, %v2457
        %v2501 = vmul.f32 %v2265, %v2459
        %v2502 = vmul.f32 %v2280, %v2461
        %v2503 = vmul.f32 %v2295, %v2463
        %v2504 = vmul.f32 %v2310, %v2465
        %v2505 = vmul.f32 %v2325, %v2467
        %v2506 = vmul.f32 %v2340, %v2469
        %v2507 = vmul.f32 %v2355, %v2471
        %v2508 = vmul.f32 %v2370, %v2473
        %v2509 = vmul.f32 %v2385, %v2475
        %v2510 = vmul.f32 %v2400, %v2477
        %v2511 = vmul.f32 %v2415, %v2479
        %v2512 = vtanh.pop %v2496
        %v2513 = vtanh.pop %v2497
        %v2514 = vtanh.pop %v2498
        %v2515 = vtanh.pop %v2499
        %v2516 = vtanh.pop %v2500
        %v2517 = vtanh.pop %v2501
        %v2518 = vtanh.pop %v2502
        %v2519 = vtanh.pop %v2503
        %v2520 = vtanh.pop %v2504
        %v2521 = vtanh.pop %v2505
        %v2522 = vtanh.pop %v2506
        %v2523 = vtanh.pop %v2507
        %v2524 = vtanh.pop %v2508
        %v2525 = vtanh.pop %v2509
        %v2526 = vtanh.pop %v2510
        %v2527 = vtanh.pop %v2511
        %2544 = vrot.lane.b32.xlu0 %v2512, 96
        %v2545 = vpop.permute.xlu0 %2544
        %2546 = vrot.lane.b32.xlu0 %v2513, 96
        %v2547 = vpop.permute.xlu0 %2546
        %2548 = vrot.lane.b32.xlu0 %v2514, 96
        %v2549 = vpop.permute.xlu0 %2548
        %2550 = vrot.lane.b32.xlu0 %v2515, 96
        %v2551 = vpop.permute.xlu0 %2550
        %2552 = vrot.lane.b32.xlu0 %v2516, 96
        %v2553 = vpop.permute.xlu0 %2552
        %2554 = vrot.lane.b32.xlu0 %v2517, 96
        %v2555 = vpop.permute.xlu0 %2554
        %2556 = vrot.lane.b32.xlu0 %v2518, 96
        %v2557 = vpop.permute.xlu0 %2556
        %2558 = vrot.lane.b32.xlu0 %v2519, 96
        %v2559 = vpop.permute.xlu0 %2558
        %2560 = vrot.lane.b32.xlu0 %v2520, 96
        %v2561 = vpop.permute.xlu0 %2560
        %2562 = vrot.lane.b32.xlu0 %v2521, 96
        %v2563 = vpop.permute.xlu0 %2562
        %2564 = vrot.lane.b32.xlu0 %v2522, 96
        %v2565 = vpop.permute.xlu0 %2564
        %2566 = vrot.lane.b32.xlu0 %v2523, 96
        %v2567 = vpop.permute.xlu0 %2566
        %2568 = vrot.lane.b32.xlu0 %v2524, 96
        %v2569 = vpop.permute.xlu0 %2568
        %2570 = vrot.lane.b32.xlu0 %v2525, 96
        %v2571 = vpop.permute.xlu0 %2570
        %2572 = vrot.lane.b32.xlu0 %v2526, 96
        %v2573 = vpop.permute.xlu0 %2572
        %2574 = vrot.lane.b32.xlu0 %v2527, 96
        %v2575 = vpop.permute.xlu0 %2574
        %v2592 = vmul.f32 %v2190, %v2545
        %v2593 = vmul.f32 %v2205, %v2547
        %v2594 = vmul.f32 %v2220, %v2549
        %v2595 = vmul.f32 %v2235, %v2551
        %v2596 = vmul.f32 %v2250, %v2553
        %v2597 = vmul.f32 %v2265, %v2555
        %v2598 = vmul.f32 %v2280, %v2557
        %v2599 = vmul.f32 %v2295, %v2559
        %v2600 = vmul.f32 %v2310, %v2561
        %v2601 = vmul.f32 %v2325, %v2563
        %v2602 = vmul.f32 %v2340, %v2565
        %v2603 = vmul.f32 %v2355, %v2567
        %v2604 = vmul.f32 %v2370, %v2569
        %v2605 = vmul.f32 %v2385, %v2571
        %v2606 = vmul.f32 %v2400, %v2573
        %v2607 = vmul.f32 %v2415, %v2575
        %v2608 = vld [vmem:[%s10 + $0x4] sm:$0x1]
        %v2609 = vld [vmem:[%s7] sm:$0xff]
        %v2610 = vld [vmem:[%s7 + $0x8] sm:$0xff]
        %v2611 = vld [vmem:[%s7 + $0x10] sm:$0xff]
        %v2612 = vld [vmem:[%s7 + $0x18] sm:$0xff]
        %v2613 = vperm.slane %v2608, 0
        %2630 = vrot.lane.b32.xlu0 %v2592, 32
        %v2631 = vpop.permute.xlu0 %2630
        %2632 = vrot.lane.b32.xlu0 %v2593, 32
        %v2633 = vpop.permute.xlu0 %2632
        %2634 = vrot.lane.b32.xlu0 %v2594, 32
        %v2635 = vpop.permute.xlu0 %2634
        %2636 = vrot.lane.b32.xlu0 %v2595, 32
        %v2637 = vpop.permute.xlu0 %2636
        %2638 = vrot.lane.b32.xlu0 %v2596, 32
        %v2639 = vpop.permute.xlu0 %2638
        %2640 = vrot.lane.b32.xlu0 %v2597, 32
        %v2641 = vpop.permute.xlu0 %2640
        %2642 = vrot.lane.b32.xlu0 %v2598, 32
        %v2643 = vpop.permute.xlu0 %2642
        %2644 = vrot.lane.b32.xlu0 %v2599, 32
        %v2645 = vpop.permute.xlu0 %2644
        %2646 = vrot.lane.b32.xlu0 %v2600, 32
        %v2647 = vpop.permute.xlu0 %2646
        %2648 = vrot.lane.b32.xlu0 %v2601, 32
        %v2649 = vpop.permute.xlu0 %2648
        %2650 = vrot.lane.b32.xlu0 %v2602, 32
        %v2651 = vpop.permute.xlu0 %2650
        %2652 = vrot.lane.b32.xlu0 %v2603, 32
        %v2653 = vpop.permute.xlu0 %2652
        %2654 = vrot.lane.b32.xlu0 %v2604, 32
        %v2655 = vpop.permute.xlu0 %2654
        %2656 = vrot.lane.b32.xlu0 %v2605, 32
        %v2657 = vpop.permute.xlu0 %2656
        %2658 = vrot.lane.b32.xlu0 %v2606, 32
        %v2659 = vpop.permute.xlu0 %2658
        %2660 = vrot.lane.b32.xlu0 %v2607, 32
        %v2661 = vpop.permute.xlu0 %2660
        %v2662 = vsel %vm856, %v2631, 0
        %v2664 = vsel %vm856, %v2633, 0
        %v2666 = vsel %vm856, %v2635, 0
        %v2668 = vsel %vm856, %v2637, 0
        %v2670 = vsel %vm856, %v2639, 0
        %v2672 = vsel %vm856, %v2641, 0
        %v2674 = vsel %vm856, %v2643, 0
        %v2676 = vsel %vm856, %v2645, 0
        %v2678 = vsel %vm856, %v2647, 0
        %v2680 = vsel %vm856, %v2649, 0
        %v2682 = vsel %vm856, %v2651, 0
        %v2684 = vsel %vm856, %v2653, 0
        %v2686 = vsel %vm856, %v2655, 0
        %v2688 = vsel %vm856, %v2657, 0
        %v2690 = vsel %vm856, %v2659, 0
        %v2692 = vsel %vm856, %v2661, 0
        %2694 = vmatpush.msra.mxu0 0.0
        %2695 = vmatpush.msra.mxu0 0.0
        %2696 = vmatpush.msra.mxu0 0.0
        %2697 = vmatpush.msra.mxu0 0.0
        %2698 = vmatpush.msra.mxu0 0.0
        %2699 = vmatpush.msra.mxu0 0.0
        %2700 = vmatpush.msra.mxu0 0.0
        %2701 = vmatpush.msra.mxu0 0.0
        %2702 = vmatpush.msra.mxu0 0.0
        %2703 = vmatpush.msra.mxu0 0.0
        %2704 = vmatpush.msra.mxu0 0.0
        %2705 = vmatpush.msra.mxu0 0.0
        %2706 = vmatpush.msra.mxu0 %v2612
        %2707 = vmatpush.msra.mxu0 %v2611
        %2708 = vmatpush.msra.mxu0 %v2610
        %2709 = vmatpush.msra.mxu0 %v2609
        %2710 = vmatmul.f32.gmra.mxu0 %v2662
        %v2711 = vpop.f32.mrf.mxu0
        %v2712 = vadd.f32 %v2613, %v2711
        %2713 = vmatmul.f32.gmra.mxu0 %v2664
        %v2714 = vpop.f32.mrf.mxu0
        %v2715 = vadd.f32 %v2613, %v2714
        %2716 = vmatmul.f32.gmra.mxu0 %v2666
        %v2717 = vpop.f32.mrf.mxu0
        %v2718 = vadd.f32 %v2613, %v2717
        %2719 = vmatmul.f32.gmra.mxu0 %v2668
        %v2720 = vpop.f32.mrf.mxu0
        %v2721 = vadd.f32 %v2613, %v2720
        %2722 = vmatmul.f32.gmra.mxu0 %v2670
        %v2723 = vpop.f32.mrf.mxu0
        %v2724 = vadd.f32 %v2613, %v2723
        %2725 = vmatmul.f32.gmra.mxu0 %v2672
        %v2726 = vpop.f32.mrf.mxu0
        %v2727 = vadd.f32 %v2613, %v2726
        %2728 = vmatmul.f32.gmra.mxu0 %v2674
        %v2729 = vpop.f32.mrf.mxu0
        %v2730 = vadd.f32 %v2613, %v2729
        %2731 = vmatmul.f32.gmra.mxu0 %v2676
        %v2732 = vpop.f32.mrf.mxu0
        %v2733 = vadd.f32 %v2613, %v2732
        %2734 = vmatmul.f32.gmra.mxu0 %v2678
        %v2735 = vpop.f32.mrf.mxu0
        %v2736 = vadd.f32 %v2613, %v2735
        %2737 = vmatmul.f32.gmra.mxu0 %v2680
        %v2738 = vpop.f32.mrf.mxu0
        %v2739 = vadd.f32 %v2613, %v2738
        %2740 = vmatmul.f32.gmra.mxu0 %v2682
        %v2741 = vpop.f32.mrf.mxu0
        %v2742 = vadd.f32 %v2613, %v2741
        %2743 = vmatmul.f32.gmra.mxu0 %v2684
        %v2744 = vpop.f32.mrf.mxu0
        %v2745 = vadd.f32 %v2613, %v2744
        %2746 = vmatmul.f32.gmra.mxu0 %v2686
        %v2747 = vpop.f32.mrf.mxu0
        %v2748 = vadd.f32 %v2613, %v2747
        %2749 = vmatmul.f32.gmra.mxu0 %v2688
        %v2750 = vpop.f32.mrf.mxu0
        %v2751 = vadd.f32 %v2613, %v2750
        %2752 = vmatmul.f32.gmra.mxu0 %v2690
        %v2753 = vpop.f32.mrf.mxu0
        %v2754 = vadd.f32 %v2613, %v2753
        %2755 = vmatmul.f32.gmra.mxu0 %v2692
        %v2756 = vpop.f32.mrf.mxu0
        %v2757 = vadd.f32 %v2613, %v2756
        %2758 = vdwg.mxu0
        %v2759 = vmax.f32 %v2712, 0.0
        %v2760 = vmax.f32 %v2715, 0.0
        %v2761 = vmax.f32 %v2718, 0.0
        %v2762 = vmax.f32 %v2721, 0.0
        %v2763 = vmax.f32 %v2724, 0.0
        %v2764 = vmax.f32 %v2727, 0.0
        %v2765 = vmax.f32 %v2730, 0.0
        %v2766 = vmax.f32 %v2733, 0.0
        %v2767 = vmax.f32 %v2736, 0.0
        %v2768 = vmax.f32 %v2739, 0.0
        %v2769 = vmax.f32 %v2742, 0.0
        %v2770 = vmax.f32 %v2745, 0.0
        %v2771 = vmax.f32 %v2748, 0.0
        %v2772 = vmax.f32 %v2751, 0.0
        %v2773 = vmax.f32 %v2754, 0.0
        %v2774 = vmax.f32 %v2757, 0.0
        %v2783 = vrot.slane %v1590, 7
        %v2784 = vsel %vm799, %v2783, %v1589
        %v2785 = vrot.slane %v1591, 6
        %v2786 = vsel %vm801, %v2785, %v2784
        %v2787 = vrot.slane %v1592, 5
        %v2788 = vsel %vm803, %v2787, %v2786
        %v2789 = vrot.slane %v1593, 4
        %v2790 = vsel %vm805, %v2789, %v2788
        %v2791 = vrot.slane %v1594, 3
        %v2792 = vsel %vm807, %v2791, %v2790
        %v2793 = vrot.slane %v1595, 2
        %v2794 = vsel %vm809, %v2793, %v2792
        %v2795 = vrot.slane %v1596, 1
        %v2796 = vsel %vm811, %v2795, %v2794
        %v2797 = vsel %vm856, %v2796, 0
        %2799 = vmatpush.msra.mxu0 0.0
        %2800 = vmatpush.msra.mxu0 0.0
        %2801 = vmatpush.msra.mxu0 0.0
        %2802 = vmatpush.msra.mxu0 0.0
        %2803 = vmatpush.msra.mxu0 0.0
        %2804 = vmatpush.msra.mxu0 0.0
        %2805 = vmatpush.msra.mxu0 0.0
        %2806 = vmatpush.msra.mxu0 0.0
        %2807 = vmatpush.msra.mxu0 0.0
        %2808 = vmatpush.msra.mxu0 0.0
        %2809 = vmatpush.msra.mxu0 0.0
        %2810 = vmatpush.msra.mxu0 0.0
        %2811 = vmatpush.msra.mxu0 %v2612
        %2812 = vmatpush.msra.mxu0 %v2611
        %2813 = vmatpush.msra.mxu0 %v2610
        %2814 = vmatpush.msra.mxu0 %v2609
        %2815 = vmatmul.f32.gmra.mxu0 %v2797
        %v2816 = vpop.f32.mrf.mxu0
        %v2817 = vadd.f32 %v2613, %v2816
        %2818 = vdwg.mxu0
        %v2819 = vmax.f32 %v2817, 0.0
        %v2821 = vrot.slane %v2819, 1
        %v2822 = vrot.slane %v2819, 2
        %v2823 = vrot.slane %v2819, 3
        %v2824 = vrot.slane %v2819, 4
        %v2825 = vrot.slane %v2819, 5
        %v2826 = vrot.slane %v2819, 6
        %v2827 = vrot.slane %v2819, 7
        %v2828 = vperm.slane %v2819, 0
        %v2829 = vperm.slane %v2821, 0
        %v2830 = vperm.slane %v2822, 0
        %v2831 = vperm.slane %v2823, 0
        %v2832 = vperm.slane %v2824, 0
        %v2833 = vperm.slane %v2825, 0
        %v2834 = vperm.slane %v2826, 0
        %v2835 = vperm.slane %v2827, 0
        %v2844 = vmul.f32 %v2759, %v2828
        %v2845 = vmul.f32 %v2760, %v2828
        %v2846 = vmul.f32 %v2761, %v2829
        %v2847 = vmul.f32 %v2762, %v2829
        %v2848 = vmul.f32 %v2763, %v2830
        %v2849 = vmul.f32 %v2764, %v2830
        %v2850 = vmul.f32 %v2765, %v2831
        %v2851 = vmul.f32 %v2766, %v2831
        %v2852 = vmul.f32 %v2767, %v2832
        %v2853 = vmul.f32 %v2768, %v2832
        %v2854 = vmul.f32 %v2769, %v2833
        %v2855 = vmul.f32 %v2770, %v2833
        %v2856 = vmul.f32 %v2771, %v2834
        %v2857 = vmul.f32 %v2772, %v2834
        %v2858 = vmul.f32 %v2773, %v2835
        %v2859 = vmul.f32 %v2774, %v2835
        %v2860 = vsel %vm856, %v2844, 0.0
        %2861 = vadd.xlane.f32.xlu0 %v2860
        %v2862 = vpop.xlane.xlu0 %2861
        %v2863 = vsel %vm856, %v2845, 0.0
        %2864 = vadd.xlane.f32.xlu0 %v2863
        %v2865 = vpop.xlane.xlu0 %2864
        %v2866 = vsel %vm856, %v2846, 0.0
        %2867 = vadd.xlane.f32.xlu0 %v2866
        %v2868 = vpop.xlane.xlu0 %2867
        %v2869 = vsel %vm856, %v2847, 0.0
        %2870 = vadd.xlane.f32.xlu0 %v2869
        %v2871 = vpop.xlane.xlu0 %2870
        %v2872 = vsel %vm856, %v2848, 0.0
        %2873 = vadd.xlane.f32.xlu0 %v2872
        %v2874 = vpop.xlane.xlu0 %2873
        %v2875 = vsel %vm856, %v2849, 0.0
        %2876 = vadd.xlane.f32.xlu0 %v2875
        %v2877 = vpop.xlane.xlu0 %2876
        %v2878 = vsel %vm856, %v2850, 0.0
        %2879 = vadd.xlane.f32.xlu0 %v2878
        %v2880 = vpop.xlane.xlu0 %2879
        %v2881 = vsel %vm856, %v2851, 0.0
        %2882 = vadd.xlane.f32.xlu0 %v2881
        %v2883 = vpop.xlane.xlu0 %2882
        %v2884 = vsel %vm856, %v2852, 0.0
        %2885 = vadd.xlane.f32.xlu0 %v2884
        %v2886 = vpop.xlane.xlu0 %2885
        %v2887 = vsel %vm856, %v2853, 0.0
        %2888 = vadd.xlane.f32.xlu0 %v2887
        %v2889 = vpop.xlane.xlu0 %2888
        %v2890 = vsel %vm856, %v2854, 0.0
        %2891 = vadd.xlane.f32.xlu0 %v2890
        %v2892 = vpop.xlane.xlu0 %2891
        %v2893 = vsel %vm856, %v2855, 0.0
        %2894 = vadd.xlane.f32.xlu0 %v2893
        %v2895 = vpop.xlane.xlu0 %2894
        %v2896 = vsel %vm856, %v2856, 0.0
        %2897 = vadd.xlane.f32.xlu0 %v2896
        %v2898 = vpop.xlane.xlu0 %2897
        %v2899 = vsel %vm856, %v2857, 0.0
        %2900 = vadd.xlane.f32.xlu0 %v2899
        %v2901 = vpop.xlane.xlu0 %2900
        %v2902 = vsel %vm856, %v2858, 0.0
        %2903 = vadd.xlane.f32.xlu0 %v2902
        %v2904 = vpop.xlane.xlu0 %2903
        %v2905 = vsel %vm856, %v2859, 0.0
        %2906 = vadd.xlane.f32.xlu0 %v2905
        %v2907 = vpop.xlane.xlu0 %2906
        %v2908 = vtanh.pop %v2862
        %v2909 = vtanh.pop %v2865
        %v2910 = vtanh.pop %v2868
        %v2911 = vtanh.pop %v2871
        %v2912 = vtanh.pop %v2874
        %v2913 = vtanh.pop %v2877
        %v2914 = vtanh.pop %v2880
        %v2915 = vtanh.pop %v2883
        %v2916 = vtanh.pop %v2886
        %v2917 = vtanh.pop %v2889
        %v2918 = vtanh.pop %v2892
        %v2919 = vtanh.pop %v2895
        %v2920 = vtanh.pop %v2898
        %v2921 = vtanh.pop %v2901
        %v2922 = vtanh.pop %v2904
        %v2923 = vtanh.pop %v2907
        %v2924 = vmul.f32 %v1862, %v2908
        %v2925 = vmul.f32 %v1863, %v2909
        %v2926 = vmul.f32 %v1864, %v2910
        %v2927 = vmul.f32 %v1865, %v2911
        %v2928 = vmul.f32 %v1866, %v2912
        %v2929 = vmul.f32 %v1867, %v2913
        %v2930 = vmul.f32 %v1868, %v2914
        %v2931 = vmul.f32 %v1869, %v2915
        %v2932 = vmul.f32 %v1870, %v2916
        %v2933 = vmul.f32 %v1871, %v2917
        %v2934 = vmul.f32 %v1872, %v2918
        %v2935 = vmul.f32 %v1873, %v2919
        %v2936 = vmul.f32 %v1874, %v2920
        %v2937 = vmul.f32 %v1875, %v2921
        %v2938 = vmul.f32 %v1876, %v2922
        %v2939 = vmul.f32 %v1877, %v2923
        %2941 = vset.pattern.permute.xlu0 0
        %2942 = vperm.xlu0 %2941, %v2924
        %v2943 = vpop.permute.xlu0 %2942
        %2946 = vset.pattern.permute.xlu0 0
        %2947 = vperm.xlu0 %2946, %v2925
        %v2948 = vpop.permute.xlu0 %2947
        %2951 = vset.pattern.permute.xlu0 0
        %2952 = vperm.xlu0 %2951, %v2926
        %v2953 = vpop.permute.xlu0 %2952
        %2956 = vset.pattern.permute.xlu0 0
        %2957 = vperm.xlu0 %2956, %v2927
        %v2958 = vpop.permute.xlu0 %2957
        %2961 = vset.pattern.permute.xlu0 0
        %2962 = vperm.xlu0 %2961, %v2928
        %v2963 = vpop.permute.xlu0 %2962
        %2966 = vset.pattern.permute.xlu0 0
        %2967 = vperm.xlu0 %2966, %v2929
        %v2968 = vpop.permute.xlu0 %2967
        %2971 = vset.pattern.permute.xlu0 0
        %2972 = vperm.xlu0 %2971, %v2930
        %v2973 = vpop.permute.xlu0 %2972
        %2976 = vset.pattern.permute.xlu0 0
        %2977 = vperm.xlu0 %2976, %v2931
        %v2978 = vpop.permute.xlu0 %2977
        %2981 = vset.pattern.permute.xlu0 0
        %2982 = vperm.xlu0 %2981, %v2932
        %v2983 = vpop.permute.xlu0 %2982
        %2986 = vset.pattern.permute.xlu0 0
        %2987 = vperm.xlu0 %2986, %v2933
        %v2988 = vpop.permute.xlu0 %2987
        %2991 = vset.pattern.permute.xlu0 0
        %2992 = vperm.xlu0 %2991, %v2934
        %v2993 = vpop.permute.xlu0 %2992
        %2996 = vset.pattern.permute.xlu0 0
        %2997 = vperm.xlu0 %2996, %v2935
        %v2998 = vpop.permute.xlu0 %2997
        %3001 = vset.pattern.permute.xlu0 0
        %3002 = vperm.xlu0 %3001, %v2936
        %v3003 = vpop.permute.xlu0 %3002
        %3006 = vset.pattern.permute.xlu0 0
        %3007 = vperm.xlu0 %3006, %v2937
        %v3008 = vpop.permute.xlu0 %3007
        %3011 = vset.pattern.permute.xlu0 0
        %3012 = vperm.xlu0 %3011, %v2938
        %v3013 = vpop.permute.xlu0 %3012
        %3016 = vset.pattern.permute.xlu0 0
        %3017 = vperm.xlu0 %3016, %v2939
        %v3018 = vpop.permute.xlu0 %3017
        %v3020 = vmul.f32 %v2943, %v2759
        %v3021 = vmul.f32 %v2948, %v2760
        %v3022 = vmul.f32 %v2953, %v2761
        %v3023 = vmul.f32 %v2958, %v2762
        %v3024 = vmul.f32 %v2963, %v2763
        %v3025 = vmul.f32 %v2968, %v2764
        %v3026 = vmul.f32 %v2973, %v2765
        %v3027 = vmul.f32 %v2978, %v2766
        %v3028 = vmul.f32 %v2983, %v2767
        %v3029 = vmul.f32 %v2988, %v2768
        %v3030 = vmul.f32 %v2993, %v2769
        %v3031 = vmul.f32 %v2998, %v2770
        %v3032 = vmul.f32 %v3003, %v2771
        %v3033 = vmul.f32 %v3008, %v2772
        %v3034 = vmul.f32 %v3013, %v2773
        %v3035 = vmul.f32 %v3018, %v2774
        %v3036 = vsel %vm856, %v3020, 0.0
        %v3037 = vsel %vm856, %v3021, 0.0
        %v3038 = vadd.f32 %v3036, %v3037
        %v3039 = vrot.slane %v3038, 4
        %v3040 = vadd.f32 %v3038, %v3039
        %v3041 = vrot.slane %v3040, 2
        %v3042 = vadd.f32 %v3040, %v3041
        %v3043 = vrot.slane %v3042, 1
        %v3044 = vadd.f32 %v3042, %v3043
        %v3045 = vsel %vm856, %v3022, 0.0
        %v3046 = vsel %vm856, %v3023, 0.0
        %v3047 = vadd.f32 %v3045, %v3046
        %v3048 = vrot.slane %v3047, 4
        %v3049 = vadd.f32 %v3047, %v3048
        %v3050 = vrot.slane %v3049, 2
        %v3051 = vadd.f32 %v3049, %v3050
        %v3052 = vrot.slane %v3051, 1
        %v3053 = vadd.f32 %v3051, %v3052
        %v3054 = vsel %vm856, %v3024, 0.0
        %v3055 = vsel %vm856, %v3025, 0.0
        %v3056 = vadd.f32 %v3054, %v3055
        %v3057 = vrot.slane %v3056, 4
        %v3058 = vadd.f32 %v3056, %v3057
        %v3059 = vrot.slane %v3058, 2
        %v3060 = vadd.f32 %v3058, %v3059
        %v3061 = vrot.slane %v3060, 1
        %v3062 = vadd.f32 %v3060, %v3061
        %v3063 = vsel %vm856, %v3026, 0.0
        %v3064 = vsel %vm856, %v3027, 0.0
        %v3065 = vadd.f32 %v3063, %v3064
        %v3066 = vrot.slane %v3065, 4
        %v3067 = vadd.f32 %v3065, %v3066
        %v3068 = vrot.slane %v3067, 2
        %v3069 = vadd.f32 %v3067, %v3068
        %v3070 = vrot.slane %v3069, 1
        %v3071 = vadd.f32 %v3069, %v3070
        %v3072 = vsel %vm856, %v3028, 0.0
        %v3073 = vsel %vm856, %v3029, 0.0
        %v3074 = vadd.f32 %v3072, %v3073
        %v3075 = vrot.slane %v3074, 4
        %v3076 = vadd.f32 %v3074, %v3075
        %v3077 = vrot.slane %v3076, 2
        %v3078 = vadd.f32 %v3076, %v3077
        %v3079 = vrot.slane %v3078, 1
        %v3080 = vadd.f32 %v3078, %v3079
        %v3081 = vsel %vm856, %v3030, 0.0
        %v3082 = vsel %vm856, %v3031, 0.0
        %v3083 = vadd.f32 %v3081, %v3082
        %v3084 = vrot.slane %v3083, 4
        %v3085 = vadd.f32 %v3083, %v3084
        %v3086 = vrot.slane %v3085, 2
        %v3087 = vadd.f32 %v3085, %v3086
        %v3088 = vrot.slane %v3087, 1
        %v3089 = vadd.f32 %v3087, %v3088
        %v3090 = vsel %vm856, %v3032, 0.0
        %v3091 = vsel %vm856, %v3033, 0.0
        %v3092 = vadd.f32 %v3090, %v3091
        %v3093 = vrot.slane %v3092, 4
        %v3094 = vadd.f32 %v3092, %v3093
        %v3095 = vrot.slane %v3094, 2
        %v3096 = vadd.f32 %v3094, %v3095
        %v3097 = vrot.slane %v3096, 1
        %v3098 = vadd.f32 %v3096, %v3097
        %v3099 = vsel %vm856, %v3034, 0.0
        %v3100 = vsel %vm856, %v3035, 0.0
        %v3101 = vadd.f32 %v3099, %v3100
        %v3102 = vrot.slane %v3101, 4
        %v3103 = vadd.f32 %v3101, %v3102
        %v3104 = vrot.slane %v3103, 2
        %v3105 = vadd.f32 %v3103, %v3104
        %v3106 = vrot.slane %v3105, 1
        %v3107 = vadd.f32 %v3105, %v3106
        %v3109 = vrot.slane %v1992, 1
        %v3110 = vrot.slane %v1992, 2
        %v3111 = vrot.slane %v1992, 3
        %v3112 = vrot.slane %v1992, 4
        %v3113 = vrot.slane %v1992, 5
        %v3114 = vrot.slane %v1992, 6
        %v3115 = vrot.slane %v1992, 7
        %v3124 = vmul.f32 %v3044, %v1992
        %v3125 = vmul.f32 %v3053, %v3109
        %v3126 = vmul.f32 %v3062, %v3110
        %v3127 = vmul.f32 %v3071, %v3111
        %v3128 = vmul.f32 %v3080, %v3112
        %v3129 = vmul.f32 %v3089, %v3113
        %v3130 = vmul.f32 %v3098, %v3114
        %v3131 = vmul.f32 %v3107, %v3115
        %v3141 = vrot.slane %v3125, 7
        %v3142 = vsel %vm799, %v3141, %v3124
        %v3143 = vrot.slane %v3126, 6
        %v3144 = vsel %vm801, %v3143, %v3142
        %v3145 = vrot.slane %v3127, 5
        %v3146 = vsel %vm803, %v3145, %v3144
        %v3147 = vrot.slane %v3128, 4
        %v3148 = vsel %vm805, %v3147, %v3146
        %v3149 = vrot.slane %v3129, 3
        %v3150 = vsel %vm807, %v3149, %v3148
        %v3151 = vrot.slane %v3130, 2
        %v3152 = vsel %vm809, %v3151, %v3150
        %v3153 = vrot.slane %v3131, 1
        %v3154 = vsel %vm811, %v3153, %v3152
        %3155 = vrot.lane.b32.xlu0 %v3154, 32
        %v3156 = vpop.permute.xlu0 %3155
        %v3158 = vsel %vm856, %v2796, %v3156
        %v3159 = vld [vmem:[%s8] sm:$0xff]
        %v3160 = vld [vmem:[%s8 + $0x8] sm:$0xff]
        %v3161 = vld [vmem:[%s8 + $0x10] sm:$0xff]
        %v3162 = vld [vmem:[%s8 + $0x18] sm:$0xff]
        %v3163 = vld [vmem:[%s8 + $0x20] sm:$0xff]
        %v3164 = vld [vmem:[%s8 + $0x28] sm:$0xff]
        %v3165 = vld [vmem:[%s8 + $0x30] sm:$0xff]
        %v3166 = vld [vmem:[%s8 + $0x38] sm:$0xff]
        %v3167 = vld [vmem:[%s10 + $0x5] sm:$0x1]
        %v3168 = vperm.slane %v3167, 0
        %v3170 = vsel %vm547, %v3158, 0
        %3172 = vmatpush.msra.mxu0 0.0
        %3173 = vmatpush.msra.mxu0 0.0
        %3174 = vmatpush.msra.mxu0 0.0
        %3175 = vmatpush.msra.mxu0 0.0
        %3176 = vmatpush.msra.mxu0 0.0
        %3177 = vmatpush.msra.mxu0 0.0
        %3178 = vmatpush.msra.mxu0 0.0
        %3179 = vmatpush.msra.mxu0 0.0
        %3180 = vmatpush.msra.mxu0 %v3166
        %3181 = vmatpush.msra.mxu0 %v3165
        %3182 = vmatpush.msra.mxu0 %v3164
        %3183 = vmatpush.msra.mxu0 %v3163
        %3184 = vmatpush.msra.mxu0 %v3162
        %3185 = vmatpush.msra.mxu0 %v3161
        %3186 = vmatpush.msra.mxu0 %v3160
        %3187 = vmatpush.msra.mxu0 %v3159
        %3188 = vmatmul.f32.gmra.mxu0 %v3170
        %v3189 = vpop.f32.mrf.mxu0
        %v3190 = vadd.f32 %v3168, %v3189
        %3191 = vdwg.mxu0
        %v3192 = vmax.f32 %v3190, 0.0
        %s3193 = scalar_lea.vmem %s8, 64
        %v3194 = vld [vmem:[%s3193] sm:$0xff]
        %v3195 = vld [vmem:[%s3193 + $0x8] sm:$0xff]
        %v3196 = vld [vmem:[%s3193 + $0x10] sm:$0xff]
        %v3197 = vld [vmem:[%s3193 + $0x18] sm:$0xff]
        %v3198 = vld [vmem:[%s3193 + $0x20] sm:$0xff]
        %v3199 = vld [vmem:[%s3193 + $0x28] sm:$0xff]
        %v3200 = vld [vmem:[%s3193 + $0x30] sm:$0xff]
        %v3201 = vld [vmem:[%s3193 + $0x38] sm:$0xff]
        %v3202 = vld [vmem:[%s10 + $0x6] sm:$0x1]
        %v3203 = vperm.slane %v3202, 0
        %v3205 = vsel %vm547, %v3192, 0
        %3207 = vmatpush.msra.mxu0 0.0
        %3208 = vmatpush.msra.mxu0 0.0
        %3209 = vmatpush.msra.mxu0 0.0
        %3210 = vmatpush.msra.mxu0 0.0
        %3211 = vmatpush.msra.mxu0 0.0
        %3212 = vmatpush.msra.mxu0 0.0
        %3213 = vmatpush.msra.mxu0 0.0
        %3214 = vmatpush.msra.mxu0 0.0
        %3215 = vmatpush.msra.mxu0 %v3201
        %3216 = vmatpush.msra.mxu0 %v3200
        %3217 = vmatpush.msra.mxu0 %v3199
        %3218 = vmatpush.msra.mxu0 %v3198
        %3219 = vmatpush.msra.mxu0 %v3197
        %3220 = vmatpush.msra.mxu0 %v3196
        %3221 = vmatpush.msra.mxu0 %v3195
        %3222 = vmatpush.msra.mxu0 %v3194
        %3223 = vmatmul.f32.gmra.mxu0 %v3205
        %v3224 = vpop.f32.mrf.mxu0
        %v3225 = vadd.f32 %v3203, %v3224
        %3226 = vdwg.mxu0
        %v3227 = vmax.f32 %v3225, 0.0
        %v3228 = vld [vmem:[%s10 + $0x7] sm:$0x1]
        %v3229 = vld [vmem:[%s9] sm:$0xff]
        %v3230 = vld [vmem:[%s9 + $0x8] sm:$0xff]
        %v3231 = vld [vmem:[%s9 + $0x10] sm:$0xff]
        %v3232 = vld [vmem:[%s9 + $0x18] sm:$0xff]
        %v3233 = vld [vmem:[%s9 + $0x20] sm:$0xff]
        %v3234 = vld [vmem:[%s9 + $0x28] sm:$0xff]
        %v3235 = vld [vmem:[%s9 + $0x30] sm:$0xff]
        %v3236 = vld [vmem:[%s9 + $0x38] sm:$0xff]
        %v3237 = vperm.slane %v3228, 0
        %v3239 = vsel %vm547, %v3227, 0
        %3241 = vmatpush.msra.mxu0 0.0
        %3242 = vmatpush.msra.mxu0 0.0
        %3243 = vmatpush.msra.mxu0 0.0
        %3244 = vmatpush.msra.mxu0 0.0
        %3245 = vmatpush.msra.mxu0 0.0
        %3246 = vmatpush.msra.mxu0 0.0
        %3247 = vmatpush.msra.mxu0 0.0
        %3248 = vmatpush.msra.mxu0 0.0
        %3249 = vmatpush.msra.mxu0 %v3236
        %3250 = vmatpush.msra.mxu0 %v3235
        %3251 = vmatpush.msra.mxu0 %v3234
        %3252 = vmatpush.msra.mxu0 %v3233
        %3253 = vmatpush.msra.mxu0 %v3232
        %3254 = vmatpush.msra.mxu0 %v3231
        %3255 = vmatpush.msra.mxu0 %v3230
        %3256 = vmatpush.msra.mxu0 %v3229
        %3257 = vmatmul.f32.gmra.mxu0 %v3239
        %v3258 = vpop.f32.mrf.mxu0
        %v3259 = vadd.f32 %v3237, %v3258
        %3260 = vdwg.mxu0
        %3261 = vst [vmem:[%s409] sm:$0xff] %v3259
        %s3262 = sand.u32 %s279, 1
        %s3263 = scalar_lea.sflag [#allocation3], %s3262
        %s3264 = sand.u32 %s279, 1
        %s3265 = smul.addr %s3264, 8
        %s3266 = scalar_lea.vmem [#allocation2], %s3265
        // Predicated region
        $region65: #{tpu_custom_call.1} parent=63 // pred_check
          %p3267 = pneg %p289
        $region66: #{tpu_custom_call.1} parent=63 // pred_check_branch
          %3269 = sbr.rel (%p3267) target = $region68
        $region67: #{tpu_custom_call.1} parent=63 // pred_region
          %3271 = vsyncadd %s3263, 0
          %s3272 = smul.addr %s25, 8
          %s3273 = scalar_lea.hbm %s11, %s3272
          %s3275 = sshll.u32 %s3266, 4
          %s3276 = int_to_ptr.vmem [resolvable:$true] %s3275
          %s3277 = sshll.u32 %s3273, 4
          %s3278 = int_to_ptr.hbm [resolvable:$true] %s3277
          %3280 = dma.vmem_to_hbm [thread:$0]  %s3276, 128, %s3278, %s3263
        $region68: #{tpu_custom_call.1} parent=63 // pred_fallthru
          _
      $region64: #{tpu_custom_call.1} parent=5 // pred_fallthru
        _
      %p3281 = scmp.le.s32.totalorder 2, %s20
      // Predicated region
      $region69: #{tpu_custom_call.1} parent=5 // pred_check
        %p3282 = pneg %p3281
      $region70: #{tpu_custom_call.1} parent=5 // pred_check_branch
        %3284 = sbr.rel (%p3282) target = $region72
      $region71: #{tpu_custom_call.1} parent=5 // pred_region
        %s3285 = ssub.s32 %s20, 2
        // Predicated region
        $region73: #{tpu_custom_call.1} parent=71 // pred_check
          %p3286 = pneg %p295
        $region74: #{tpu_custom_call.1} parent=71 // pred_check_branch
          %3288 = sbr.rel (%p3286) target = $region76
        $region75: #{tpu_custom_call.1} parent=71 // pred_region
          %s3289 = sand.u32 %s280, 1
          %s3290 = scalar_lea.sflag [#allocation3], %s3289
          %s3291 = sand.u32 %s280, 1
          %s3292 = smul.addr %s3291, 8
          %s3293 = scalar_lea.vmem [#allocation2], %s3292
          %3295 = dma.done %s3290, 128
        $region76: #{tpu_custom_call.1} parent=71 // pred_fallthru
          _
      $region72: #{tpu_custom_call.1} parent=5 // pred_fallthru
        _
    $region6: #{tpu_custom_call.1} parent=1 // loop_footer
      %s24 = sadd.s32 1, %s20
    $region7: #{tpu_custom_call.1} parent=1 // loop_footer_branch
      %19 = sbr.rel target = $region3
    $region8: #{tpu_custom_call.1} parent=1 // loop_exit
      _
    %3296 = vsyncpa [#allocation3], 1
    %s3297 = scalar_lea.sflag [#allocation3], 1
    %3298 = vsyncpa %s3297, 1

</llo_original>
